<compile_context>
chip_gen: v6e
topology: v6e:2x2x1
jax: 0.10.0
libtpu: 0.0.40
codegen_flags: <defaults>
</compile_context>

<pallas_src>
import jax
import jax.numpy as jnp
from jax.experimental import pallas as pl
from jax.experimental.pallas import tpu as pltpu

BN_EPS = 1e-5


# ----------------------------------------------------------------------------
# Fused kernel: whole Encoder forward in a single invocation.
# ----------------------------------------------------------------------------
def _encoder_kernel(p1_ref, w1_ref, w2_ref, w3_ref, wh_ref, misc_ref,
                    out_ref, kl_ref, y1_ref):
    b = out_ref.shape[0]               # batch
    c1 = w1_ref.shape[1]               # 64  conv1 out channels
    c2 = w2_ref.shape[2]               # 128 conv2 out channels
    c3 = w3_ref.shape[1]               # 256 conv3 out channels
    n_tap2 = w2_ref.shape[0]           # 16 conv2 kernel taps (4x4)
    n_tap3 = w3_ref.shape[0] // c2     # 10 conv3 kernel taps (5x2 = whole input)
    twol = wh_ref.shape[1]             # 2 * latent
    l = twol // 2
    m2 = n_tap3 * b                    # conv2 output rows (tap3-major, batch-minor)

    # conv1 + bn1 + relu: ONE matmul over all (tap2, tap3, batch) rows.
    s1 = misc_ref[0:1, 0:c1]
    y1_ref[...] = jnp.maximum(
        jnp.dot(p1_ref[...], w1_ref[...],
                preferred_element_type=jnp.float32) + s1, 0.0)
    # Dropout(0.4): identity in inference mode.

    # conv2 + bn2 + relu: accumulate the 16 kernel taps; each tap reads the
    # 20-row slice of the conv1 output that feeds it (rows grouped per tap at
    # trace time).  bf16 operands, f32 accumulation.
    acc2 = jnp.zeros((m2, c2), jnp.float32)
    for k in range(n_tap2):
        acc2 = acc2 + jnp.dot(
            y1_ref[k * m2:(k + 1) * m2, :].astype(jnp.bfloat16),
            w2_ref[k],
            preferred_element_type=jnp.float32)
    s2 = misc_ref[0:1, 128:128 + c2]
    y2 = jnp.maximum(acc2 + s2, 0.0)                     # (20, 128), rows (tap3, b)

    # conv3 + bn3 + relu: its 5x2 kernel covers the whole input, so it is a
    # single K=1280 contraction of the lane-concatenated conv2 output.
    y2_flat = jnp.concatenate(
        [y2[s * b:(s + 1) * b, :] for s in range(n_tap3)], axis=1)   # (B, 1280)
    s3 = misc_ref[1:2, 0:c3]
    flat = jnp.maximum(
        jnp.dot(y2_flat.astype(jnp.bfloat16), w3_ref[...],
                preferred_element_type=jnp.float32) + s3, 0.0)       # == Flatten()

    # head: enc_lin pre-folded into enc_mu / enc_sigma -> one (B,256)@(256,2L).
    bh = misc_ref[2:3, 0:twol]
    h = jnp.dot(flat.astype(jnp.bfloat16), wh_ref[...],
                preferred_element_type=jnp.float32) + bh             # (B, 2L)
    mu = h[:, 0:l]
    log_sigma = h[:, l:twol]
    sigma = jnp.exp(log_sigma)
    eps = misc_ref[3:3 + b, 0:l]
    z = mu + sigma * eps

    # lane-dense packed output block (z | mu | log_sigma | sigma); wrapper slices z.
    out_ref[:, 0 * l:1 * l] = z
    out_ref[:, 1 * l:2 * l] = mu
    out_ref[:, 2 * l:3 * l] = log_sigma
    out_ref[:, 3 * l:4 * l] = sigma
    # KL reduction -> scalar SMEM output (no masked 1-lane VMEM writeback).
    kl_ref[0, 0] = jnp.sum(sigma * sigma + mu * mu - log_sigma - 0.5)


def _full_spec(shape):
    zeros = (0,) * len(shape)
    return pl.BlockSpec(shape, lambda i: zeros)


def _fold_bn(conv_b, gamma, beta, rmean, rvar):
    scale = gamma / jnp.sqrt(rvar + BN_EPS)          # folded into the weights
    shift = (conv_b - rmean) * scale + beta          # remaining per-channel bias
    return scale, shift


def encoder_forward(x_nchw, p, eps):
    B, C, H, W = x_nchw.shape
    L = eps.shape[1]
    assert (C, H, W) == (4, 80, 32), "spatial size implied by enc_lin(256, ...)"
    assert 4 * L <= 128, "packed output block assumes latent <= 32"

    x = jnp.transpose(x_nchw, (0, 2, 3, 1)).astype(jnp.float32)   # NHWC

    # Trace-time im2col of the input only.  Rows grouped (conv2-tap, conv3-tap,
    # batch):  h = 16*oi2 + 4*dh2 + kh1,  w = 16*oj2 + 4*dw2 + kw1.
    pt = x.reshape(B, 5, 4, 4, 2, 4, 4, C)          # (b,oi2,dh2,kh1,oj2,dw2,kw1,c)
    pt = pt.transpose(2, 5, 1, 4, 0, 3, 6, 7)       # (dh2,dw2,oi2,oj2,b,kh1,kw1,c)
    p1 = pt.reshape(16 * 10 * B, 4 * 4 * C)         # (320, 64)

    scale1, shift1 = _fold_bn(p["b1"], p["g1"], p["be1"], p["rm1"], p["rv1"])
    scale2, shift2 = _fold_bn(p["b2"], p["g2"], p["be2"], p["rm2"], p["rv2"])
    scale3, shift3 = _fold_bn(p["b3"], p["g3"], p["be3"], p["rm3"], p["rv3"])

    # Reorder conv weights at trace time, fold BN scale into output channels, and
    # ship the big weights as bf16 (weight DMA is the dominant cost at small B).
    w1f = p["w1"].transpose(2, 3, 1, 0).reshape(64, 64) * scale1[None, :]
    w2f = (p["w2"].transpose(2, 3, 1, 0).reshape(16, 64, 128)
           * scale2[None, None, :]).astype(jnp.bfloat16)
    w3f = (p["w3"].transpose(2, 3, 1, 0).reshape(10 * 128, 256)
           * scale3[None, :]).astype(jnp.bfloat16)

    # Fold enc_lin into enc_mu / enc_sigma (no nonlinearity between them).
    a_mu = p["wl"].T @ p["wm"].T                    # (256, L)
    a_sg = p["wl"].T @ p["ws"].T                    # (256, L)
    b_mu = p["bl"] @ p["wm"].T + p["bm"]            # (L,)
    b_sg = p["bl"] @ p["ws"].T + p["bs"]            # (L,)
    whf = jnp.concatenate([a_mu, a_sg], axis=1).astype(jnp.bfloat16)   # (256, 2L)

    # Coalesce all tiny inputs (BN shifts, head bias, eps) into one packed array.
    misc = jnp.zeros((3 + B, 256), jnp.float32)
    misc = misc.at[0, 0:64].set(shift1)
    misc = misc.at[0, 128:256].set(shift2)
    misc = misc.at[1, 0:256].set(shift3)
    misc = misc.at[2, 0:2 * L].set(jnp.concatenate([b_mu, b_sg]))
    misc = misc.at[3:3 + B, 0:L].set(eps.astype(jnp.float32))

    inputs = (p1, w1f, w2f, w3f, whf, misc)
    out128, kl = pl.pallas_call(
        _encoder_kernel,
        out_shape=(jax.ShapeDtypeStruct((B, 128), jnp.float32),
                   jax.ShapeDtypeStruct((1, 1), jnp.float32)),
        grid=(1,),
        in_specs=[_full_spec(a.shape) for a in inputs],
        out_specs=(pl.BlockSpec((B, 128), lambda i: (0, 0)),
                   pl.BlockSpec(memory_space=pltpu.MemorySpace.SMEM)),
        scratch_shapes=[pltpu.VMEM((16 * 10 * B, 64), jnp.float32)],
        compiler_params=pltpu.CompilerParams(
            dimension_semantics=("arbitrary",)),
    )(*inputs)
    return out128[:, :L], kl[0, 0]


# ----------------------------------------------------------------------------
# Pure-JAX reference (for sanity check)
# ----------------------------------------------------------------------------
def reference_forward(x_nchw, p, eps):
    def conv(x, w, b, stride):
        y = jax.lax.conv_general_dilated(
            x, w, window_strides=stride, padding="VALID",
            dimension_numbers=("NCHW", "OIHW", "NCHW"))
        return y + b[None, :, None, None]

    def bn_relu(x, g, be, rm, rv):
        s = g / jnp.sqrt(rv + BN_EPS)
        y = (x - rm[None, :, None, None]) * s[None, :, None, None] + be[None, :, None, None]
        return jnp.maximum(y, 0.0)

    x = bn_relu(conv(x_nchw, p["w1"], p["b1"], (4, 4)), p["g1"], p["be1"], p["rm1"], p["rv1"])
    x = bn_relu(conv(x, p["w2"], p["b2"], (4, 4)), p["g2"], p["be2"], p["rm2"], p["rv2"])
    x = bn_relu(conv(x, p["w3"], p["b3"], (1, 1)), p["g3"], p["be3"], p["rm3"], p["rv3"])
    f = x.reshape(x.shape[0], -1)
    h = f @ p["wl"].T + p["bl"]
    mu = h @ p["wm"].T + p["bm"]
    log_sigma = h @ p["ws"].T + p["bs"]
    sigma = jnp.exp(log_sigma)
    z = mu + sigma * eps
    kl = jnp.sum(sigma ** 2 + mu ** 2 - log_sigma - 0.5)
    return z, kl


# ----------------------------------------------------------------------------
# Deterministic parameter init
# ----------------------------------------------------------------------------
def init_params(key, latent):
    ks = jax.random.split(key, 16)
    n = lambda k, shape, s=0.05: (s * jax.random.normal(k, shape)).astype(jnp.float32)
    p = {
        "w1": n(ks[0], (64, 4, 4, 4)),    "b1": n(ks[1], (64,)),
        "w2": n(ks[2], (128, 64, 4, 4)),  "b2": n(ks[3], (128,)),
        "w3": n(ks[4], (256, 128, 5, 2)), "b3": n(ks[5], (256,)),
        "wl": n(ks[6], (256, 256)),       "bl": n(ks[7], (256,)),
        "wm": n(ks[8], (latent, 256)),    "bm": n(ks[9], (latent,)),
        "ws": n(ks[10], (latent, 256)),   "bs": n(ks[11], (latent,)),
    }
    for i, c in zip((1, 2, 3), (64, 128, 256)):
        p[f"g{i}"] = (1.0 + 0.1 * jax.random.normal(ks[11 + i], (c,))).astype(jnp.float32)
        p[f"be{i}"] = (0.1 * jax.random.normal(ks[12 + i], (c,))).astype(jnp.float32)
        p[f"rm{i}"] = jnp.zeros((c,), jnp.float32)
        p[f"rv{i}"] = jnp.ones((c,), jnp.float32)
    return p


if __name__ == "__main__":
    latent = 32
    B = 2
    key = jax.random.PRNGKey(0)
    kx, kp, ke = jax.random.split(key, 3)

    # Input spatial (80, 32) so that conv1->(20,8), conv2->(5,2), conv3->(1,1),
    # matching Flatten() -> 256 features expected by enc_lin.
    x = jax.random.normal(kx, (B, 4, 80, 32), dtype=jnp.float32)   # NCHW like torch
    params = init_params(kp, latent)
    eps = jax.random.normal(ke, (B, latent), dtype=jnp.float32)    # N(0,1) sample

    fwd = jax.jit(encoder_forward)
    z, kl = fwd(x, params, eps)
    z = jax.block_until_ready(z)
    kl = jax.block_until_ready(kl)

    z_ref, kl_ref = reference_forward(x, params, eps)
    assert z.shape == (B, latent)
    # Tolerances loosened vs the all-f32 version (1e-3) because the big weights
    # and matmul operands are shipped / fed to the MXU in bf16 (f32 accumulation).
    assert jnp.allclose(z, z_ref, rtol=2e-2, atol=2e-2), "z mismatch vs reference"
    assert jnp.allclose(kl, kl_ref, rtol=3e-2, atol=1e-1), "kl mismatch vs reference"

    print("KERNEL_OK")
</pallas_src>

<mosaic_0001>
module attributes {stable_mosaic.version = 11 : i64} {
  func.func @_encoder_kernel(%arg0: i32, %arg1: memref<320x64xf32, #tpu.memory_space<vmem>>, %arg2: memref<64x64xf32, #tpu.memory_space<vmem>>, %arg3: memref<16x64x128xbf16, #tpu.memory_space<vmem>>, %arg4: memref<1280x256xbf16, #tpu.memory_space<vmem>>, %arg5: memref<256x64xbf16, #tpu.memory_space<vmem>>, %arg6: memref<5x256xf32, #tpu.memory_space<vmem>>, %arg7: memref<2x128xf32, #tpu.memory_space<vmem>>, %arg8: memref<1x1xf32, #tpu.memory_space<smem>>, %arg9: memref<320x64xf32, #tpu.memory_space<vmem>>) attributes {dimension_semantics = [#tpu.dimension_semantics<arbitrary>], iteration_bounds = array<i64: 1>, scalar_prefetch = 0 : i64, scratch_operands = 1 : i64, tpu.core_type = #tpu.core_type<tc>, window_params = [{pipeline_mode = #tpu.pipeline_mode<synchronous>, transform_indices = @transform_0, window_bounds = array<i64: 320, 64>}, {pipeline_mode = #tpu.pipeline_mode<synchronous>, transform_indices = @transform_1, window_bounds = array<i64: 64, 64>}, {pipeline_mode = #tpu.pipeline_mode<synchronous>, transform_indices = @transform_2, window_bounds = array<i64: 16, 64, 128>}, {pipeline_mode = #tpu.pipeline_mode<synchronous>, transform_indices = @transform_3, window_bounds = array<i64: 1280, 256>}, {pipeline_mode = #tpu.pipeline_mode<synchronous>, transform_indices = @transform_4, window_bounds = array<i64: 256, 64>}, {pipeline_mode = #tpu.pipeline_mode<synchronous>, transform_indices = @transform_5, window_bounds = array<i64: 5, 256>}, {pipeline_mode = #tpu.pipeline_mode<synchronous>, transform_indices = @transform_6, window_bounds = array<i64: 2, 128>}, {transform_indices = @transform_7, window_bounds = array<i64: 1, 1>}]} {
    %c0 = arith.constant 0 : index
    %c0_0 = arith.constant 0 : index
    %0 = vector.load %arg6[%c0, %c0_0] : memref<5x256xf32, #tpu.memory_space<vmem>>, vector<1x64xf32>
    %c0_1 = arith.constant 0 : index
    %c0_2 = arith.constant 0 : index
    %1 = vector.load %arg1[%c0_1, %c0_2] : memref<320x64xf32, #tpu.memory_space<vmem>>, vector<320x64xf32>
    %c0_3 = arith.constant 0 : index
    %c0_4 = arith.constant 0 : index
    %2 = vector.load %arg2[%c0_3, %c0_4] : memref<64x64xf32, #tpu.memory_space<vmem>>, vector<64x64xf32>
    %cst = arith.constant dense<0.000000e+00> : vector<320x64xf32>
    %3 = tpu.matmul %1, %2, %cst {dimension_numbers = #tpu.dot_dimension_numbers<[1], [0], [0], [1], [0, 0, 1, 1], [], []>} : vector<320x64xf32>, vector<64x64xf32>, vector<320x64xf32> -> vector<320x64xf32>
    %4 = vector.broadcast %0 : vector<1x64xf32> to vector<320x64xf32>
    %5 = arith.addf %3, %4 : vector<320x64xf32>
    %cst_5 = arith.constant 0.000000e+00 : f32
    %6 = vector.broadcast %cst_5 : f32 to vector<320x64xf32>
    %7 = arith.maximumf %5, %6 : vector<320x64xf32>
    %c0_6 = arith.constant 0 : index
    %c0_7 = arith.constant 0 : index
    %8 = vector.load %arg9[%c0_6, %c0_7] : memref<320x64xf32, #tpu.memory_space<vmem>>, vector<320x64xf32>
    tpu.vector_store %arg9[%c0_6, %c0_7], %7 {strides = array<i32>} : memref<320x64xf32, #tpu.memory_space<vmem>>, vector<320x64xf32>,
    %cst_8 = arith.constant 0.000000e+00 : f32
    %9 = vector.broadcast %cst_8 : f32 to vector<20x128xf32>
    %c0_9 = arith.constant 0 : index
    %c0_10 = arith.constant 0 : index
    %10 = vector.load %arg9[%c0_9, %c0_10] : memref<320x64xf32, #tpu.memory_space<vmem>>, vector<20x64xf32>
    %11 = arith.truncf %10 : vector<20x64xf32> to vector<20x64xbf16>
    %c0_11 = arith.constant 0 : index
    %c0_12 = arith.constant 0 : index
    %c0_13 = arith.constant 0 : index
    %12 = vector.load %arg3[%c0_11, %c0_12, %c0_13] : memref<16x64x128xbf16, #tpu.memory_space<vmem>>, vector<1x64x128xbf16>
    %13 = vector.shape_cast %12 : vector<1x64x128xbf16> to vector<64x128xbf16>
    %cst_14 = arith.constant dense<0.000000e+00> : vector<20x128xf32>
    %14 = tpu.matmul %11, %13, %cst_14 {dimension_numbers = #tpu.dot_dimension_numbers<[1], [0], [0], [1], [0, 0, 1, 1], [], []>} : vector<20x64xbf16>, vector<64x128xbf16>, vector<20x128xf32> -> vector<20x128xf32>
    %15 = arith.addf %9, %14 : vector<20x128xf32>
    %c20 = arith.constant 20 : index
    %c0_15 = arith.constant 0 : index
    %16 = vector.load %arg9[%c20, %c0_15] : memref<320x64xf32, #tpu.memory_space<vmem>>, vector<20x64xf32>
    %17 = arith.truncf %16 : vector<20x64xf32> to vector<20x64xbf16>
    %c1 = arith.constant 1 : index
    %c0_16 = arith.constant 0 : index
    %c0_17 = arith.constant 0 : index
    %18 = vector.load %arg3[%c1, %c0_16, %c0_17] : memref<16x64x128xbf16, #tpu.memory_space<vmem>>, vector<1x64x128xbf16>
    %19 = vector.shape_cast %18 : vector<1x64x128xbf16> to vector<64x128xbf16>
    %cst_18 = arith.constant dense<0.000000e+00> : vector<20x128xf32>
    %20 = tpu.matmul %17, %19, %cst_18 {dimension_numbers = #tpu.dot_dimension_numbers<[1], [0], [0], [1], [0, 0, 1, 1], [], []>} : vector<20x64xbf16>, vector<64x128xbf16>, vector<20x128xf32> -> vector<20x128xf32>
    %21 = arith.addf %15, %20 : vector<20x128xf32>
    %c40 = arith.constant 40 : index
    %c0_19 = arith.constant 0 : index
    %22 = vector.load %arg9[%c40, %c0_19] : memref<320x64xf32, #tpu.memory_space<vmem>>, vector<20x64xf32>
    %23 = arith.truncf %22 : vector<20x64xf32> to vector<20x64xbf16>
    %c2 = arith.constant 2 : index
    %c0_20 = arith.constant 0 : index
    %c0_21 = arith.constant 0 : index
    %24 = vector.load %arg3[%c2, %c0_20, %c0_21] : memref<16x64x128xbf16, #tpu.memory_space<vmem>>, vector<1x64x128xbf16>
    %25 = vector.shape_cast %24 : vector<1x64x128xbf16> to vector<64x128xbf16>
    %cst_22 = arith.constant dense<0.000000e+00> : vector<20x128xf32>
    %26 = tpu.matmul %23, %25, %cst_22 {dimension_numbers = #tpu.dot_dimension_numbers<[1], [0], [0], [1], [0, 0, 1, 1], [], []>} : vector<20x64xbf16>, vector<64x128xbf16>, vector<20x128xf32> -> vector<20x128xf32>
    %27 = arith.addf %21, %26 : vector<20x128xf32>
    %c60 = arith.constant 60 : index
    %c0_23 = arith.constant 0 : index
    %28 = vector.load %arg9[%c60, %c0_23] : memref<320x64xf32, #tpu.memory_space<vmem>>, vector<20x64xf32>
    %29 = arith.truncf %28 : vector<20x64xf32> to vector<20x64xbf16>
    %c3 = arith.constant 3 : index
    %c0_24 = arith.constant 0 : index
    %c0_25 = arith.constant 0 : index
    %30 = vector.load %arg3[%c3, %c0_24, %c0_25] : memref<16x64x128xbf16, #tpu.memory_space<vmem>>, vector<1x64x128xbf16>
    %31 = vector.shape_cast %30 : vector<1x64x128xbf16> to vector<64x128xbf16>
    %cst_26 = arith.constant dense<0.000000e+00> : vector<20x128xf32>
    %32 = tpu.matmul %29, %31, %cst_26 {dimension_numbers = #tpu.dot_dimension_numbers<[1], [0], [0], [1], [0, 0, 1, 1], [], []>} : vector<20x64xbf16>, vector<64x128xbf16>, vector<20x128xf32> -> vector<20x128xf32>
    %33 = arith.addf %27, %32 : vector<20x128xf32>
    %c80 = arith.constant 80 : index
    %c0_27 = arith.constant 0 : index
    %34 = vector.load %arg9[%c80, %c0_27] : memref<320x64xf32, #tpu.memory_space<vmem>>, vector<20x64xf32>
    %35 = arith.truncf %34 : vector<20x64xf32> to vector<20x64xbf16>
    %c4 = arith.constant 4 : index
    %c0_28 = arith.constant 0 : index
    %c0_29 = arith.constant 0 : index
    %36 = vector.load %arg3[%c4, %c0_28, %c0_29] : memref<16x64x128xbf16, #tpu.memory_space<vmem>>, vector<1x64x128xbf16>
    %37 = vector.shape_cast %36 : vector<1x64x128xbf16> to vector<64x128xbf16>
    %cst_30 = arith.constant dense<0.000000e+00> : vector<20x128xf32>
    %38 = tpu.matmul %35, %37, %cst_30 {dimension_numbers = #tpu.dot_dimension_numbers<[1], [0], [0], [1], [0, 0, 1, 1], [], []>} : vector<20x64xbf16>, vector<64x128xbf16>, vector<20x128xf32> -> vector<20x128xf32>
    %39 = arith.addf %33, %38 : vector<20x128xf32>
    %c100 = arith.constant 100 : index
    %c0_31 = arith.constant 0 : index
    %40 = vector.load %arg9[%c100, %c0_31] : memref<320x64xf32, #tpu.memory_space<vmem>>, vector<20x64xf32>
    %41 = arith.truncf %40 : vector<20x64xf32> to vector<20x64xbf16>
    %c5 = arith.constant 5 : index
    %c0_32 = arith.constant 0 : index
    %c0_33 = arith.constant 0 : index
    %42 = vector.load %arg3[%c5, %c0_32, %c0_33] : memref<16x64x128xbf16, #tpu.memory_space<vmem>>, vector<1x64x128xbf16>
    %43 = vector.shape_cast %42 : vector<1x64x128xbf16> to vector<64x128xbf16>
    %cst_34 = arith.constant dense<0.000000e+00> : vector<20x128xf32>
    %44 = tpu.matmul %41, %43, %cst_34 {dimension_numbers = #tpu.dot_dimension_numbers<[1], [0], [0], [1], [0, 0, 1, 1], [], []>} : vector<20x64xbf16>, vector<64x128xbf16>, vector<20x128xf32> -> vector<20x128xf32>
    %45 = arith.addf %39, %44 : vector<20x128xf32>
    %c120 = arith.constant 120 : index
    %c0_35 = arith.constant 0 : index
    %46 = vector.load %arg9[%c120, %c0_35] : memref<320x64xf32, #tpu.memory_space<vmem>>, vector<20x64xf32>
    %47 = arith.truncf %46 : vector<20x64xf32> to vector<20x64xbf16>
    %c6 = arith.constant 6 : index
    %c0_36 = arith.constant 0 : index
    %c0_37 = arith.constant 0 : index
    %48 = vector.load %arg3[%c6, %c0_36, %c0_37] : memref<16x64x128xbf16, #tpu.memory_space<vmem>>, vector<1x64x128xbf16>
    %49 = vector.shape_cast %48 : vector<1x64x128xbf16> to vector<64x128xbf16>
    %cst_38 = arith.constant dense<0.000000e+00> : vector<20x128xf32>
    %50 = tpu.matmul %47, %49, %cst_38 {dimension_numbers = #tpu.dot_dimension_numbers<[1], [0], [0], [1], [0, 0, 1, 1], [], []>} : vector<20x64xbf16>, vector<64x128xbf16>, vector<20x128xf32> -> vector<20x128xf32>
    %51 = arith.addf %45, %50 : vector<20x128xf32>
    %c140 = arith.constant 140 : index
    %c0_39 = arith.constant 0 : index
    %52 = vector.load %arg9[%c140, %c0_39] : memref<320x64xf32, #tpu.memory_space<vmem>>, vector<20x64xf32>
    %53 = arith.truncf %52 : vector<20x64xf32> to vector<20x64xbf16>
    %c7 = arith.constant 7 : index
    %c0_40 = arith.constant 0 : index
    %c0_41 = arith.constant 0 : index
    %54 = vector.load %arg3[%c7, %c0_40, %c0_41] : memref<16x64x128xbf16, #tpu.memory_space<vmem>>, vector<1x64x128xbf16>
    %55 = vector.shape_cast %54 : vector<1x64x128xbf16> to vector<64x128xbf16>
    %cst_42 = arith.constant dense<0.000000e+00> : vector<20x128xf32>
    %56 = tpu.matmul %53, %55, %cst_42 {dimension_numbers = #tpu.dot_dimension_numbers<[1], [0], [0], [1], [0, 0, 1, 1], [], []>} : vector<20x64xbf16>, vector<64x128xbf16>, vector<20x128xf32> -> vector<20x128xf32>
    %57 = arith.addf %51, %56 : vector<20x128xf32>
    %c160 = arith.constant 160 : index
    %c0_43 = arith.constant 0 : index
    %58 = vector.load %arg9[%c160, %c0_43] : memref<320x64xf32, #tpu.memory_space<vmem>>, vector<20x64xf32>
    %59 = arith.truncf %58 : vector<20x64xf32> to vector<20x64xbf16>
    %c8 = arith.constant 8 : index
    %c0_44 = arith.constant 0 : index
    %c0_45 = arith.constant 0 : index
    %60 = vector.load %arg3[%c8, %c0_44, %c0_45] : memref<16x64x128xbf16, #tpu.memory_space<vmem>>, vector<1x64x128xbf16>
    %61 = vector.shape_cast %60 : vector<1x64x128xbf16> to vector<64x128xbf16>
    %cst_46 = arith.constant dense<0.000000e+00> : vector<20x128xf32>
    %62 = tpu.matmul %59, %61, %cst_46 {dimension_numbers = #tpu.dot_dimension_numbers<[1], [0], [0], [1], [0, 0, 1, 1], [], []>} : vector<20x64xbf16>, vector<64x128xbf16>, vector<20x128xf32> -> vector<20x128xf32>
    %63 = arith.addf %57, %62 : vector<20x128xf32>
    %c180 = arith.constant 180 : index
    %c0_47 = arith.constant 0 : index
    %64 = vector.load %arg9[%c180, %c0_47] : memref<320x64xf32, #tpu.memory_space<vmem>>, vector<20x64xf32>
    %65 = arith.truncf %64 : vector<20x64xf32> to vector<20x64xbf16>
    %c9 = arith.constant 9 : index
    %c0_48 = arith.constant 0 : index
    %c0_49 = arith.constant 0 : index
    %66 = vector.load %arg3[%c9, %c0_48, %c0_49] : memref<16x64x128xbf16, #tpu.memory_space<vmem>>, vector<1x64x128xbf16>
    %67 = vector.shape_cast %66 : vector<1x64x128xbf16> to vector<64x128xbf16>
    %cst_50 = arith.constant dense<0.000000e+00> : vector<20x128xf32>
    %68 = tpu.matmul %65, %67, %cst_50 {dimension_numbers = #tpu.dot_dimension_numbers<[1], [0], [0], [1], [0, 0, 1, 1], [], []>} : vector<20x64xbf16>, vector<64x128xbf16>, vector<20x128xf32> -> vector<20x128xf32>
    %69 = arith.addf %63, %68 : vector<20x128xf32>
    %c200 = arith.constant 200 : index
    %c0_51 = arith.constant 0 : index
    %70 = vector.load %arg9[%c200, %c0_51] : memref<320x64xf32, #tpu.memory_space<vmem>>, vector<20x64xf32>
    %71 = arith.truncf %70 : vector<20x64xf32> to vector<20x64xbf16>
    %c10 = arith.constant 10 : index
    %c0_52 = arith.constant 0 : index
    %c0_53 = arith.constant 0 : index
    %72 = vector.load %arg3[%c10, %c0_52, %c0_53] : memref<16x64x128xbf16, #tpu.memory_space<vmem>>, vector<1x64x128xbf16>
    %73 = vector.shape_cast %72 : vector<1x64x128xbf16> to vector<64x128xbf16>
    %cst_54 = arith.constant dense<0.000000e+00> : vector<20x128xf32>
    %74 = tpu.matmul %71, %73, %cst_54 {dimension_numbers = #tpu.dot_dimension_numbers<[1], [0], [0], [1], [0, 0, 1, 1], [], []>} : vector<20x64xbf16>, vector<64x128xbf16>, vector<20x128xf32> -> vector<20x128xf32>
    %75 = arith.addf %69, %74 : vector<20x128xf32>
    %c220 = arith.constant 220 : index
    %c0_55 = arith.constant 0 : index
    %76 = vector.load %arg9[%c220, %c0_55] : memref<320x64xf32, #tpu.memory_space<vmem>>, vector<20x64xf32>
    %77 = arith.truncf %76 : vector<20x64xf32> to vector<20x64xbf16>
    %c11 = arith.constant 11 : index
    %c0_56 = arith.constant 0 : index
    %c0_57 = arith.constant 0 : index
    %78 = vector.load %arg3[%c11, %c0_56, %c0_57] : memref<16x64x128xbf16, #tpu.memory_space<vmem>>, vector<1x64x128xbf16>
    %79 = vector.shape_cast %78 : vector<1x64x128xbf16> to vector<64x128xbf16>
    %cst_58 = arith.constant dense<0.000000e+00> : vector<20x128xf32>
    %80 = tpu.matmul %77, %79, %cst_58 {dimension_numbers = #tpu.dot_dimension_numbers<[1], [0], [0], [1], [0, 0, 1, 1], [], []>} : vector<20x64xbf16>, vector<64x128xbf16>, vector<20x128xf32> -> vector<20x128xf32>
    %81 = arith.addf %75, %80 : vector<20x128xf32>
    %c240 = arith.constant 240 : index
    %c0_59 = arith.constant 0 : index
    %82 = vector.load %arg9[%c240, %c0_59] : memref<320x64xf32, #tpu.memory_space<vmem>>, vector<20x64xf32>
    %83 = arith.truncf %82 : vector<20x64xf32> to vector<20x64xbf16>
    %c12 = arith.constant 12 : index
    %c0_60 = arith.constant 0 : index
    %c0_61 = arith.constant 0 : index
    %84 = vector.load %arg3[%c12, %c0_60, %c0_61] : memref<16x64x128xbf16, #tpu.memory_space<vmem>>, vector<1x64x128xbf16>
    %85 = vector.shape_cast %84 : vector<1x64x128xbf16> to vector<64x128xbf16>
    %cst_62 = arith.constant dense<0.000000e+00> : vector<20x128xf32>
    %86 = tpu.matmul %83, %85, %cst_62 {dimension_numbers = #tpu.dot_dimension_numbers<[1], [0], [0], [1], [0, 0, 1, 1], [], []>} : vector<20x64xbf16>, vector<64x128xbf16>, vector<20x128xf32> -> vector<20x128xf32>
    %87 = arith.addf %81, %86 : vector<20x128xf32>
    %c260 = arith.constant 260 : index
    %c0_63 = arith.constant 0 : index
    %88 = vector.load %arg9[%c260, %c0_63] : memref<320x64xf32, #tpu.memory_space<vmem>>, vector<20x64xf32>
    %89 = arith.truncf %88 : vector<20x64xf32> to vector<20x64xbf16>
    %c13 = arith.constant 13 : index
    %c0_64 = arith.constant 0 : index
    %c0_65 = arith.constant 0 : index
    %90 = vector.load %arg3[%c13, %c0_64, %c0_65] : memref<16x64x128xbf16, #tpu.memory_space<vmem>>, vector<1x64x128xbf16>
    %91 = vector.shape_cast %90 : vector<1x64x128xbf16> to vector<64x128xbf16>
    %cst_66 = arith.constant dense<0.000000e+00> : vector<20x128xf32>
    %92 = tpu.matmul %89, %91, %cst_66 {dimension_numbers = #tpu.dot_dimension_numbers<[1], [0], [0], [1], [0, 0, 1, 1], [], []>} : vector<20x64xbf16>, vector<64x128xbf16>, vector<20x128xf32> -> vector<20x128xf32>
    %93 = arith.addf %87, %92 : vector<20x128xf32>
    %c280 = arith.constant 280 : index
    %c0_67 = arith.constant 0 : index
    %94 = vector.load %arg9[%c280, %c0_67] : memref<320x64xf32, #tpu.memory_space<vmem>>, vector<20x64xf32>
    %95 = arith.truncf %94 : vector<20x64xf32> to vector<20x64xbf16>
    %c14 = arith.constant 14 : index
    %c0_68 = arith.constant 0 : index
    %c0_69 = arith.constant 0 : index
    %96 = vector.load %arg3[%c14, %c0_68, %c0_69] : memref<16x64x128xbf16, #tpu.memory_space<vmem>>, vector<1x64x128xbf16>
    %97 = vector.shape_cast %96 : vector<1x64x128xbf16> to vector<64x128xbf16>
    %cst_70 = arith.constant dense<0.000000e+00> : vector<20x128xf32>
    %98 = tpu.matmul %95, %97, %cst_70 {dimension_numbers = #tpu.dot_dimension_numbers<[1], [0], [0], [1], [0, 0, 1, 1], [], []>} : vector<20x64xbf16>, vector<64x128xbf16>, vector<20x128xf32> -> vector<20x128xf32>
    %99 = arith.addf %93, %98 : vector<20x128xf32>
    %c300 = arith.constant 300 : index
    %c0_71 = arith.constant 0 : index
    %100 = vector.load %arg9[%c300, %c0_71] : memref<320x64xf32, #tpu.memory_space<vmem>>, vector<20x64xf32>
    %101 = arith.truncf %100 : vector<20x64xf32> to vector<20x64xbf16>
    %c15 = arith.constant 15 : index
    %c0_72 = arith.constant 0 : index
    %c0_73 = arith.constant 0 : index
    %102 = vector.load %arg3[%c15, %c0_72, %c0_73] : memref<16x64x128xbf16, #tpu.memory_space<vmem>>, vector<1x64x128xbf16>
    %103 = vector.shape_cast %102 : vector<1x64x128xbf16> to vector<64x128xbf16>
    %cst_74 = arith.constant dense<0.000000e+00> : vector<20x128xf32>
    %104 = tpu.matmul %101, %103, %cst_74 {dimension_numbers = #tpu.dot_dimension_numbers<[1], [0], [0], [1], [0, 0, 1, 1], [], []>} : vector<20x64xbf16>, vector<64x128xbf16>, vector<20x128xf32> -> vector<20x128xf32>
    %105 = arith.addf %99, %104 : vector<20x128xf32>
    %c0_75 = arith.constant 0 : index
    %c128 = arith.constant 128 : index
    %106 = vector.load %arg6[%c0_75, %c128] : memref<5x256xf32, #tpu.memory_space<vmem>>, vector<1x128xf32>
    %107 = vector.broadcast %106 : vector<1x128xf32> to vector<20x128xf32>
    %108 = arith.addf %105, %107 : vector<20x128xf32>
    %cst_76 = arith.constant 0.000000e+00 : f32
    %109 = vector.broadcast %cst_76 : f32 to vector<20x128xf32>
    %110 = arith.maximumf %108, %109 : vector<20x128xf32>
    %111 = vector.extract_strided_slice %110 {offsets = [0, 0], sizes = [2, 128], strides = [1, 1]} : vector<20x128xf32> to vector<2x128xf32>
    %112 = vector.extract_strided_slice %110 {offsets = [2, 0], sizes = [2, 128], strides = [1, 1]} : vector<20x128xf32> to vector<2x128xf32>
    %113 = vector.extract_strided_slice %110 {offsets = [4, 0], sizes = [2, 128], strides = [1, 1]} : vector<20x128xf32> to vector<2x128xf32>
    %114 = vector.extract_strided_slice %110 {offsets = [6, 0], sizes = [2, 128], strides = [1, 1]} : vector<20x128xf32> to vector<2x128xf32>
    %115 = vector.extract_strided_slice %110 {offsets = [8, 0], sizes = [2, 128], strides = [1, 1]} : vector<20x128xf32> to vector<2x128xf32>
    %116 = vector.extract_strided_slice %110 {offsets = [10, 0], sizes = [2, 128], strides = [1, 1]} : vector<20x128xf32> to vector<2x128xf32>
    %117 = vector.extract_strided_slice %110 {offsets = [12, 0], sizes = [2, 128], strides = [1, 1]} : vector<20x128xf32> to vector<2x128xf32>
    %118 = vector.extract_strided_slice %110 {offsets = [14, 0], sizes = [2, 128], strides = [1, 1]} : vector<20x128xf32> to vector<2x128xf32>
    %119 = vector.extract_strided_slice %110 {offsets = [16, 0], sizes = [2, 128], strides = [1, 1]} : vector<20x128xf32> to vector<2x128xf32>
    %120 = vector.extract_strided_slice %110 {offsets = [18, 0], sizes = [2, 128], strides = [1, 1]} : vector<20x128xf32> to vector<2x128xf32>
    %121 = tpu.concatenate %111, %112, %113, %114, %115, %116, %117, %118, %119, %120 in 1 : vector<2x128xf32>, vector<2x128xf32>, vector<2x128xf32>, vector<2x128xf32>, vector<2x128xf32>, vector<2x128xf32>, vector<2x128xf32>, vector<2x128xf32>, vector<2x128xf32>, vector<2x128xf32> -> vector<2x1280xf32>
    %c1_77 = arith.constant 1 : index
    %c0_78 = arith.constant 0 : index
    %122 = vector.load %arg6[%c1_77, %c0_78] : memref<5x256xf32, #tpu.memory_space<vmem>>, vector<1x256xf32>
    %123 = arith.truncf %121 : vector<2x1280xf32> to vector<2x1280xbf16>
    %c0_79 = arith.constant 0 : index
    %c0_80 = arith.constant 0 : index
    %124 = vector.load %arg4[%c0_79, %c0_80] : memref<1280x256xbf16, #tpu.memory_space<vmem>>, vector<1280x256xbf16>
    %cst_81 = arith.constant dense<0.000000e+00> : vector<2x256xf32>
    %125 = tpu.matmul %123, %124, %cst_81 {dimension_numbers = #tpu.dot_dimension_numbers<[1], [0], [0], [1], [0, 0, 1, 1], [], []>} : vector<2x1280xbf16>, vector<1280x256xbf16>, vector<2x256xf32> -> vector<2x256xf32>
    %126 = vector.broadcast %122 : vector<1x256xf32> to vector<2x256xf32>
    %127 = arith.addf %125, %126 : vector<2x256xf32>
    %cst_82 = arith.constant 0.000000e+00 : f32
    %128 = vector.broadcast %cst_82 : f32 to vector<2x256xf32>
    %129 = arith.maximumf %127, %128 : vector<2x256xf32>
    %c2_83 = arith.constant 2 : index
    %c0_84 = arith.constant 0 : index
    %130 = vector.load %arg6[%c2_83, %c0_84] : memref<5x256xf32, #tpu.memory_space<vmem>>, vector<1x64xf32>
    %131 = arith.truncf %129 : vector<2x256xf32> to vector<2x256xbf16>
    %c0_85 = arith.constant 0 : index
    %c0_86 = arith.constant 0 : index
    %132 = vector.load %arg5[%c0_85, %c0_86] : memref<256x64xbf16, #tpu.memory_space<vmem>>, vector<256x64xbf16>
    %cst_87 = arith.constant dense<0.000000e+00> : vector<2x64xf32>
    %133 = tpu.matmul %131, %132, %cst_87 {dimension_numbers = #tpu.dot_dimension_numbers<[1], [0], [0], [1], [0, 0, 1, 1], [], []>} : vector<2x256xbf16>, vector<256x64xbf16>, vector<2x64xf32> -> vector<2x64xf32>
    %134 = vector.broadcast %130 : vector<1x64xf32> to vector<2x64xf32>
    %135 = arith.addf %133, %134 : vector<2x64xf32>
    %136 = vector.extract_strided_slice %135 {offsets = [0, 0], sizes = [2, 32], strides = [1, 1]} : vector<2x64xf32> to vector<2x32xf32>
    %137 = vector.extract_strided_slice %135 {offsets = [0, 32], sizes = [2, 32], strides = [1, 1]} : vector<2x64xf32> to vector<2x32xf32>
    %138 = math.exp %137 : vector<2x32xf32>
    %c3_88 = arith.constant 3 : index
    %c0_89 = arith.constant 0 : index
    %139 = vector.load %arg6[%c3_88, %c0_89] : memref<5x256xf32, #tpu.memory_space<vmem>>, vector<2x32xf32>
    %140 = arith.mulf %138, %139 : vector<2x32xf32>
    %141 = arith.addf %136, %140 : vector<2x32xf32>
    %c0_90 = arith.constant 0 : index
    %c0_91 = arith.constant 0 : index
    %142 = vector.load %arg7[%c0_90, %c0_91] : memref<2x128xf32, #tpu.memory_space<vmem>>, vector<2x32xf32>
    tpu.vector_store %arg7[%c0_90, %c0_91], %141 {strides = array<i32>} : memref<2x128xf32, #tpu.memory_space<vmem>>, vector<2x32xf32>,
    %c0_92 = arith.constant 0 : index
    %c32 = arith.constant 32 : index
    %143 = vector.load %arg7[%c0_92, %c32] : memref<2x128xf32, #tpu.memory_space<vmem>>, vector<2x32xf32>
    tpu.vector_store %arg7[%c0_92, %c32], %136 {strides = array<i32>} : memref<2x128xf32, #tpu.memory_space<vmem>>, vector<2x32xf32>,
    %c0_93 = arith.constant 0 : index
    %c64 = arith.constant 64 : index
    %144 = vector.load %arg7[%c0_93, %c64] : memref<2x128xf32, #tpu.memory_space<vmem>>, vector<2x32xf32>
    tpu.vector_store %arg7[%c0_93, %c64], %137 {strides = array<i32>} : memref<2x128xf32, #tpu.memory_space<vmem>>, vector<2x32xf32>,
    %c0_94 = arith.constant 0 : index
    %c96 = arith.constant 96 : index
    %145 = vector.load %arg7[%c0_94, %c96] : memref<2x128xf32, #tpu.memory_space<vmem>>, vector<2x32xf32>
    tpu.vector_store %arg7[%c0_94, %c96], %138 {strides = array<i32>} : memref<2x128xf32, #tpu.memory_space<vmem>>, vector<2x32xf32>,
    %146 = arith.mulf %138, %138 : vector<2x32xf32>
    %147 = arith.mulf %136, %136 : vector<2x32xf32>
    %148 = arith.addf %146, %147 : vector<2x32xf32>
    %149 = arith.subf %148, %137 : vector<2x32xf32>
    %cst_95 = arith.constant 5.000000e-01 : f32
    %150 = vector.broadcast %cst_95 : f32 to vector<2x32xf32>
    %151 = arith.subf %149, %150 : vector<2x32xf32>
    %152 = vector.shape_cast %151 : vector<2x32xf32> to vector<1x2x32xf32>
    %cst_96 = arith.constant dense<0.000000e+00> : vector<1xf32>
    %153 = vector.multi_reduction <add>, %152, %cst_96 [1, 2] : vector<1x2x32xf32> to vector<1xf32>
    %154 = vector.shape_cast %153 : vector<1xf32> to vector<1x1x1xf32>
    %155 = vector.extract %154[0, 0, 0] : f32 from vector<1x1x1xf32>
    %c0_97 = arith.constant 0 : index
    %c0_98 = arith.constant 0 : index
    %156 = memref.load %arg8[%c0_97, %c0_98] : memref<1x1xf32, #tpu.memory_space<smem>>
    memref.store %155, %arg8[%c0_97, %c0_98] : memref<1x1xf32, #tpu.memory_space<smem>>
    return
  }
  func.func @transform_0(%arg0: i32) -> (i32, i32) {
    %c0_i32 = arith.constant 0 : i32
    %c0_i32_0 = arith.constant 0 : i32
    %c0_i32_1 = arith.constant 0 : i32
    return %c0_i32, %c0_i32_0 : i32, i32
  }
  func.func @transform_1(%arg0: i32) -> (i32, i32) {
    %c0_i32 = arith.constant 0 : i32
    %c0_i32_0 = arith.constant 0 : i32
    %c0_i32_1 = arith.constant 0 : i32
    return %c0_i32, %c0_i32_0 : i32, i32
  }
  func.func @transform_2(%arg0: i32) -> (i32, i32, i32) {
    %c0_i32 = arith.constant 0 : i32
    %c0_i32_0 = arith.constant 0 : i32
    %c0_i32_1 = arith.constant 0 : i32
    %c0_i32_2 = arith.constant 0 : i32
    return %c0_i32, %c0_i32_0, %c0_i32_1 : i32, i32, i32
  }
  func.func @transform_3(%arg0: i32) -> (i32, i32) {
    %c0_i32 = arith.constant 0 : i32
    %c0_i32_0 = arith.constant 0 : i32
    %c0_i32_1 = arith.constant 0 : i32
    return %c0_i32, %c0_i32_0 : i32, i32
  }
  func.func @transform_4(%arg0: i32) -> (i32, i32) {
    %c0_i32 = arith.constant 0 : i32
    %c0_i32_0 = arith.constant 0 : i32
    %c0_i32_1 = arith.constant 0 : i32
    return %c0_i32, %c0_i32_0 : i32, i32
  }
  func.func @transform_5(%arg0: i32) -> (i32, i32) {
    %c0_i32 = arith.constant 0 : i32
    %c0_i32_0 = arith.constant 0 : i32
    %c0_i32_1 = arith.constant 0 : i32
    return %c0_i32, %c0_i32_0 : i32, i32
  }
  func.func @transform_6(%arg0: i32) -> (i32, i32) {
    %c0_i32 = arith.constant 0 : i32
    %c0_i32_0 = arith.constant 0 : i32
    %c0_i32_1 = arith.constant 0 : i32
    return %c0_i32, %c0_i32_0 : i32, i32
  }
  func.func @transform_7(%arg0: i32) -> (i32, i32) {
    %c0_i32 = arith.constant 0 : i32
    %c0_i32_0 = arith.constant 0 : i32
    %c0_i32_1 = arith.constant 0 : i32
    return %c0_i32, %c0_i32_0 : i32, i32
  }
}

</mosaic_0001>

<llo_original>
// kernel: encoder_forward.1
$region0: #{encoder_forward.1}
  #allocation0 [shape = 'u32[]', space=smem, size = 0x4, offset = 0x4, fixed_abs, tag = 'smem constant byte address 0x4 - core index']
  #allocation1 [shape = 'u32[144,128]{1,0:T(1,128)}', space=vmem, size = 0x12000, scoped, tag = 'internal scratch']
  #allocation2 [shape = 'f32[320,64]{1,0:T(8,128)}', space=vmem, size = 0x28000, scoped, tag = 'scratch operand']
  %s0 = inlined_call_operand.vmem [shape: f32[320,64], index: 0, kind: input, shape index: {}]
  %s1 = inlined_call_operand.vmem [shape: f32[64,64], index: 1, kind: input, shape index: {}]
  %s2 = inlined_call_operand.vmem [shape: bf16[16,64,128], index: 2, kind: input, shape index: {}]
  %s3 = inlined_call_operand.vmem [shape: bf16[1280,256], index: 3, kind: input, shape index: {}]
  %s4 = inlined_call_operand.vmem [shape: bf16[256,64], index: 4, kind: input, shape index: {}]
  %s5 = inlined_call_operand.vmem [shape: f32[5,256], index: 5, kind: input, shape index: {}]
  %s6 = inlined_call_operand.hbm [shape: f32[2,128], index: 6, kind: output, shape index: {0}]
  %s7 = inlined_call_operand.hbm [shape: f32[1,1], index: 7, kind: output, shape index: {1}]
  %8 = xla_tuple %s6, %s7
  %s9 = sld [smem:[#allocation0]]
  $region42: #{encoder_forward.1} parent=0
    _
  %s11 = ssub.s32 1, %s9
  %s12 = scalar_select 0, %s11, %s9
  $region1: #{encoder_forward.1} parent=0
    #allocation3 [shape = 'u8[1024]{0}', space=vmem, size = 0x400, scoped, tag = 'output window, operand 0, single buffered']
    #allocation4 [shape = 's32[1]{0}', space=sflag, size = 0x4, scoped, tag = 'scoped memory for encoder_forward.1']
    #allocation5 [shape = 's32[1]{0}', space=sflag, size = 0x4, scoped, tag = 'scoped memory for encoder_forward.1']
    #allocation6 [shape = 'u8[512]{0}', space=smem, size = 0x200, scoped, tag = 'output window, operand 1, single buffered']
    %13 = vsyncpa [#allocation4], 0
    %14 = vsyncpa [#allocation5], 0
    // Predicated region
    $region2: #{encoder_forward.1} parent=1 // pred_check
      _
    $region3: #{encoder_forward.1} parent=1 // pred_check_branch
      %16 = sbr.rel (0) target = $region5
    $region4: #{encoder_forward.1} parent=1 // pred_region
      _
    $region5: #{encoder_forward.1} parent=1 // pred_fallthru
      _
    // Predicated region
    $region6: #{encoder_forward.1} parent=1 // pred_check
      _
    $region7: #{encoder_forward.1} parent=1 // pred_check_branch
      %18 = sbr.rel (0) target = $region9
    $region8: #{encoder_forward.1} parent=1 // pred_region
      _
    $region9: #{encoder_forward.1} parent=1 // pred_fallthru
      _
    // Predicated region
    $region10: #{encoder_forward.1} parent=1 // pred_check
      _
    $region11: #{encoder_forward.1} parent=1 // pred_check_branch
      %20 = sbr.rel (0) target = $region13
    $region12: #{encoder_forward.1} parent=1 // pred_region
      _
    $region13: #{encoder_forward.1} parent=1 // pred_fallthru
      _
    // Predicated region
    $region14: #{encoder_forward.1} parent=1 // pred_check
      _
    $region15: #{encoder_forward.1} parent=1 // pred_check_branch
      %22 = sbr.rel (0) target = $region17
    $region16: #{encoder_forward.1} parent=1 // pred_region
      _
    $region17: #{encoder_forward.1} parent=1 // pred_fallthru
      _
    // Predicated region
    $region18: #{encoder_forward.1} parent=1 // pred_check
      _
    $region19: #{encoder_forward.1} parent=1 // pred_check_branch
      %24 = sbr.rel (0) target = $region21
    $region20: #{encoder_forward.1} parent=1 // pred_region
      _
    $region21: #{encoder_forward.1} parent=1 // pred_fallthru
      _
    // Predicated region
    $region22: #{encoder_forward.1} parent=1 // pred_check
      _
    $region23: #{encoder_forward.1} parent=1 // pred_check_branch
      %26 = sbr.rel (0) target = $region25
    $region24: #{encoder_forward.1} parent=1 // pred_region
      _
    $region25: #{encoder_forward.1} parent=1 // pred_fallthru
      _
    %v28 = vld [vmem:[%s5] ss:$0 sm:$0xff]
    %v29 = vld [vmem:[%s0] sm:$0xff]
    %v30 = vld [vmem:[%s0 + $0x8] sm:$0xff]
    %v31 = vld [vmem:[%s0 + $0x10] sm:$0xff]
    %v32 = vld [vmem:[%s0 + $0x18] sm:$0xff]
    %v33 = vld [vmem:[%s0 + $0x20] sm:$0xff]
    %v34 = vld [vmem:[%s0 + $0x28] sm:$0xff]
    %v35 = vld [vmem:[%s0 + $0x30] sm:$0xff]
    %v36 = vld [vmem:[%s0 + $0x38] sm:$0xff]
    %v37 = vld [vmem:[%s0 + $0x40] sm:$0xff]
    %v38 = vld [vmem:[%s0 + $0x48] sm:$0xff]
    %v39 = vld [vmem:[%s0 + $0x50] sm:$0xff]
    %v40 = vld [vmem:[%s0 + $0x58] sm:$0xff]
    %v41 = vld [vmem:[%s0 + $0x60] sm:$0xff]
    %v42 = vld [vmem:[%s0 + $0x68] sm:$0xff]
    %v43 = vld [vmem:[%s0 + $0x70] sm:$0xff]
    %v44 = vld [vmem:[%s0 + $0x78] sm:$0xff]
    %v45 = vld [vmem:[%s0 + $0x80] sm:$0xff]
    %v46 = vld [vmem:[%s0 + $0x88] sm:$0xff]
    %v47 = vld [vmem:[%s0 + $0x90] sm:$0xff]
    %v48 = vld [vmem:[%s0 + $0x98] sm:$0xff]
    %v49 = vld [vmem:[%s0 + $0xa0] sm:$0xff]
    %v50 = vld [vmem:[%s0 + $0xa8] sm:$0xff]
    %v51 = vld [vmem:[%s0 + $0xb0] sm:$0xff]
    %v52 = vld [vmem:[%s0 + $0xb8] sm:$0xff]
    %v53 = vld [vmem:[%s0 + $0xc0] sm:$0xff]
    %v54 = vld [vmem:[%s0 + $0xc8] sm:$0xff]
    %v55 = vld [vmem:[%s0 + $0xd0] sm:$0xff]
    %v56 = vld [vmem:[%s0 + $0xd8] sm:$0xff]
    %v57 = vld [vmem:[%s0 + $0xe0] sm:$0xff]
    %v58 = vld [vmem:[%s0 + $0xe8] sm:$0xff]
    %v59 = vld [vmem:[%s0 + $0xf0] sm:$0xff]
    %v60 = vld [vmem:[%s0 + $0xf8] sm:$0xff]
    %v61 = vld [vmem:[%s0 + $0x100] sm:$0xff]
    %v62 = vld [vmem:[%s0 + $0x108] sm:$0xff]
    %v63 = vld [vmem:[%s0 + $0x110] sm:$0xff]
    %v64 = vld [vmem:[%s0 + $0x118] sm:$0xff]
    %v65 = vld [vmem:[%s0 + $0x120] sm:$0xff]
    %v66 = vld [vmem:[%s0 + $0x128] sm:$0xff]
    %v67 = vld [vmem:[%s0 + $0x130] sm:$0xff]
    %v68 = vld [vmem:[%s0 + $0x138] sm:$0xff]
    %v69 = vld [vmem:[%s1] sm:$0xff]
    %v70 = vld [vmem:[%s1 + $0x8] sm:$0xff]
    %v71 = vld [vmem:[%s1 + $0x10] sm:$0xff]
    %v72 = vld [vmem:[%s1 + $0x18] sm:$0xff]
    %v73 = vld [vmem:[%s1 + $0x20] sm:$0xff]
    %v74 = vld [vmem:[%s1 + $0x28] sm:$0xff]
    %v75 = vld [vmem:[%s1 + $0x30] sm:$0xff]
    %v76 = vld [vmem:[%s1 + $0x38] sm:$0xff]
    %vm77 = vcmask 523264
    %v79 = vsel %vm77, %v29, 0
    %v82 = vsel %vm77, %v30, 0
    %v85 = vsel %vm77, %v31, 0
    %v88 = vsel %vm77, %v32, 0
    %v91 = vsel %vm77, %v33, 0
    %v94 = vsel %vm77, %v34, 0
    %v97 = vsel %vm77, %v35, 0
    %v100 = vsel %vm77, %v36, 0
    %v103 = vsel %vm77, %v37, 0
    %v106 = vsel %vm77, %v38, 0
    %v109 = vsel %vm77, %v39, 0
    %v112 = vsel %vm77, %v40, 0
    %v115 = vsel %vm77, %v41, 0
    %v118 = vsel %vm77, %v42, 0
    %v121 = vsel %vm77, %v43, 0
    %v124 = vsel %vm77, %v44, 0
    %v127 = vsel %vm77, %v45, 0
    %v130 = vsel %vm77, %v46, 0
    %v133 = vsel %vm77, %v47, 0
    %v136 = vsel %vm77, %v48, 0
    %v139 = vsel %vm77, %v49, 0
    %v142 = vsel %vm77, %v50, 0
    %v145 = vsel %vm77, %v51, 0
    %v148 = vsel %vm77, %v52, 0
    %v151 = vsel %vm77, %v53, 0
    %v154 = vsel %vm77, %v54, 0
    %v157 = vsel %vm77, %v55, 0
    %v160 = vsel %vm77, %v56, 0
    %v163 = vsel %vm77, %v57, 0
    %v166 = vsel %vm77, %v58, 0
    %v169 = vsel %vm77, %v59, 0
    %v172 = vsel %vm77, %v60, 0
    %v175 = vsel %vm77, %v61, 0
    %v178 = vsel %vm77, %v62, 0
    %v181 = vsel %vm77, %v63, 0
    %v184 = vsel %vm77, %v64, 0
    %v187 = vsel %vm77, %v65, 0
    %v190 = vsel %vm77, %v66, 0
    %v193 = vsel %vm77, %v67, 0
    %v196 = vsel %vm77, %v68, 0
    %198 = vmatprep.subr.mxu0 0.0
    %199 = vmatpush1.msra.mxu0 0.0
    %200 = vmatprep.subr.mxu0 0.0
    %201 = vmatpush1.msra.mxu0 0.0
    %202 = vmatprep.subr.mxu0 0.0
    %203 = vmatpush1.msra.mxu0 0.0
    %204 = vmatprep.subr.mxu0 0.0
    %205 = vmatpush1.msra.mxu0 0.0
    %206 = vmatprep.subr.mxu0 0.0
    %207 = vmatpush1.msra.mxu0 0.0
    %208 = vmatprep.subr.mxu0 0.0
    %209 = vmatpush1.msra.mxu0 0.0
    %210 = vmatprep.subr.mxu0 0.0
    %211 = vmatpush1.msra.mxu0 0.0
    %212 = vmatprep.subr.mxu0 0.0
    %213 = vmatpush1.msra.mxu0 0.0
    %214 = vmatprep.subr.mxu0 0.0
    %215 = vmatpush1.msra.mxu0 %v76
    %216 = vmatprep.subr.mxu0 0.0
    %217 = vmatpush1.msra.mxu0 %v75
    %218 = vmatprep.subr.mxu0 0.0
    %219 = vmatpush1.msra.mxu0 %v74
    %220 = vmatprep.subr.mxu0 0.0
    %221 = vmatpush1.msra.mxu0 %v73
    %222 = vmatprep.subr.mxu0 0.0
    %223 = vmatpush1.msra.mxu0 %v72
    %224 = vmatprep.subr.mxu0 0.0
    %225 = vmatpush1.msra.mxu0 %v71
    %226 = vmatprep.subr.mxu0 0.0
    %227 = vmatpush1.msra.mxu0 %v70
    %228 = vmatprep.subr.mxu0 0.0
    %229 = vmatpush1.msra.mxu0 %v69
    %230 = vmatprep.subr.mxu0 0.0
    %231 = vmatpush2.msra.mxu0 0.0
    %232 = vmatprep.subr.mxu0 0.0
    %233 = vmatpush2.msra.mxu0 0.0
    %234 = vmatprep.subr.mxu0 0.0
    %235 = vmatpush2.msra.mxu0 0.0
    %236 = vmatprep.subr.mxu0 0.0
    %237 = vmatpush2.msra.mxu0 0.0
    %238 = vmatprep.subr.mxu0 0.0
    %239 = vmatpush2.msra.mxu0 0.0
    %240 = vmatprep.subr.mxu0 0.0
    %241 = vmatpush2.msra.mxu0 0.0
    %242 = vmatprep.subr.mxu0 0.0
    %243 = vmatpush2.msra.mxu0 0.0
    %244 = vmatprep.subr.mxu0 0.0
    %245 = vmatpush2.msra.mxu0 0.0
    %246 = vmatprep.subr.mxu0 0.0
    %247 = vmatpush2.msra.mxu0 0.0
    %248 = vmatprep.subr.mxu0 0.0
    %249 = vmatpush2.msra.mxu0 0.0
    %250 = vmatprep.subr.mxu0 0.0
    %251 = vmatpush2.msra.mxu0 0.0
    %252 = vmatprep.subr.mxu0 0.0
    %253 = vmatpush2.msra.mxu0 0.0
    %254 = vmatprep.subr.mxu0 0.0
    %255 = vmatpush2.msra.mxu0 0.0
    %256 = vmatprep.subr.mxu0 0.0
    %257 = vmatpush2.msra.mxu0 0.0
    %258 = vmatprep.subr.mxu0 0.0
    %259 = vmatpush2.msra.mxu0 0.0
    %260 = vmatprep.subr.mxu0 0.0
    %261 = vmatpush2.msra.mxu0 0.0
    %262 = vmatprep.mubr.f32.mxu0 0.0
    %263 = vmatmul.mubr.f32.gmra.mxu0 %v79
    %v264 = vpop.f32.mrf.mxu0
    %v265 = vadd.f32 %v28, %v264
    %v266 = vpop.f32.mrf.mxu0
    %267 = vmatprep.mubr.f32.mxu0 0.0
    %268 = vmatmul.mubr.f32.gmra.mxu0 %v82
    %v269 = vpop.f32.mrf.mxu0
    %v270 = vadd.f32 %v28, %v269
    %v271 = vpop.f32.mrf.mxu0
    %272 = vmatprep.mubr.f32.mxu0 0.0
    %273 = vmatmul.mubr.f32.gmra.mxu0 %v85
    %v274 = vpop.f32.mrf.mxu0
    %v275 = vadd.f32 %v28, %v274
    %v276 = vpop.f32.mrf.mxu0
    %277 = vmatprep.mubr.f32.mxu0 0.0
    %278 = vmatmul.mubr.f32.gmra.mxu0 %v88
    %v279 = vpop.f32.mrf.mxu0
    %v280 = vadd.f32 %v28, %v279
    %v281 = vpop.f32.mrf.mxu0
    %282 = vmatprep.mubr.f32.mxu0 0.0
    %283 = vmatmul.mubr.f32.gmra.mxu0 %v91
    %v284 = vpop.f32.mrf.mxu0
    %v285 = vadd.f32 %v28, %v284
    %v286 = vpop.f32.mrf.mxu0
    %287 = vmatprep.mubr.f32.mxu0 0.0
    %288 = vmatmul.mubr.f32.gmra.mxu0 %v94
    %v289 = vpop.f32.mrf.mxu0
    %v290 = vadd.f32 %v28, %v289
    %v291 = vpop.f32.mrf.mxu0
    %292 = vmatprep.mubr.f32.mxu0 0.0
    %293 = vmatmul.mubr.f32.gmra.mxu0 %v97
    %v294 = vpop.f32.mrf.mxu0
    %v295 = vadd.f32 %v28, %v294
    %v296 = vpop.f32.mrf.mxu0
    %297 = vmatprep.mubr.f32.mxu0 0.0
    %298 = vmatmul.mubr.f32.gmra.mxu0 %v100
    %v299 = vpop.f32.mrf.mxu0
    %v300 = vadd.f32 %v28, %v299
    %v301 = vpop.f32.mrf.mxu0
    %302 = vmatprep.mubr.f32.mxu0 0.0
    %303 = vmatmul.mubr.f32.gmra.mxu0 %v103
    %v304 = vpop.f32.mrf.mxu0
    %v305 = vadd.f32 %v28, %v304
    %v306 = vpop.f32.mrf.mxu0
    %307 = vmatprep.mubr.f32.mxu0 0.0
    %308 = vmatmul.mubr.f32.gmra.mxu0 %v106
    %v309 = vpop.f32.mrf.mxu0
    %v310 = vadd.f32 %v28, %v309
    %v311 = vpop.f32.mrf.mxu0
    %312 = vmatprep.mubr.f32.mxu0 0.0
    %313 = vmatmul.mubr.f32.gmra.mxu0 %v109
    %v314 = vpop.f32.mrf.mxu0
    %v315 = vadd.f32 %v28, %v314
    %v316 = vpop.f32.mrf.mxu0
    %317 = vmatprep.mubr.f32.mxu0 0.0
    %318 = vmatmul.mubr.f32.gmra.mxu0 %v112
    %v319 = vpop.f32.mrf.mxu0
    %v320 = vadd.f32 %v28, %v319
    %v321 = vpop.f32.mrf.mxu0
    %322 = vmatprep.mubr.f32.mxu0 0.0
    %323 = vmatmul.mubr.f32.gmra.mxu0 %v115
    %v324 = vpop.f32.mrf.mxu0
    %v325 = vadd.f32 %v28, %v324
    %v326 = vpop.f32.mrf.mxu0
    %327 = vmatprep.mubr.f32.mxu0 0.0
    %328 = vmatmul.mubr.f32.gmra.mxu0 %v118
    %v329 = vpop.f32.mrf.mxu0
    %v330 = vadd.f32 %v28, %v329
    %v331 = vpop.f32.mrf.mxu0
    %332 = vmatprep.mubr.f32.mxu0 0.0
    %333 = vmatmul.mubr.f32.gmra.mxu0 %v121
    %v334 = vpop.f32.mrf.mxu0
    %v335 = vadd.f32 %v28, %v334
    %v336 = vpop.f32.mrf.mxu0
    %337 = vmatprep.mubr.f32.mxu0 0.0
    %338 = vmatmul.mubr.f32.gmra.mxu0 %v124
    %v339 = vpop.f32.mrf.mxu0
    %v340 = vadd.f32 %v28, %v339
    %v341 = vpop.f32.mrf.mxu0
    %342 = vmatprep.mubr.f32.mxu0 0.0
    %343 = vmatmul.mubr.f32.gmra.mxu0 %v127
    %v344 = vpop.f32.mrf.mxu0
    %v345 = vadd.f32 %v28, %v344
    %v346 = vpop.f32.mrf.mxu0
    %347 = vmatprep.mubr.f32.mxu0 0.0
    %348 = vmatmul.mubr.f32.gmra.mxu0 %v130
    %v349 = vpop.f32.mrf.mxu0
    %v350 = vadd.f32 %v28, %v349
    %v351 = vpop.f32.mrf.mxu0
    %352 = vmatprep.mubr.f32.mxu0 0.0
    %353 = vmatmul.mubr.f32.gmra.mxu0 %v133
    %v354 = vpop.f32.mrf.mxu0
    %v355 = vadd.f32 %v28, %v354
    %v356 = vpop.f32.mrf.mxu0
    %357 = vmatprep.mubr.f32.mxu0 0.0
    %358 = vmatmul.mubr.f32.gmra.mxu0 %v136
    %v359 = vpop.f32.mrf.mxu0
    %v360 = vadd.f32 %v28, %v359
    %v361 = vpop.f32.mrf.mxu0
    %362 = vmatprep.mubr.f32.mxu0 0.0
    %363 = vmatmul.mubr.f32.gmra.mxu0 %v139
    %v364 = vpop.f32.mrf.mxu0
    %v365 = vadd.f32 %v28, %v364
    %v366 = vpop.f32.mrf.mxu0
    %367 = vmatprep.mubr.f32.mxu0 0.0
    %368 = vmatmul.mubr.f32.gmra.mxu0 %v142
    %v369 = vpop.f32.mrf.mxu0
    %v370 = vadd.f32 %v28, %v369
    %v371 = vpop.f32.mrf.mxu0
    %372 = vmatprep.mubr.f32.mxu0 0.0
    %373 = vmatmul.mubr.f32.gmra.mxu0 %v145
    %v374 = vpop.f32.mrf.mxu0
    %v375 = vadd.f32 %v28, %v374
    %v376 = vpop.f32.mrf.mxu0
    %377 = vmatprep.mubr.f32.mxu0 0.0
    %378 = vmatmul.mubr.f32.gmra.mxu0 %v148
    %v379 = vpop.f32.mrf.mxu0
    %v380 = vadd.f32 %v28, %v379
    %v381 = vpop.f32.mrf.mxu0
    %382 = vmatprep.mubr.f32.mxu0 0.0
    %383 = vmatmul.mubr.f32.gmra.mxu0 %v151
    %v384 = vpop.f32.mrf.mxu0
    %v385 = vadd.f32 %v28, %v384
    %v386 = vpop.f32.mrf.mxu0
    %387 = vmatprep.mubr.f32.mxu0 0.0
    %388 = vmatmul.mubr.f32.gmra.mxu0 %v154
    %v389 = vpop.f32.mrf.mxu0
    %v390 = vadd.f32 %v28, %v389
    %v391 = vpop.f32.mrf.mxu0
    %392 = vmatprep.mubr.f32.mxu0 0.0
    %393 = vmatmul.mubr.f32.gmra.mxu0 %v157
    %v394 = vpop.f32.mrf.mxu0
    %v395 = vadd.f32 %v28, %v394
    %v396 = vpop.f32.mrf.mxu0
    %397 = vmatprep.mubr.f32.mxu0 0.0
    %398 = vmatmul.mubr.f32.gmra.mxu0 %v160
    %v399 = vpop.f32.mrf.mxu0
    %v400 = vadd.f32 %v28, %v399
    %v401 = vpop.f32.mrf.mxu0
    %402 = vmatprep.mubr.f32.mxu0 0.0
    %403 = vmatmul.mubr.f32.gmra.mxu0 %v163
    %v404 = vpop.f32.mrf.mxu0
    %v405 = vadd.f32 %v28, %v404
    %v406 = vpop.f32.mrf.mxu0
    %407 = vmatprep.mubr.f32.mxu0 0.0
    %408 = vmatmul.mubr.f32.gmra.mxu0 %v166
    %v409 = vpop.f32.mrf.mxu0
    %v410 = vadd.f32 %v28, %v409
    %v411 = vpop.f32.mrf.mxu0
    %412 = vmatprep.mubr.f32.mxu0 0.0
    %413 = vmatmul.mubr.f32.gmra.mxu0 %v169
    %v414 = vpop.f32.mrf.mxu0
    %v415 = vadd.f32 %v28, %v414
    %v416 = vpop.f32.mrf.mxu0
    %417 = vmatprep.mubr.f32.mxu0 0.0
    %418 = vmatmul.mubr.f32.gmra.mxu0 %v172
    %v419 = vpop.f32.mrf.mxu0
    %v420 = vadd.f32 %v28, %v419
    %v421 = vpop.f32.mrf.mxu0
    %422 = vmatprep.mubr.f32.mxu0 0.0
    %423 = vmatmul.mubr.f32.gmra.mxu0 %v175
    %v424 = vpop.f32.mrf.mxu0
    %v425 = vadd.f32 %v28, %v424
    %v426 = vpop.f32.mrf.mxu0
    %427 = vmatprep.mubr.f32.mxu0 0.0
    %428 = vmatmul.mubr.f32.gmra.mxu0 %v178
    %v429 = vpop.f32.mrf.mxu0
    %v430 = vadd.f32 %v28, %v429
    %v431 = vpop.f32.mrf.mxu0
    %432 = vmatprep.mubr.f32.mxu0 0.0
    %433 = vmatmul.mubr.f32.gmra.mxu0 %v181
    %v434 = vpop.f32.mrf.mxu0
    %v435 = vadd.f32 %v28, %v434
    %v436 = vpop.f32.mrf.mxu0
    %437 = vmatprep.mubr.f32.mxu0 0.0
    %438 = vmatmul.mubr.f32.gmra.mxu0 %v184
    %v439 = vpop.f32.mrf.mxu0
    %v440 = vadd.f32 %v28, %v439
    %v441 = vpop.f32.mrf.mxu0
    %442 = vmatprep.mubr.f32.mxu0 0.0
    %443 = vmatmul.mubr.f32.gmra.mxu0 %v187
    %v444 = vpop.f32.mrf.mxu0
    %v445 = vadd.f32 %v28, %v444
    %v446 = vpop.f32.mrf.mxu0
    %447 = vmatprep.mubr.f32.mxu0 0.0
    %448 = vmatmul.mubr.f32.gmra.mxu0 %v190
    %v449 = vpop.f32.mrf.mxu0
    %v450 = vadd.f32 %v28, %v449
    %v451 = vpop.f32.mrf.mxu0
    %452 = vmatprep.mubr.f32.mxu0 0.0
    %453 = vmatmul.mubr.f32.gmra.mxu0 %v193
    %v454 = vpop.f32.mrf.mxu0
    %v455 = vadd.f32 %v28, %v454
    %v456 = vpop.f32.mrf.mxu0
    %457 = vmatprep.mubr.f32.mxu0 0.0
    %458 = vmatmul.mubr.f32.gmra.mxu0 %v196
    %v459 = vpop.f32.mrf.mxu0
    %v460 = vadd.f32 %v28, %v459
    %v461 = vpop.f32.mrf.mxu0
    %462 = vdwg.mxu0
    %v463 = vmax.f32 %v265, 0.0
    %v464 = vmax.f32 %v270, 0.0
    %v465 = vmax.f32 %v275, 0.0
    %v466 = vmax.f32 %v280, 0.0
    %v467 = vmax.f32 %v285, 0.0
    %v468 = vmax.f32 %v290, 0.0
    %v469 = vmax.f32 %v295, 0.0
    %v470 = vmax.f32 %v300, 0.0
    %v471 = vmax.f32 %v305, 0.0
    %v472 = vmax.f32 %v310, 0.0
    %v473 = vmax.f32 %v315, 0.0
    %v474 = vmax.f32 %v320, 0.0
    %v475 = vmax.f32 %v325, 0.0
    %v476 = vmax.f32 %v330, 0.0
    %v477 = vmax.f32 %v335, 0.0
    %v478 = vmax.f32 %v340, 0.0
    %v479 = vmax.f32 %v345, 0.0
    %v480 = vmax.f32 %v350, 0.0
    %v481 = vmax.f32 %v355, 0.0
    %v482 = vmax.f32 %v360, 0.0
    %v483 = vmax.f32 %v365, 0.0
    %v484 = vmax.f32 %v370, 0.0
    %v485 = vmax.f32 %v375, 0.0
    %v486 = vmax.f32 %v380, 0.0
    %v487 = vmax.f32 %v385, 0.0
    %v488 = vmax.f32 %v390, 0.0
    %v489 = vmax.f32 %v395, 0.0
    %v490 = vmax.f32 %v400, 0.0
    %v491 = vmax.f32 %v405, 0.0
    %v492 = vmax.f32 %v410, 0.0
    %v493 = vmax.f32 %v415, 0.0
    %v494 = vmax.f32 %v420, 0.0
    %v495 = vmax.f32 %v425, 0.0
    %v496 = vmax.f32 %v430, 0.0
    %v497 = vmax.f32 %v435, 0.0
    %v498 = vmax.f32 %v440, 0.0
    %v499 = vmax.f32 %v445, 0.0
    %v500 = vmax.f32 %v450, 0.0
    %v501 = vmax.f32 %v455, 0.0
    %v502 = vmax.f32 %v460, 0.0
    %503 = vst.msk [vmem:[#allocation2] sm:$0xff] %vm77, %v463
    %504 = vst.msk [vmem:[#allocation2 + $0x8] sm:$0xff] %vm77, %v464
    %505 = vst.msk [vmem:[#allocation2 + $0x10] sm:$0xff] %vm77, %v465
    %506 = vst.msk [vmem:[#allocation2 + $0x18] sm:$0xff] %vm77, %v466
    %507 = vst.msk [vmem:[#allocation2 + $0x20] sm:$0xff] %vm77, %v467
    %508 = vst.msk [vmem:[#allocation2 + $0x28] sm:$0xff] %vm77, %v468
    %509 = vst.msk [vmem:[#allocation2 + $0x30] sm:$0xff] %vm77, %v469
    %510 = vst.msk [vmem:[#allocation2 + $0x38] sm:$0xff] %vm77, %v470
    %511 = vst.msk [vmem:[#allocation2 + $0x40] sm:$0xff] %vm77, %v471
    %512 = vst.msk [vmem:[#allocation2 + $0x48] sm:$0xff] %vm77, %v472
    %513 = vst.msk [vmem:[#allocation2 + $0x50] sm:$0xff] %vm77, %v473
    %514 = vst.msk [vmem:[#allocation2 + $0x58] sm:$0xff] %vm77, %v474
    %515 = vst.msk [vmem:[#allocation2 + $0x60] sm:$0xff] %vm77, %v475
    %516 = vst.msk [vmem:[#allocation2 + $0x68] sm:$0xff] %vm77, %v476
    %517 = vst.msk [vmem:[#allocation2 + $0x70] sm:$0xff] %vm77, %v477
    %518 = vst.msk [vmem:[#allocation2 + $0x78] sm:$0xff] %vm77, %v478
    %519 = vst.msk [vmem:[#allocation2 + $0x80] sm:$0xff] %vm77, %v479
    %520 = vst.msk [vmem:[#allocation2 + $0x88] sm:$0xff] %vm77, %v480
    %521 = vst.msk [vmem:[#allocation2 + $0x90] sm:$0xff] %vm77, %v481
    %522 = vst.msk [vmem:[#allocation2 + $0x98] sm:$0xff] %vm77, %v482
    %523 = vst.msk [vmem:[#allocation2 + $0xa0] sm:$0xff] %vm77, %v483
    %524 = vst.msk [vmem:[#allocation2 + $0xa8] sm:$0xff] %vm77, %v484
    %525 = vst.msk [vmem:[#allocation2 + $0xb0] sm:$0xff] %vm77, %v485
    %526 = vst.msk [vmem:[#allocation2 + $0xb8] sm:$0xff] %vm77, %v486
    %527 = vst.msk [vmem:[#allocation2 + $0xc0] sm:$0xff] %vm77, %v487
    %528 = vst.msk [vmem:[#allocation2 + $0xc8] sm:$0xff] %vm77, %v488
    %529 = vst.msk [vmem:[#allocation2 + $0xd0] sm:$0xff] %vm77, %v489
    %530 = vst.msk [vmem:[#allocation2 + $0xd8] sm:$0xff] %vm77, %v490
    %531 = vst.msk [vmem:[#allocation2 + $0xe0] sm:$0xff] %vm77, %v491
    %532 = vst.msk [vmem:[#allocation2 + $0xe8] sm:$0xff] %vm77, %v492
    %533 = vst.msk [vmem:[#allocation2 + $0xf0] sm:$0xff] %vm77, %v493
    %534 = vst.msk [vmem:[#allocation2 + $0xf8] sm:$0xff] %vm77, %v494
    %535 = vst.msk [vmem:[#allocation2 + $0x100] sm:$0xff] %vm77, %v495
    %536 = vst.msk [vmem:[#allocation2 + $0x108] sm:$0xff] %vm77, %v496
    %537 = vst.msk [vmem:[#allocation2 + $0x110] sm:$0xff] %vm77, %v497
    %538 = vst.msk [vmem:[#allocation2 + $0x118] sm:$0xff] %vm77, %v498
    %539 = vst.msk [vmem:[#allocation2 + $0x120] sm:$0xff] %vm77, %v499
    %540 = vst.msk [vmem:[#allocation2 + $0x128] sm:$0xff] %vm77, %v500
    %541 = vst.msk [vmem:[#allocation2 + $0x130] sm:$0xff] %vm77, %v501
    %542 = vst.msk [vmem:[#allocation2 + $0x138] sm:$0xff] %vm77, %v502
    %v543 = vld [vmem:[#allocation2] sm:$0xff]
    %v544 = vld [vmem:[#allocation2 + $0x8] sm:$0xff]
    %v545 = vld [vmem:[#allocation2 + $0x10] sm:$0xf]
    %v546 = vpack.c.bf16 %v544, %v543
    %v547 = vpack.c.bf16 %v545, %v545
    %v548 = vld [vmem:[%s2] sm:$0xf]
    %v549 = vld [vmem:[%s2 + $0x4] sm:$0xf]
    %v550 = vld [vmem:[%s2 + $0x8] sm:$0xf]
    %v551 = vld [vmem:[%s2 + $0xc] sm:$0xf]
    %v552 = vld [vmem:[%s2 + $0x10] sm:$0xf]
    %v553 = vld [vmem:[%s2 + $0x14] sm:$0xf]
    %v554 = vld [vmem:[%s2 + $0x18] sm:$0xf]
    %v555 = vld [vmem:[%s2 + $0x1c] sm:$0xf]
    %v556 = vld [vmem:[#allocation2 + $0x14] sm:$0xff]
    %v557 = vld [vmem:[#allocation2 + $0x1c] sm:$0xff]
    %v558 = vld [vmem:[#allocation2 + $0x24] sm:$0xf]
    %v559 = vpack.c.bf16 %v557, %v556
    %v560 = vpack.c.bf16 %v558, %v558
    %s561 = scalar_lea.vmem %s2, 32
    %v562 = vld [vmem:[%s561] sm:$0xf]
    %v563 = vld [vmem:[%s561 + $0x4] sm:$0xf]
    %v564 = vld [vmem:[%s561 + $0x8] sm:$0xf]
    %v565 = vld [vmem:[%s561 + $0xc] sm:$0xf]
    %v566 = vld [vmem:[%s561 + $0x10] sm:$0xf]
    %v567 = vld [vmem:[%s561 + $0x14] sm:$0xf]
    %v568 = vld [vmem:[%s561 + $0x18] sm:$0xf]
    %v569 = vld [vmem:[%s561 + $0x1c] sm:$0xf]
    %v578 = vunpack.c.l.b16 %v562
    %v579 = vunpack.c.l.b16 %v563
    %v580 = vunpack.c.l.b16 %v564
    %v581 = vunpack.c.l.b16 %v565
    %v582 = vunpack.c.l.b16 %v566
    %v583 = vunpack.c.l.b16 %v567
    %v584 = vunpack.c.l.b16 %v568
    %v585 = vunpack.c.l.b16 %v569
    %v586 = vpack.c.b16 %v579, %v578
    %v587 = vpack.c.b16 %v581, %v580
    %v588 = vpack.c.b16 %v583, %v582
    %v589 = vpack.c.b16 %v585, %v584
    %v595 = vsel %vm77, %v559, 0
    %v598 = vsel %vm77, %v560, 0
    %600 = vmatprep.subr.bf16.mxu0 0
    %601 = vmatpush1.bf16.msra.mxu0 0
    %602 = vmatprep.subr.bf16.mxu0 0
    %603 = vmatpush1.bf16.msra.mxu0 0
    %604 = vmatprep.subr.bf16.mxu0 0
    %605 = vmatpush1.bf16.msra.mxu0 0
    %606 = vmatprep.subr.bf16.mxu0 0
    %607 = vmatpush1.bf16.msra.mxu0 0
    %608 = vmatprep.subr.bf16.mxu0 0
    %609 = vmatpush1.bf16.msra.mxu0 %v589
    %610 = vmatprep.subr.bf16.mxu0 0
    %611 = vmatpush1.bf16.msra.mxu0 %v588
    %612 = vmatprep.subr.bf16.mxu0 0
    %613 = vmatpush1.bf16.msra.mxu0 %v587
    %614 = vmatprep.subr.bf16.mxu0 0
    %615 = vmatpush1.bf16.msra.mxu0 %v586
    %616 = vmatprep.subr.bf16.mxu0 0
    %617 = vmatpush2.bf16.msra.mxu0 0
    %618 = vmatprep.subr.bf16.mxu0 0
    %619 = vmatpush2.bf16.msra.mxu0 0
    %620 = vmatprep.subr.bf16.mxu0 0
    %621 = vmatpush2.bf16.msra.mxu0 0
    %622 = vmatprep.subr.bf16.mxu0 0
    %623 = vmatpush2.bf16.msra.mxu0 0
    %624 = vmatprep.subr.bf16.mxu0 0
    %625 = vmatpush2.bf16.msra.mxu0 0
    %626 = vmatprep.subr.bf16.mxu0 0
    %627 = vmatpush2.bf16.msra.mxu0 0
    %628 = vmatprep.subr.bf16.mxu0 0
    %629 = vmatpush2.bf16.msra.mxu0 0
    %630 = vmatprep.subr.bf16.mxu0 0
    %631 = vmatpush2.bf16.msra.mxu0 0
    %632 = vmatprep.mubr.bf16.mxu0 0
    %633 = vmatmul.mubr.bf16.gmra.mxu0 %v595
    %v634 = vpop.f32.mrf.mxu0
    %v635 = vadd.f32 0.0, %v634
    %v636 = vpop.f32.mrf.mxu0
    %v637 = vpop.f32.mrf.mxu0
    %v638 = vadd.f32 0.0, %v637
    %v639 = vpop.f32.mrf.mxu0
    %640 = vmatprep.mubr.bf16.mxu0 0
    %641 = vmatmul.mubr.bf16.gmra.mxu0 %v598
    %v642 = vpop.f32.mrf.mxu0
    %v643 = vadd.f32 0.0, %v642
    %v644 = vpop.f32.mrf.mxu0
    %v645 = vpop.f32.mrf.mxu0
    %v646 = vpop.f32.mrf.mxu0
    %647 = vdwg.mxu0
    %v656 = vunpack.c.l.b16 %v548
    %v657 = vunpack.c.l.b16 %v549
    %v658 = vunpack.c.l.b16 %v550
    %v659 = vunpack.c.l.b16 %v551
    %v660 = vunpack.c.l.b16 %v552
    %v661 = vunpack.c.l.b16 %v553
    %v662 = vunpack.c.l.b16 %v554
    %v663 = vunpack.c.l.b16 %v555
    %v664 = vpack.c.b16 %v657, %v656
    %v665 = vpack.c.b16 %v659, %v658
    %v666 = vpack.c.b16 %v661, %v660
    %v667 = vpack.c.b16 %v663, %v662
    %v673 = vsel %vm77, %v546, 0
    %v676 = vsel %vm77, %v547, 0
    %678 = vmatprep.subr.bf16.mxu0 0
    %679 = vmatpush1.bf16.msra.mxu0 0
    %680 = vmatprep.subr.bf16.mxu0 0
    %681 = vmatpush1.bf16.msra.mxu0 0
    %682 = vmatprep.subr.bf16.mxu0 0
    %683 = vmatpush1.bf16.msra.mxu0 0
    %684 = vmatprep.subr.bf16.mxu0 0
    %685 = vmatpush1.bf16.msra.mxu0 0
    %686 = vmatprep.subr.bf16.mxu0 0
    %687 = vmatpush1.bf16.msra.mxu0 %v667
    %688 = vmatprep.subr.bf16.mxu0 0
    %689 = vmatpush1.bf16.msra.mxu0 %v666
    %690 = vmatprep.subr.bf16.mxu0 0
    %691 = vmatpush1.bf16.msra.mxu0 %v665
    %692 = vmatprep.subr.bf16.mxu0 0
    %693 = vmatpush1.bf16.msra.mxu0 %v664
    %694 = vmatprep.subr.bf16.mxu0 0
    %695 = vmatpush2.bf16.msra.mxu0 0
    %696 = vmatprep.subr.bf16.mxu0 0
    %697 = vmatpush2.bf16.msra.mxu0 0
    %698 = vmatprep.subr.bf16.mxu0 0
    %699 = vmatpush2.bf16.msra.mxu0 0
    %700 = vmatprep.subr.bf16.mxu0 0
    %701 = vmatpush2.bf16.msra.mxu0 0
    %702 = vmatprep.subr.bf16.mxu0 0
    %703 = vmatpush2.bf16.msra.mxu0 0
    %704 = vmatprep.subr.bf16.mxu0 0
    %705 = vmatpush2.bf16.msra.mxu0 0
    %706 = vmatprep.subr.bf16.mxu0 0
    %707 = vmatpush2.bf16.msra.mxu0 0
    %708 = vmatprep.subr.bf16.mxu0 0
    %709 = vmatpush2.bf16.msra.mxu0 0
    %710 = vmatprep.mubr.bf16.mxu0 0
    %711 = vmatmul.mubr.bf16.gmra.mxu0 %v673
    %v712 = vpop.f32.mrf.mxu0
    %v713 = vadd.f32 %v635, %v712
    %v714 = vpop.f32.mrf.mxu0
    %v715 = vpop.f32.mrf.mxu0
    %v716 = vadd.f32 %v638, %v715
    %v717 = vpop.f32.mrf.mxu0
    %718 = vmatprep.mubr.bf16.mxu0 0
    %719 = vmatmul.mubr.bf16.gmra.mxu0 %v676
    %v720 = vpop.f32.mrf.mxu0
    %v721 = vadd.f32 %v643, %v720
    %v722 = vpop.f32.mrf.mxu0
    %v723 = vpop.f32.mrf.mxu0
    %v724 = vpop.f32.mrf.mxu0
    %725 = vdwg.mxu0
    %v726 = vld [vmem:[#allocation2 + $0x28] sm:$0xff]
    %v727 = vld [vmem:[#allocation2 + $0x30] sm:$0xff]
    %v728 = vld [vmem:[#allocation2 + $0x38] sm:$0xf]
    %v729 = vpack.c.bf16 %v727, %v726
    %v730 = vpack.c.bf16 %v728, %v728
    %s731 = scalar_lea.vmem %s2, 64
    %v732 = vld [vmem:[%s731] sm:$0xf]
    %v733 = vld [vmem:[%s731 + $0x4] sm:$0xf]
    %v734 = vld [vmem:[%s731 + $0x8] sm:$0xf]
    %v735 = vld [vmem:[%s731 + $0xc] sm:$0xf]
    %v736 = vld [vmem:[%s731 + $0x10] sm:$0xf]
    %v737 = vld [vmem:[%s731 + $0x14] sm:$0xf]
    %v738 = vld [vmem:[%s731 + $0x18] sm:$0xf]
    %v739 = vld [vmem:[%s731 + $0x1c] sm:$0xf]
    %v748 = vunpack.c.l.b16 %v732
    %v749 = vunpack.c.l.b16 %v733
    %v750 = vunpack.c.l.b16 %v734
    %v751 = vunpack.c.l.b16 %v735
    %v752 = vunpack.c.l.b16 %v736
    %v753 = vunpack.c.l.b16 %v737
    %v754 = vunpack.c.l.b16 %v738
    %v755 = vunpack.c.l.b16 %v739
    %v756 = vpack.c.b16 %v749, %v748
    %v757 = vpack.c.b16 %v751, %v750
    %v758 = vpack.c.b16 %v753, %v752
    %v759 = vpack.c.b16 %v755, %v754
    %v765 = vsel %vm77, %v729, 0
    %v768 = vsel %vm77, %v730, 0
    %770 = vmatprep.subr.bf16.mxu0 0
    %771 = vmatpush1.bf16.msra.mxu0 0
    %772 = vmatprep.subr.bf16.mxu0 0
    %773 = vmatpush1.bf16.msra.mxu0 0
    %774 = vmatprep.subr.bf16.mxu0 0
    %775 = vmatpush1.bf16.msra.mxu0 0
    %776 = vmatprep.subr.bf16.mxu0 0
    %777 = vmatpush1.bf16.msra.mxu0 0
    %778 = vmatprep.subr.bf16.mxu0 0
    %779 = vmatpush1.bf16.msra.mxu0 %v759
    %780 = vmatprep.subr.bf16.mxu0 0
    %781 = vmatpush1.bf16.msra.mxu0 %v758
    %782 = vmatprep.subr.bf16.mxu0 0
    %783 = vmatpush1.bf16.msra.mxu0 %v757
    %784 = vmatprep.subr.bf16.mxu0 0
    %785 = vmatpush1.bf16.msra.mxu0 %v756
    %786 = vmatprep.subr.bf16.mxu0 0
    %787 = vmatpush2.bf16.msra.mxu0 0
    %788 = vmatprep.subr.bf16.mxu0 0
    %789 = vmatpush2.bf16.msra.mxu0 0
    %790 = vmatprep.subr.bf16.mxu0 0
    %791 = vmatpush2.bf16.msra.mxu0 0
    %792 = vmatprep.subr.bf16.mxu0 0
    %793 = vmatpush2.bf16.msra.mxu0 0
    %794 = vmatprep.subr.bf16.mxu0 0
    %795 = vmatpush2.bf16.msra.mxu0 0
    %796 = vmatprep.subr.bf16.mxu0 0
    %797 = vmatpush2.bf16.msra.mxu0 0
    %798 = vmatprep.subr.bf16.mxu0 0
    %799 = vmatpush2.bf16.msra.mxu0 0
    %800 = vmatprep.subr.bf16.mxu0 0
    %801 = vmatpush2.bf16.msra.mxu0 0
    %802 = vmatprep.mubr.bf16.mxu0 0
    %803 = vmatmul.mubr.bf16.gmra.mxu0 %v765
    %v804 = vpop.f32.mrf.mxu0
    %v805 = vadd.f32 0.0, %v804
    %v806 = vpop.f32.mrf.mxu0
    %v807 = vpop.f32.mrf.mxu0
    %v808 = vadd.f32 0.0, %v807
    %v809 = vpop.f32.mrf.mxu0
    %810 = vmatprep.mubr.bf16.mxu0 0
    %811 = vmatmul.mubr.bf16.gmra.mxu0 %v768
    %v812 = vpop.f32.mrf.mxu0
    %v813 = vadd.f32 0.0, %v812
    %v814 = vpop.f32.mrf.mxu0
    %v815 = vpop.f32.mrf.mxu0
    %v816 = vpop.f32.mrf.mxu0
    %817 = vdwg.mxu0
    %v818 = vadd.f32 %v713, %v805
    %v819 = vadd.f32 %v716, %v808
    %v820 = vadd.f32 %v721, %v813
    %v821 = vld [vmem:[#allocation2 + $0x3c] sm:$0xff]
    %v822 = vld [vmem:[#allocation2 + $0x44] sm:$0xff]
    %v823 = vld [vmem:[#allocation2 + $0x4c] sm:$0xf]
    %v824 = vpack.c.bf16 %v822, %v821
    %v825 = vpack.c.bf16 %v823, %v823
    %s826 = scalar_lea.vmem %s2, 96
    %v827 = vld [vmem:[%s826] sm:$0xf]
    %v828 = vld [vmem:[%s826 + $0x4] sm:$0xf]
    %v829 = vld [vmem:[%s826 + $0x8] sm:$0xf]
    %v830 = vld [vmem:[%s826 + $0xc] sm:$0xf]
    %v831 = vld [vmem:[%s826 + $0x10] sm:$0xf]
    %v832 = vld [vmem:[%s826 + $0x14] sm:$0xf]
    %v833 = vld [vmem:[%s826 + $0x18] sm:$0xf]
    %v834 = vld [vmem:[%s826 + $0x1c] sm:$0xf]
    %v843 = vunpack.c.l.b16 %v827
    %v844 = vunpack.c.l.b16 %v828
    %v845 = vunpack.c.l.b16 %v829
    %v846 = vunpack.c.l.b16 %v830
    %v847 = vunpack.c.l.b16 %v831
    %v848 = vunpack.c.l.b16 %v832
    %v849 = vunpack.c.l.b16 %v833
    %v850 = vunpack.c.l.b16 %v834
    %v851 = vpack.c.b16 %v844, %v843
    %v852 = vpack.c.b16 %v846, %v845
    %v853 = vpack.c.b16 %v848, %v847
    %v854 = vpack.c.b16 %v850, %v849
    %v860 = vsel %vm77, %v824, 0
    %v863 = vsel %vm77, %v825, 0
    %865 = vmatprep.subr.bf16.mxu0 0
    %866 = vmatpush1.bf16.msra.mxu0 0
    %867 = vmatprep.subr.bf16.mxu0 0
    %868 = vmatpush1.bf16.msra.mxu0 0
    %869 = vmatprep.subr.bf16.mxu0 0
    %870 = vmatpush1.bf16.msra.mxu0 0
    %871 = vmatprep.subr.bf16.mxu0 0
    %872 = vmatpush1.bf16.msra.mxu0 0
    %873 = vmatprep.subr.bf16.mxu0 0
    %874 = vmatpush1.bf16.msra.mxu0 %v854
    %875 = vmatprep.subr.bf16.mxu0 0
    %876 = vmatpush1.bf16.msra.mxu0 %v853
    %877 = vmatprep.subr.bf16.mxu0 0
    %878 = vmatpush1.bf16.msra.mxu0 %v852
    %879 = vmatprep.subr.bf16.mxu0 0
    %880 = vmatpush1.bf16.msra.mxu0 %v851
    %881 = vmatprep.subr.bf16.mxu0 0
    %882 = vmatpush2.bf16.msra.mxu0 0
    %883 = vmatprep.subr.bf16.mxu0 0
    %884 = vmatpush2.bf16.msra.mxu0 0
    %885 = vmatprep.subr.bf16.mxu0 0
    %886 = vmatpush2.bf16.msra.mxu0 0
    %887 = vmatprep.subr.bf16.mxu0 0
    %888 = vmatpush2.bf16.msra.mxu0 0
    %889 = vmatprep.subr.bf16.mxu0 0
    %890 = vmatpush2.bf16.msra.mxu0 0
    %891 = vmatprep.subr.bf16.mxu0 0
    %892 = vmatpush2.bf16.msra.mxu0 0
    %893 = vmatprep.subr.bf16.mxu0 0
    %894 = vmatpush2.bf16.msra.mxu0 0
    %895 = vmatprep.subr.bf16.mxu0 0
    %896 = vmatpush2.bf16.msra.mxu0 0
    %897 = vmatprep.mubr.bf16.mxu0 0
    %898 = vmatmul.mubr.bf16.gmra.mxu0 %v860
    %v899 = vpop.f32.mrf.mxu0
    %v900 = vadd.f32 0.0, %v899
    %v901 = vpop.f32.mrf.mxu0
    %v902 = vpop.f32.mrf.mxu0
    %v903 = vadd.f32 0.0, %v902
    %v904 = vpop.f32.mrf.mxu0
    %905 = vmatprep.mubr.bf16.mxu0 0
    %906 = vmatmul.mubr.bf16.gmra.mxu0 %v863
    %v907 = vpop.f32.mrf.mxu0
    %v908 = vadd.f32 0.0, %v907
    %v909 = vpop.f32.mrf.mxu0
    %v910 = vpop.f32.mrf.mxu0
    %v911 = vpop.f32.mrf.mxu0
    %912 = vdwg.mxu0
    %v913 = vadd.f32 %v818, %v900
    %v914 = vadd.f32 %v819, %v903
    %v915 = vadd.f32 %v820, %v908
    %v916 = vld [vmem:[#allocation2 + $0x50] sm:$0xff]
    %v917 = vld [vmem:[#allocation2 + $0x58] sm:$0xff]
    %v918 = vld [vmem:[#allocation2 + $0x60] sm:$0xf]
    %v919 = vpack.c.bf16 %v917, %v916
    %v920 = vpack.c.bf16 %v918, %v918
    %s921 = scalar_lea.vmem %s2, 128
    %v922 = vld [vmem:[%s921] sm:$0xf]
    %v923 = vld [vmem:[%s921 + $0x4] sm:$0xf]
    %v924 = vld [vmem:[%s921 + $0x8] sm:$0xf]
    %v925 = vld [vmem:[%s921 + $0xc] sm:$0xf]
    %v926 = vld [vmem:[%s921 + $0x10] sm:$0xf]
    %v927 = vld [vmem:[%s921 + $0x14] sm:$0xf]
    %v928 = vld [vmem:[%s921 + $0x18] sm:$0xf]
    %v929 = vld [vmem:[%s921 + $0x1c] sm:$0xf]
    %v938 = vunpack.c.l.b16 %v922
    %v939 = vunpack.c.l.b16 %v923
    %v940 = vunpack.c.l.b16 %v924
    %v941 = vunpack.c.l.b16 %v925
    %v942 = vunpack.c.l.b16 %v926
    %v943 = vunpack.c.l.b16 %v927
    %v944 = vunpack.c.l.b16 %v928
    %v945 = vunpack.c.l.b16 %v929
    %v946 = vpack.c.b16 %v939, %v938
    %v947 = vpack.c.b16 %v941, %v940
    %v948 = vpack.c.b16 %v943, %v942
    %v949 = vpack.c.b16 %v945, %v944
    %v955 = vsel %vm77, %v919, 0
    %v958 = vsel %vm77, %v920, 0
    %960 = vmatprep.subr.bf16.mxu0 0
    %961 = vmatpush1.bf16.msra.mxu0 0
    %962 = vmatprep.subr.bf16.mxu0 0
    %963 = vmatpush1.bf16.msra.mxu0 0
    %964 = vmatprep.subr.bf16.mxu0 0
    %965 = vmatpush1.bf16.msra.mxu0 0
    %966 = vmatprep.subr.bf16.mxu0 0
    %967 = vmatpush1.bf16.msra.mxu0 0
    %968 = vmatprep.subr.bf16.mxu0 0
    %969 = vmatpush1.bf16.msra.mxu0 %v949
    %970 = vmatprep.subr.bf16.mxu0 0
    %971 = vmatpush1.bf16.msra.mxu0 %v948
    %972 = vmatprep.subr.bf16.mxu0 0
    %973 = vmatpush1.bf16.msra.mxu0 %v947
    %974 = vmatprep.subr.bf16.mxu0 0
    %975 = vmatpush1.bf16.msra.mxu0 %v946
    %976 = vmatprep.subr.bf16.mxu0 0
    %977 = vmatpush2.bf16.msra.mxu0 0
    %978 = vmatprep.subr.bf16.mxu0 0
    %979 = vmatpush2.bf16.msra.mxu0 0
    %980 = vmatprep.subr.bf16.mxu0 0
    %981 = vmatpush2.bf16.msra.mxu0 0
    %982 = vmatprep.subr.bf16.mxu0 0
    %983 = vmatpush2.bf16.msra.mxu0 0
    %984 = vmatprep.subr.bf16.mxu0 0
    %985 = vmatpush2.bf16.msra.mxu0 0
    %986 = vmatprep.subr.bf16.mxu0 0
    %987 = vmatpush2.bf16.msra.mxu0 0
    %988 = vmatprep.subr.bf16.mxu0 0
    %989 = vmatpush2.bf16.msra.mxu0 0
    %990 = vmatprep.subr.bf16.mxu0 0
    %991 = vmatpush2.bf16.msra.mxu0 0
    %992 = vmatprep.mubr.bf16.mxu0 0
    %993 = vmatmul.mubr.bf16.gmra.mxu0 %v955
    %v994 = vpop.f32.mrf.mxu0
    %v995 = vadd.f32 0.0, %v994
    %v996 = vpop.f32.mrf.mxu0
    %v997 = vpop.f32.mrf.mxu0
    %v998 = vadd.f32 0.0, %v997
    %v999 = vpop.f32.mrf.mxu0
    %1000 = vmatprep.mubr.bf16.mxu0 0
    %1001 = vmatmul.mubr.bf16.gmra.mxu0 %v958
    %v1002 = vpop.f32.mrf.mxu0
    %v1003 = vadd.f32 0.0, %v1002
    %v1004 = vpop.f32.mrf.mxu0
    %v1005 = vpop.f32.mrf.mxu0
    %v1006 = vpop.f32.mrf.mxu0
    %1007 = vdwg.mxu0
    %v1008 = vadd.f32 %v913, %v995
    %v1009 = vadd.f32 %v914, %v998
    %v1010 = vadd.f32 %v915, %v1003
    %v1011 = vld [vmem:[#allocation2 + $0x64] sm:$0xff]
    %v1012 = vld [vmem:[#allocation2 + $0x6c] sm:$0xff]
    %v1013 = vld [vmem:[#allocation2 + $0x74] sm:$0xf]
    %v1014 = vpack.c.bf16 %v1012, %v1011
    %v1015 = vpack.c.bf16 %v1013, %v1013
    %s1016 = scalar_lea.vmem %s2, 160
    %v1017 = vld [vmem:[%s1016] sm:$0xf]
    %v1018 = vld [vmem:[%s1016 + $0x4] sm:$0xf]
    %v1019 = vld [vmem:[%s1016 + $0x8] sm:$0xf]
    %v1020 = vld [vmem:[%s1016 + $0xc] sm:$0xf]
    %v1021 = vld [vmem:[%s1016 + $0x10] sm:$0xf]
    %v1022 = vld [vmem:[%s1016 + $0x14] sm:$0xf]
    %v1023 = vld [vmem:[%s1016 + $0x18] sm:$0xf]
    %v1024 = vld [vmem:[%s1016 + $0x1c] sm:$0xf]
    %v1033 = vunpack.c.l.b16 %v1017
    %v1034 = vunpack.c.l.b16 %v1018
    %v1035 = vunpack.c.l.b16 %v1019
    %v1036 = vunpack.c.l.b16 %v1020
    %v1037 = vunpack.c.l.b16 %v1021
    %v1038 = vunpack.c.l.b16 %v1022
    %v1039 = vunpack.c.l.b16 %v1023
    %v1040 = vunpack.c.l.b16 %v1024
    %v1041 = vpack.c.b16 %v1034, %v1033
    %v1042 = vpack.c.b16 %v1036, %v1035
    %v1043 = vpack.c.b16 %v1038, %v1037
    %v1044 = vpack.c.b16 %v1040, %v1039
    %v1050 = vsel %vm77, %v1014, 0
    %v1053 = vsel %vm77, %v1015, 0
    %1055 = vmatprep.subr.bf16.mxu0 0
    %1056 = vmatpush1.bf16.msra.mxu0 0
    %1057 = vmatprep.subr.bf16.mxu0 0
    %1058 = vmatpush1.bf16.msra.mxu0 0
    %1059 = vmatprep.subr.bf16.mxu0 0
    %1060 = vmatpush1.bf16.msra.mxu0 0
    %1061 = vmatprep.subr.bf16.mxu0 0
    %1062 = vmatpush1.bf16.msra.mxu0 0
    %1063 = vmatprep.subr.bf16.mxu0 0
    %1064 = vmatpush1.bf16.msra.mxu0 %v1044
    %1065 = vmatprep.subr.bf16.mxu0 0
    %1066 = vmatpush1.bf16.msra.mxu0 %v1043
    %1067 = vmatprep.subr.bf16.mxu0 0
    %1068 = vmatpush1.bf16.msra.mxu0 %v1042
    %1069 = vmatprep.subr.bf16.mxu0 0
    %1070 = vmatpush1.bf16.msra.mxu0 %v1041
    %1071 = vmatprep.subr.bf16.mxu0 0
    %1072 = vmatpush2.bf16.msra.mxu0 0
    %1073 = vmatprep.subr.bf16.mxu0 0
    %1074 = vmatpush2.bf16.msra.mxu0 0
    %1075 = vmatprep.subr.bf16.mxu0 0
    %1076 = vmatpush2.bf16.msra.mxu0 0
    %1077 = vmatprep.subr.bf16.mxu0 0
    %1078 = vmatpush2.bf16.msra.mxu0 0
    %1079 = vmatprep.subr.bf16.mxu0 0
    %1080 = vmatpush2.bf16.msra.mxu0 0
    %1081 = vmatprep.subr.bf16.mxu0 0
    %1082 = vmatpush2.bf16.msra.mxu0 0
    %1083 = vmatprep.subr.bf16.mxu0 0
    %1084 = vmatpush2.bf16.msra.mxu0 0
    %1085 = vmatprep.subr.bf16.mxu0 0
    %1086 = vmatpush2.bf16.msra.mxu0 0
    %1087 = vmatprep.mubr.bf16.mxu0 0
    %1088 = vmatmul.mubr.bf16.gmra.mxu0 %v1050
    %v1089 = vpop.f32.mrf.mxu0
    %v1090 = vadd.f32 0.0, %v1089
    %v1091 = vpop.f32.mrf.mxu0
    %v1092 = vpop.f32.mrf.mxu0
    %v1093 = vadd.f32 0.0, %v1092
    %v1094 = vpop.f32.mrf.mxu0
    %1095 = vmatprep.mubr.bf16.mxu0 0
    %1096 = vmatmul.mubr.bf16.gmra.mxu0 %v1053
    %v1097 = vpop.f32.mrf.mxu0
    %v1098 = vadd.f32 0.0, %v1097
    %v1099 = vpop.f32.mrf.mxu0
    %v1100 = vpop.f32.mrf.mxu0
    %v1101 = vpop.f32.mrf.mxu0
    %1102 = vdwg.mxu0
    %v1103 = vadd.f32 %v1008, %v1090
    %v1104 = vadd.f32 %v1009, %v1093
    %v1105 = vadd.f32 %v1010, %v1098
    %v1106 = vld [vmem:[#allocation2 + $0x78] sm:$0xff]
    %v1107 = vld [vmem:[#allocation2 + $0x80] sm:$0xff]
    %v1108 = vld [vmem:[#allocation2 + $0x88] sm:$0xf]
    %v1109 = vpack.c.bf16 %v1107, %v1106
    %v1110 = vpack.c.bf16 %v1108, %v1108
    %s1111 = scalar_lea.vmem %s2, 192
    %v1112 = vld [vmem:[%s1111] sm:$0xf]
    %v1113 = vld [vmem:[%s1111 + $0x4] sm:$0xf]
    %v1114 = vld [vmem:[%s1111 + $0x8] sm:$0xf]
    %v1115 = vld [vmem:[%s1111 + $0xc] sm:$0xf]
    %v1116 = vld [vmem:[%s1111 + $0x10] sm:$0xf]
    %v1117 = vld [vmem:[%s1111 + $0x14] sm:$0xf]
    %v1118 = vld [vmem:[%s1111 + $0x18] sm:$0xf]
    %v1119 = vld [vmem:[%s1111 + $0x1c] sm:$0xf]
    %v1128 = vunpack.c.l.b16 %v1112
    %v1129 = vunpack.c.l.b16 %v1113
    %v1130 = vunpack.c.l.b16 %v1114
    %v1131 = vunpack.c.l.b16 %v1115
    %v1132 = vunpack.c.l.b16 %v1116
    %v1133 = vunpack.c.l.b16 %v1117
    %v1134 = vunpack.c.l.b16 %v1118
    %v1135 = vunpack.c.l.b16 %v1119
    %v1136 = vpack.c.b16 %v1129, %v1128
    %v1137 = vpack.c.b16 %v1131, %v1130
    %v1138 = vpack.c.b16 %v1133, %v1132
    %v1139 = vpack.c.b16 %v1135, %v1134
    %v1145 = vsel %vm77, %v1109, 0
    %v1148 = vsel %vm77, %v1110, 0
    %1150 = vmatprep.subr.bf16.mxu0 0
    %1151 = vmatpush1.bf16.msra.mxu0 0
    %1152 = vmatprep.subr.bf16.mxu0 0
    %1153 = vmatpush1.bf16.msra.mxu0 0
    %1154 = vmatprep.subr.bf16.mxu0 0
    %1155 = vmatpush1.bf16.msra.mxu0 0
    %1156 = vmatprep.subr.bf16.mxu0 0
    %1157 = vmatpush1.bf16.msra.mxu0 0
    %1158 = vmatprep.subr.bf16.mxu0 0
    %1159 = vmatpush1.bf16.msra.mxu0 %v1139
    %1160 = vmatprep.subr.bf16.mxu0 0
    %1161 = vmatpush1.bf16.msra.mxu0 %v1138
    %1162 = vmatprep.subr.bf16.mxu0 0
    %1163 = vmatpush1.bf16.msra.mxu0 %v1137
    %1164 = vmatprep.subr.bf16.mxu0 0
    %1165 = vmatpush1.bf16.msra.mxu0 %v1136
    %1166 = vmatprep.subr.bf16.mxu0 0
    %1167 = vmatpush2.bf16.msra.mxu0 0
    %1168 = vmatprep.subr.bf16.mxu0 0
    %1169 = vmatpush2.bf16.msra.mxu0 0
    %1170 = vmatprep.subr.bf16.mxu0 0
    %1171 = vmatpush2.bf16.msra.mxu0 0
    %1172 = vmatprep.subr.bf16.mxu0 0
    %1173 = vmatpush2.bf16.msra.mxu0 0
    %1174 = vmatprep.subr.bf16.mxu0 0
    %1175 = vmatpush2.bf16.msra.mxu0 0
    %1176 = vmatprep.subr.bf16.mxu0 0
    %1177 = vmatpush2.bf16.msra.mxu0 0
    %1178 = vmatprep.subr.bf16.mxu0 0
    %1179 = vmatpush2.bf16.msra.mxu0 0
    %1180 = vmatprep.subr.bf16.mxu0 0
    %1181 = vmatpush2.bf16.msra.mxu0 0
    %1182 = vmatprep.mubr.bf16.mxu0 0
    %1183 = vmatmul.mubr.bf16.gmra.mxu0 %v1145
    %v1184 = vpop.f32.mrf.mxu0
    %v1185 = vadd.f32 0.0, %v1184
    %v1186 = vpop.f32.mrf.mxu0
    %v1187 = vpop.f32.mrf.mxu0
    %v1188 = vadd.f32 0.0, %v1187
    %v1189 = vpop.f32.mrf.mxu0
    %1190 = vmatprep.mubr.bf16.mxu0 0
    %1191 = vmatmul.mubr.bf16.gmra.mxu0 %v1148
    %v1192 = vpop.f32.mrf.mxu0
    %v1193 = vadd.f32 0.0, %v1192
    %v1194 = vpop.f32.mrf.mxu0
    %v1195 = vpop.f32.mrf.mxu0
    %v1196 = vpop.f32.mrf.mxu0
    %1197 = vdwg.mxu0
    %v1198 = vadd.f32 %v1103, %v1185
    %v1199 = vadd.f32 %v1104, %v1188
    %v1200 = vadd.f32 %v1105, %v1193
    %v1201 = vld [vmem:[#allocation2 + $0x8c] sm:$0xff]
    %v1202 = vld [vmem:[#allocation2 + $0x94] sm:$0xff]
    %v1203 = vld [vmem:[#allocation2 + $0x9c] sm:$0xf]
    %v1204 = vpack.c.bf16 %v1202, %v1201
    %v1205 = vpack.c.bf16 %v1203, %v1203
    %s1206 = scalar_lea.vmem %s2, 224
    %v1207 = vld [vmem:[%s1206] sm:$0xf]
    %v1208 = vld [vmem:[%s1206 + $0x4] sm:$0xf]
    %v1209 = vld [vmem:[%s1206 + $0x8] sm:$0xf]
    %v1210 = vld [vmem:[%s1206 + $0xc] sm:$0xf]
    %v1211 = vld [vmem:[%s1206 + $0x10] sm:$0xf]
    %v1212 = vld [vmem:[%s1206 + $0x14] sm:$0xf]
    %v1213 = vld [vmem:[%s1206 + $0x18] sm:$0xf]
    %v1214 = vld [vmem:[%s1206 + $0x1c] sm:$0xf]
    %v1223 = vunpack.c.l.b16 %v1207
    %v1224 = vunpack.c.l.b16 %v1208
    %v1225 = vunpack.c.l.b16 %v1209
    %v1226 = vunpack.c.l.b16 %v1210
    %v1227 = vunpack.c.l.b16 %v1211
    %v1228 = vunpack.c.l.b16 %v1212
    %v1229 = vunpack.c.l.b16 %v1213
    %v1230 = vunpack.c.l.b16 %v1214
    %v1231 = vpack.c.b16 %v1224, %v1223
    %v1232 = vpack.c.b16 %v1226, %v1225
    %v1233 = vpack.c.b16 %v1228, %v1227
    %v1234 = vpack.c.b16 %v1230, %v1229
    %v1240 = vsel %vm77, %v1204, 0
    %v1243 = vsel %vm77, %v1205, 0
    %1245 = vmatprep.subr.bf16.mxu0 0
    %1246 = vmatpush1.bf16.msra.mxu0 0
    %1247 = vmatprep.subr.bf16.mxu0 0
    %1248 = vmatpush1.bf16.msra.mxu0 0
    %1249 = vmatprep.subr.bf16.mxu0 0
    %1250 = vmatpush1.bf16.msra.mxu0 0
    %1251 = vmatprep.subr.bf16.mxu0 0
    %1252 = vmatpush1.bf16.msra.mxu0 0
    %1253 = vmatprep.subr.bf16.mxu0 0
    %1254 = vmatpush1.bf16.msra.mxu0 %v1234
    %1255 = vmatprep.subr.bf16.mxu0 0
    %1256 = vmatpush1.bf16.msra.mxu0 %v1233
    %1257 = vmatprep.subr.bf16.mxu0 0
    %1258 = vmatpush1.bf16.msra.mxu0 %v1232
    %1259 = vmatprep.subr.bf16.mxu0 0
    %1260 = vmatpush1.bf16.msra.mxu0 %v1231
    %1261 = vmatprep.subr.bf16.mxu0 0
    %1262 = vmatpush2.bf16.msra.mxu0 0
    %1263 = vmatprep.subr.bf16.mxu0 0
    %1264 = vmatpush2.bf16.msra.mxu0 0
    %1265 = vmatprep.subr.bf16.mxu0 0
    %1266 = vmatpush2.bf16.msra.mxu0 0
    %1267 = vmatprep.subr.bf16.mxu0 0
    %1268 = vmatpush2.bf16.msra.mxu0 0
    %1269 = vmatprep.subr.bf16.mxu0 0
    %1270 = vmatpush2.bf16.msra.mxu0 0
    %1271 = vmatprep.subr.bf16.mxu0 0
    %1272 = vmatpush2.bf16.msra.mxu0 0
    %1273 = vmatprep.subr.bf16.mxu0 0
    %1274 = vmatpush2.bf16.msra.mxu0 0
    %1275 = vmatprep.subr.bf16.mxu0 0
    %1276 = vmatpush2.bf16.msra.mxu0 0
    %1277 = vmatprep.mubr.bf16.mxu0 0
    %1278 = vmatmul.mubr.bf16.gmra.mxu0 %v1240
    %v1279 = vpop.f32.mrf.mxu0
    %v1280 = vadd.f32 0.0, %v1279
    %v1281 = vpop.f32.mrf.mxu0
    %v1282 = vpop.f32.mrf.mxu0
    %v1283 = vadd.f32 0.0, %v1282
    %v1284 = vpop.f32.mrf.mxu0
    %1285 = vmatprep.mubr.bf16.mxu0 0
    %1286 = vmatmul.mubr.bf16.gmra.mxu0 %v1243
    %v1287 = vpop.f32.mrf.mxu0
    %v1288 = vadd.f32 0.0, %v1287
    %v1289 = vpop.f32.mrf.mxu0
    %v1290 = vpop.f32.mrf.mxu0
    %v1291 = vpop.f32.mrf.mxu0
    %1292 = vdwg.mxu0
    %v1293 = vadd.f32 %v1198, %v1280
    %v1294 = vadd.f32 %v1199, %v1283
    %v1295 = vadd.f32 %v1200, %v1288
    %v1296 = vld [vmem:[#allocation2 + $0xa0] sm:$0xff]
    %v1297 = vld [vmem:[#allocation2 + $0xa8] sm:$0xff]
    %v1298 = vld [vmem:[#allocation2 + $0xb0] sm:$0xf]
    %v1299 = vpack.c.bf16 %v1297, %v1296
    %v1300 = vpack.c.bf16 %v1298, %v1298
    %s1301 = scalar_lea.vmem %s2, 256
    %v1302 = vld [vmem:[%s1301] sm:$0xf]
    %v1303 = vld [vmem:[%s1301 + $0x4] sm:$0xf]
    %v1304 = vld [vmem:[%s1301 + $0x8] sm:$0xf]
    %v1305 = vld [vmem:[%s1301 + $0xc] sm:$0xf]
    %v1306 = vld [vmem:[%s1301 + $0x10] sm:$0xf]
    %v1307 = vld [vmem:[%s1301 + $0x14] sm:$0xf]
    %v1308 = vld [vmem:[%s1301 + $0x18] sm:$0xf]
    %v1309 = vld [vmem:[%s1301 + $0x1c] sm:$0xf]
    %v1318 = vunpack.c.l.b16 %v1302
    %v1319 = vunpack.c.l.b16 %v1303
    %v1320 = vunpack.c.l.b16 %v1304
    %v1321 = vunpack.c.l.b16 %v1305
    %v1322 = vunpack.c.l.b16 %v1306
    %v1323 = vunpack.c.l.b16 %v1307
    %v1324 = vunpack.c.l.b16 %v1308
    %v1325 = vunpack.c.l.b16 %v1309
    %v1326 = vpack.c.b16 %v1319, %v1318
    %v1327 = vpack.c.b16 %v1321, %v1320
    %v1328 = vpack.c.b16 %v1323, %v1322
    %v1329 = vpack.c.b16 %v1325, %v1324
    %v1335 = vsel %vm77, %v1299, 0
    %v1338 = vsel %vm77, %v1300, 0
    %1340 = vmatprep.subr.bf16.mxu0 0
    %1341 = vmatpush1.bf16.msra.mxu0 0
    %1342 = vmatprep.subr.bf16.mxu0 0
    %1343 = vmatpush1.bf16.msra.mxu0 0
    %1344 = vmatprep.subr.bf16.mxu0 0
    %1345 = vmatpush1.bf16.msra.mxu0 0
    %1346 = vmatprep.subr.bf16.mxu0 0
    %1347 = vmatpush1.bf16.msra.mxu0 0
    %1348 = vmatprep.subr.bf16.mxu0 0
    %1349 = vmatpush1.bf16.msra.mxu0 %v1329
    %1350 = vmatprep.subr.bf16.mxu0 0
    %1351 = vmatpush1.bf16.msra.mxu0 %v1328
    %1352 = vmatprep.subr.bf16.mxu0 0
    %1353 = vmatpush1.bf16.msra.mxu0 %v1327
    %1354 = vmatprep.subr.bf16.mxu0 0
    %1355 = vmatpush1.bf16.msra.mxu0 %v1326
    %1356 = vmatprep.subr.bf16.mxu0 0
    %1357 = vmatpush2.bf16.msra.mxu0 0
    %1358 = vmatprep.subr.bf16.mxu0 0
    %1359 = vmatpush2.bf16.msra.mxu0 0
    %1360 = vmatprep.subr.bf16.mxu0 0
    %1361 = vmatpush2.bf16.msra.mxu0 0
    %1362 = vmatprep.subr.bf16.mxu0 0
    %1363 = vmatpush2.bf16.msra.mxu0 0
    %1364 = vmatprep.subr.bf16.mxu0 0
    %1365 = vmatpush2.bf16.msra.mxu0 0
    %1366 = vmatprep.subr.bf16.mxu0 0
    %1367 = vmatpush2.bf16.msra.mxu0 0
    %1368 = vmatprep.subr.bf16.mxu0 0
    %1369 = vmatpush2.bf16.msra.mxu0 0
    %1370 = vmatprep.subr.bf16.mxu0 0
    %1371 = vmatpush2.bf16.msra.mxu0 0
    %1372 = vmatprep.mubr.bf16.mxu0 0
    %1373 = vmatmul.mubr.bf16.gmra.mxu0 %v1335
    %v1374 = vpop.f32.mrf.mxu0
    %v1375 = vadd.f32 0.0, %v1374
    %v1376 = vpop.f32.mrf.mxu0
    %v1377 = vpop.f32.mrf.mxu0
    %v1378 = vadd.f32 0.0, %v1377
    %v1379 = vpop.f32.mrf.mxu0
    %1380 = vmatprep.mubr.bf16.mxu0 0
    %1381 = vmatmul.mubr.bf16.gmra.mxu0 %v1338
    %v1382 = vpop.f32.mrf.mxu0
    %v1383 = vadd.f32 0.0, %v1382
    %v1384 = vpop.f32.mrf.mxu0
    %v1385 = vpop.f32.mrf.mxu0
    %v1386 = vpop.f32.mrf.mxu0
    %1387 = vdwg.mxu0
    %v1388 = vadd.f32 %v1293, %v1375
    %v1389 = vadd.f32 %v1294, %v1378
    %v1390 = vadd.f32 %v1295, %v1383
    %v1391 = vld [vmem:[#allocation2 + $0xb4] sm:$0xff]
    %v1392 = vld [vmem:[#allocation2 + $0xbc] sm:$0xff]
    %v1393 = vld [vmem:[#allocation2 + $0xc4] sm:$0xf]
    %v1394 = vpack.c.bf16 %v1392, %v1391
    %v1395 = vpack.c.bf16 %v1393, %v1393
    %s1396 = scalar_lea.vmem %s2, 288
    %v1397 = vld [vmem:[%s1396] sm:$0xf]
    %v1398 = vld [vmem:[%s1396 + $0x4] sm:$0xf]
    %v1399 = vld [vmem:[%s1396 + $0x8] sm:$0xf]
    %v1400 = vld [vmem:[%s1396 + $0xc] sm:$0xf]
    %v1401 = vld [vmem:[%s1396 + $0x10] sm:$0xf]
    %v1402 = vld [vmem:[%s1396 + $0x14] sm:$0xf]
    %v1403 = vld [vmem:[%s1396 + $0x18] sm:$0xf]
    %v1404 = vld [vmem:[%s1396 + $0x1c] sm:$0xf]
    %v1413 = vunpack.c.l.b16 %v1397
    %v1414 = vunpack.c.l.b16 %v1398
    %v1415 = vunpack.c.l.b16 %v1399
    %v1416 = vunpack.c.l.b16 %v1400
    %v1417 = vunpack.c.l.b16 %v1401
    %v1418 = vunpack.c.l.b16 %v1402
    %v1419 = vunpack.c.l.b16 %v1403
    %v1420 = vunpack.c.l.b16 %v1404
    %v1421 = vpack.c.b16 %v1414, %v1413
    %v1422 = vpack.c.b16 %v1416, %v1415
    %v1423 = vpack.c.b16 %v1418, %v1417
    %v1424 = vpack.c.b16 %v1420, %v1419
    %v1430 = vsel %vm77, %v1394, 0
    %v1433 = vsel %vm77, %v1395, 0
    %1435 = vmatprep.subr.bf16.mxu0 0
    %1436 = vmatpush1.bf16.msra.mxu0 0
    %1437 = vmatprep.subr.bf16.mxu0 0
    %1438 = vmatpush1.bf16.msra.mxu0 0
    %1439 = vmatprep.subr.bf16.mxu0 0
    %1440 = vmatpush1.bf16.msra.mxu0 0
    %1441 = vmatprep.subr.bf16.mxu0 0
    %1442 = vmatpush1.bf16.msra.mxu0 0
    %1443 = vmatprep.subr.bf16.mxu0 0
    %1444 = vmatpush1.bf16.msra.mxu0 %v1424
    %1445 = vmatprep.subr.bf16.mxu0 0
    %1446 = vmatpush1.bf16.msra.mxu0 %v1423
    %1447 = vmatprep.subr.bf16.mxu0 0
    %1448 = vmatpush1.bf16.msra.mxu0 %v1422
    %1449 = vmatprep.subr.bf16.mxu0 0
    %1450 = vmatpush1.bf16.msra.mxu0 %v1421
    %1451 = vmatprep.subr.bf16.mxu0 0
    %1452 = vmatpush2.bf16.msra.mxu0 0
    %1453 = vmatprep.subr.bf16.mxu0 0
    %1454 = vmatpush2.bf16.msra.mxu0 0
    %1455 = vmatprep.subr.bf16.mxu0 0
    %1456 = vmatpush2.bf16.msra.mxu0 0
    %1457 = vmatprep.subr.bf16.mxu0 0
    %1458 = vmatpush2.bf16.msra.mxu0 0
    %1459 = vmatprep.subr.bf16.mxu0 0
    %1460 = vmatpush2.bf16.msra.mxu0 0
    %1461 = vmatprep.subr.bf16.mxu0 0
    %1462 = vmatpush2.bf16.msra.mxu0 0
    %1463 = vmatprep.subr.bf16.mxu0 0
    %1464 = vmatpush2.bf16.msra.mxu0 0
    %1465 = vmatprep.subr.bf16.mxu0 0
    %1466 = vmatpush2.bf16.msra.mxu0 0
    %1467 = vmatprep.mubr.bf16.mxu0 0
    %1468 = vmatmul.mubr.bf16.gmra.mxu0 %v1430
    %v1469 = vpop.f32.mrf.mxu0
    %v1470 = vadd.f32 0.0, %v1469
    %v1471 = vpop.f32.mrf.mxu0
    %v1472 = vpop.f32.mrf.mxu0
    %v1473 = vadd.f32 0.0, %v1472
    %v1474 = vpop.f32.mrf.mxu0
    %1475 = vmatprep.mubr.bf16.mxu0 0
    %1476 = vmatmul.mubr.bf16.gmra.mxu0 %v1433
    %v1477 = vpop.f32.mrf.mxu0
    %v1478 = vadd.f32 0.0, %v1477
    %v1479 = vpop.f32.mrf.mxu0
    %v1480 = vpop.f32.mrf.mxu0
    %v1481 = vpop.f32.mrf.mxu0
    %1482 = vdwg.mxu0
    %v1483 = vadd.f32 %v1388, %v1470
    %v1484 = vadd.f32 %v1389, %v1473
    %v1485 = vadd.f32 %v1390, %v1478
    %v1486 = vld [vmem:[#allocation2 + $0xc8] sm:$0xff]
    %v1487 = vld [vmem:[#allocation2 + $0xd0] sm:$0xff]
    %v1488 = vld [vmem:[#allocation2 + $0xd8] sm:$0xf]
    %v1489 = vpack.c.bf16 %v1487, %v1486
    %v1490 = vpack.c.bf16 %v1488, %v1488
    %s1491 = scalar_lea.vmem %s2, 320
    %v1492 = vld [vmem:[%s1491] sm:$0xf]
    %v1493 = vld [vmem:[%s1491 + $0x4] sm:$0xf]
    %v1494 = vld [vmem:[%s1491 + $0x8] sm:$0xf]
    %v1495 = vld [vmem:[%s1491 + $0xc] sm:$0xf]
    %v1496 = vld [vmem:[%s1491 + $0x10] sm:$0xf]
    %v1497 = vld [vmem:[%s1491 + $0x14] sm:$0xf]
    %v1498 = vld [vmem:[%s1491 + $0x18] sm:$0xf]
    %v1499 = vld [vmem:[%s1491 + $0x1c] sm:$0xf]
    %v1508 = vunpack.c.l.b16 %v1492
    %v1509 = vunpack.c.l.b16 %v1493
    %v1510 = vunpack.c.l.b16 %v1494
    %v1511 = vunpack.c.l.b16 %v1495
    %v1512 = vunpack.c.l.b16 %v1496
    %v1513 = vunpack.c.l.b16 %v1497
    %v1514 = vunpack.c.l.b16 %v1498
    %v1515 = vunpack.c.l.b16 %v1499
    %v1516 = vpack.c.b16 %v1509, %v1508
    %v1517 = vpack.c.b16 %v1511, %v1510
    %v1518 = vpack.c.b16 %v1513, %v1512
    %v1519 = vpack.c.b16 %v1515, %v1514
    %v1525 = vsel %vm77, %v1489, 0
    %v1528 = vsel %vm77, %v1490, 0
    %1530 = vmatprep.subr.bf16.mxu0 0
    %1531 = vmatpush1.bf16.msra.mxu0 0
    %1532 = vmatprep.subr.bf16.mxu0 0
    %1533 = vmatpush1.bf16.msra.mxu0 0
    %1534 = vmatprep.subr.bf16.mxu0 0
    %1535 = vmatpush1.bf16.msra.mxu0 0
    %1536 = vmatprep.subr.bf16.mxu0 0
    %1537 = vmatpush1.bf16.msra.mxu0 0
    %1538 = vmatprep.subr.bf16.mxu0 0
    %1539 = vmatpush1.bf16.msra.mxu0 %v1519
    %1540 = vmatprep.subr.bf16.mxu0 0
    %1541 = vmatpush1.bf16.msra.mxu0 %v1518
    %1542 = vmatprep.subr.bf16.mxu0 0
    %1543 = vmatpush1.bf16.msra.mxu0 %v1517
    %1544 = vmatprep.subr.bf16.mxu0 0
    %1545 = vmatpush1.bf16.msra.mxu0 %v1516
    %1546 = vmatprep.subr.bf16.mxu0 0
    %1547 = vmatpush2.bf16.msra.mxu0 0
    %1548 = vmatprep.subr.bf16.mxu0 0
    %1549 = vmatpush2.bf16.msra.mxu0 0
    %1550 = vmatprep.subr.bf16.mxu0 0
    %1551 = vmatpush2.bf16.msra.mxu0 0
    %1552 = vmatprep.subr.bf16.mxu0 0
    %1553 = vmatpush2.bf16.msra.mxu0 0
    %1554 = vmatprep.subr.bf16.mxu0 0
    %1555 = vmatpush2.bf16.msra.mxu0 0
    %1556 = vmatprep.subr.bf16.mxu0 0
    %1557 = vmatpush2.bf16.msra.mxu0 0
    %1558 = vmatprep.subr.bf16.mxu0 0
    %1559 = vmatpush2.bf16.msra.mxu0 0
    %1560 = vmatprep.subr.bf16.mxu0 0
    %1561 = vmatpush2.bf16.msra.mxu0 0
    %1562 = vmatprep.mubr.bf16.mxu0 0
    %1563 = vmatmul.mubr.bf16.gmra.mxu0 %v1525
    %v1564 = vpop.f32.mrf.mxu0
    %v1565 = vadd.f32 0.0, %v1564
    %v1566 = vpop.f32.mrf.mxu0
    %v1567 = vpop.f32.mrf.mxu0
    %v1568 = vadd.f32 0.0, %v1567
    %v1569 = vpop.f32.mrf.mxu0
    %1570 = vmatprep.mubr.bf16.mxu0 0
    %1571 = vmatmul.mubr.bf16.gmra.mxu0 %v1528
    %v1572 = vpop.f32.mrf.mxu0
    %v1573 = vadd.f32 0.0, %v1572
    %v1574 = vpop.f32.mrf.mxu0
    %v1575 = vpop.f32.mrf.mxu0
    %v1576 = vpop.f32.mrf.mxu0
    %1577 = vdwg.mxu0
    %v1578 = vadd.f32 %v1483, %v1565
    %v1579 = vadd.f32 %v1484, %v1568
    %v1580 = vadd.f32 %v1485, %v1573
    %v1581 = vld [vmem:[#allocation2 + $0xdc] sm:$0xff]
    %v1582 = vld [vmem:[#allocation2 + $0xe4] sm:$0xff]
    %v1583 = vld [vmem:[#allocation2 + $0xec] sm:$0xf]
    %v1584 = vpack.c.bf16 %v1582, %v1581
    %v1585 = vpack.c.bf16 %v1583, %v1583
    %s1586 = scalar_lea.vmem %s2, 352
    %v1587 = vld [vmem:[%s1586] sm:$0xf]
    %v1588 = vld [vmem:[%s1586 + $0x4] sm:$0xf]
    %v1589 = vld [vmem:[%s1586 + $0x8] sm:$0xf]
    %v1590 = vld [vmem:[%s1586 + $0xc] sm:$0xf]
    %v1591 = vld [vmem:[%s1586 + $0x10] sm:$0xf]
    %v1592 = vld [vmem:[%s1586 + $0x14] sm:$0xf]
    %v1593 = vld [vmem:[%s1586 + $0x18] sm:$0xf]
    %v1594 = vld [vmem:[%s1586 + $0x1c] sm:$0xf]
    %v1603 = vunpack.c.l.b16 %v1587
    %v1604 = vunpack.c.l.b16 %v1588
    %v1605 = vunpack.c.l.b16 %v1589
    %v1606 = vunpack.c.l.b16 %v1590
    %v1607 = vunpack.c.l.b16 %v1591
    %v1608 = vunpack.c.l.b16 %v1592
    %v1609 = vunpack.c.l.b16 %v1593
    %v1610 = vunpack.c.l.b16 %v1594
    %v1611 = vpack.c.b16 %v1604, %v1603
    %v1612 = vpack.c.b16 %v1606, %v1605
    %v1613 = vpack.c.b16 %v1608, %v1607
    %v1614 = vpack.c.b16 %v1610, %v1609
    %v1620 = vsel %vm77, %v1584, 0
    %v1623 = vsel %vm77, %v1585, 0
    %1625 = vmatprep.subr.bf16.mxu0 0
    %1626 = vmatpush1.bf16.msra.mxu0 0
    %1627 = vmatprep.subr.bf16.mxu0 0
    %1628 = vmatpush1.bf16.msra.mxu0 0
    %1629 = vmatprep.subr.bf16.mxu0 0
    %1630 = vmatpush1.bf16.msra.mxu0 0
    %1631 = vmatprep.subr.bf16.mxu0 0
    %1632 = vmatpush1.bf16.msra.mxu0 0
    %1633 = vmatprep.subr.bf16.mxu0 0
    %1634 = vmatpush1.bf16.msra.mxu0 %v1614
    %1635 = vmatprep.subr.bf16.mxu0 0
    %1636 = vmatpush1.bf16.msra.mxu0 %v1613
    %1637 = vmatprep.subr.bf16.mxu0 0
    %1638 = vmatpush1.bf16.msra.mxu0 %v1612
    %1639 = vmatprep.subr.bf16.mxu0 0
    %1640 = vmatpush1.bf16.msra.mxu0 %v1611
    %1641 = vmatprep.subr.bf16.mxu0 0
    %1642 = vmatpush2.bf16.msra.mxu0 0
    %1643 = vmatprep.subr.bf16.mxu0 0
    %1644 = vmatpush2.bf16.msra.mxu0 0
    %1645 = vmatprep.subr.bf16.mxu0 0
    %1646 = vmatpush2.bf16.msra.mxu0 0
    %1647 = vmatprep.subr.bf16.mxu0 0
    %1648 = vmatpush2.bf16.msra.mxu0 0
    %1649 = vmatprep.subr.bf16.mxu0 0
    %1650 = vmatpush2.bf16.msra.mxu0 0
    %1651 = vmatprep.subr.bf16.mxu0 0
    %1652 = vmatpush2.bf16.msra.mxu0 0
    %1653 = vmatprep.subr.bf16.mxu0 0
    %1654 = vmatpush2.bf16.msra.mxu0 0
    %1655 = vmatprep.subr.bf16.mxu0 0
    %1656 = vmatpush2.bf16.msra.mxu0 0
    %1657 = vmatprep.mubr.bf16.mxu0 0
    %1658 = vmatmul.mubr.bf16.gmra.mxu0 %v1620
    %v1659 = vpop.f32.mrf.mxu0
    %v1660 = vadd.f32 0.0, %v1659
    %v1661 = vpop.f32.mrf.mxu0
    %v1662 = vpop.f32.mrf.mxu0
    %v1663 = vadd.f32 0.0, %v1662
    %v1664 = vpop.f32.mrf.mxu0
    %1665 = vmatprep.mubr.bf16.mxu0 0
    %1666 = vmatmul.mubr.bf16.gmra.mxu0 %v1623
    %v1667 = vpop.f32.mrf.mxu0
    %v1668 = vadd.f32 0.0, %v1667
    %v1669 = vpop.f32.mrf.mxu0
    %v1670 = vpop.f32.mrf.mxu0
    %v1671 = vpop.f32.mrf.mxu0
    %1672 = vdwg.mxu0
    %v1673 = vadd.f32 %v1578, %v1660
    %v1674 = vadd.f32 %v1579, %v1663
    %v1675 = vadd.f32 %v1580, %v1668
    %v1676 = vld [vmem:[#allocation2 + $0xf0] sm:$0xff]
    %v1677 = vld [vmem:[#allocation2 + $0xf8] sm:$0xff]
    %v1678 = vld [vmem:[#allocation2 + $0x100] sm:$0xf]
    %v1679 = vpack.c.bf16 %v1677, %v1676
    %v1680 = vpack.c.bf16 %v1678, %v1678
    %s1681 = scalar_lea.vmem %s2, 384
    %v1682 = vld [vmem:[%s1681] sm:$0xf]
    %v1683 = vld [vmem:[%s1681 + $0x4] sm:$0xf]
    %v1684 = vld [vmem:[%s1681 + $0x8] sm:$0xf]
    %v1685 = vld [vmem:[%s1681 + $0xc] sm:$0xf]
    %v1686 = vld [vmem:[%s1681 + $0x10] sm:$0xf]
    %v1687 = vld [vmem:[%s1681 + $0x14] sm:$0xf]
    %v1688 = vld [vmem:[%s1681 + $0x18] sm:$0xf]
    %v1689 = vld [vmem:[%s1681 + $0x1c] sm:$0xf]
    %v1698 = vunpack.c.l.b16 %v1682
    %v1699 = vunpack.c.l.b16 %v1683
    %v1700 = vunpack.c.l.b16 %v1684
    %v1701 = vunpack.c.l.b16 %v1685
    %v1702 = vunpack.c.l.b16 %v1686
    %v1703 = vunpack.c.l.b16 %v1687
    %v1704 = vunpack.c.l.b16 %v1688
    %v1705 = vunpack.c.l.b16 %v1689
    %v1706 = vpack.c.b16 %v1699, %v1698
    %v1707 = vpack.c.b16 %v1701, %v1700
    %v1708 = vpack.c.b16 %v1703, %v1702
    %v1709 = vpack.c.b16 %v1705, %v1704
    %v1715 = vsel %vm77, %v1679, 0
    %v1718 = vsel %vm77, %v1680, 0
    %1720 = vmatprep.subr.bf16.mxu0 0
    %1721 = vmatpush1.bf16.msra.mxu0 0
    %1722 = vmatprep.subr.bf16.mxu0 0
    %1723 = vmatpush1.bf16.msra.mxu0 0
    %1724 = vmatprep.subr.bf16.mxu0 0
    %1725 = vmatpush1.bf16.msra.mxu0 0
    %1726 = vmatprep.subr.bf16.mxu0 0
    %1727 = vmatpush1.bf16.msra.mxu0 0
    %1728 = vmatprep.subr.bf16.mxu0 0
    %1729 = vmatpush1.bf16.msra.mxu0 %v1709
    %1730 = vmatprep.subr.bf16.mxu0 0
    %1731 = vmatpush1.bf16.msra.mxu0 %v1708
    %1732 = vmatprep.subr.bf16.mxu0 0
    %1733 = vmatpush1.bf16.msra.mxu0 %v1707
    %1734 = vmatprep.subr.bf16.mxu0 0
    %1735 = vmatpush1.bf16.msra.mxu0 %v1706
    %1736 = vmatprep.subr.bf16.mxu0 0
    %1737 = vmatpush2.bf16.msra.mxu0 0
    %1738 = vmatprep.subr.bf16.mxu0 0
    %1739 = vmatpush2.bf16.msra.mxu0 0
    %1740 = vmatprep.subr.bf16.mxu0 0
    %1741 = vmatpush2.bf16.msra.mxu0 0
    %1742 = vmatprep.subr.bf16.mxu0 0
    %1743 = vmatpush2.bf16.msra.mxu0 0
    %1744 = vmatprep.subr.bf16.mxu0 0
    %1745 = vmatpush2.bf16.msra.mxu0 0
    %1746 = vmatprep.subr.bf16.mxu0 0
    %1747 = vmatpush2.bf16.msra.mxu0 0
    %1748 = vmatprep.subr.bf16.mxu0 0
    %1749 = vmatpush2.bf16.msra.mxu0 0
    %1750 = vmatprep.subr.bf16.mxu0 0
    %1751 = vmatpush2.bf16.msra.mxu0 0
    %1752 = vmatprep.mubr.bf16.mxu0 0
    %1753 = vmatmul.mubr.bf16.gmra.mxu0 %v1715
    %v1754 = vpop.f32.mrf.mxu0
    %v1755 = vadd.f32 0.0, %v1754
    %v1756 = vpop.f32.mrf.mxu0
    %v1757 = vpop.f32.mrf.mxu0
    %v1758 = vadd.f32 0.0, %v1757
    %v1759 = vpop.f32.mrf.mxu0
    %1760 = vmatprep.mubr.bf16.mxu0 0
    %1761 = vmatmul.mubr.bf16.gmra.mxu0 %v1718
    %v1762 = vpop.f32.mrf.mxu0
    %v1763 = vadd.f32 0.0, %v1762
    %v1764 = vpop.f32.mrf.mxu0
    %v1765 = vpop.f32.mrf.mxu0
    %v1766 = vpop.f32.mrf.mxu0
    %1767 = vdwg.mxu0
    %v1768 = vadd.f32 %v1673, %v1755
    %v1769 = vadd.f32 %v1674, %v1758
    %v1770 = vadd.f32 %v1675, %v1763
    %v1771 = vld [vmem:[#allocation2 + $0x104] sm:$0xff]
    %v1772 = vld [vmem:[#allocation2 + $0x10c] sm:$0xff]
    %v1773 = vld [vmem:[#allocation2 + $0x114] sm:$0xf]
    %v1774 = vpack.c.bf16 %v1772, %v1771
    %v1775 = vpack.c.bf16 %v1773, %v1773
    %s1776 = scalar_lea.vmem %s2, 416
    %v1777 = vld [vmem:[%s1776] sm:$0xf]
    %v1778 = vld [vmem:[%s1776 + $0x4] sm:$0xf]
    %v1779 = vld [vmem:[%s1776 + $0x8] sm:$0xf]
    %v1780 = vld [vmem:[%s1776 + $0xc] sm:$0xf]
    %v1781 = vld [vmem:[%s1776 + $0x10] sm:$0xf]
    %v1782 = vld [vmem:[%s1776 + $0x14] sm:$0xf]
    %v1783 = vld [vmem:[%s1776 + $0x18] sm:$0xf]
    %v1784 = vld [vmem:[%s1776 + $0x1c] sm:$0xf]
    %v1793 = vunpack.c.l.b16 %v1777
    %v1794 = vunpack.c.l.b16 %v1778
    %v1795 = vunpack.c.l.b16 %v1779
    %v1796 = vunpack.c.l.b16 %v1780
    %v1797 = vunpack.c.l.b16 %v1781
    %v1798 = vunpack.c.l.b16 %v1782
    %v1799 = vunpack.c.l.b16 %v1783
    %v1800 = vunpack.c.l.b16 %v1784
    %v1801 = vpack.c.b16 %v1794, %v1793
    %v1802 = vpack.c.b16 %v1796, %v1795
    %v1803 = vpack.c.b16 %v1798, %v1797
    %v1804 = vpack.c.b16 %v1800, %v1799
    %v1810 = vsel %vm77, %v1774, 0
    %v1813 = vsel %vm77, %v1775, 0
    %1815 = vmatprep.subr.bf16.mxu0 0
    %1816 = vmatpush1.bf16.msra.mxu0 0
    %1817 = vmatprep.subr.bf16.mxu0 0
    %1818 = vmatpush1.bf16.msra.mxu0 0
    %1819 = vmatprep.subr.bf16.mxu0 0
    %1820 = vmatpush1.bf16.msra.mxu0 0
    %1821 = vmatprep.subr.bf16.mxu0 0
    %1822 = vmatpush1.bf16.msra.mxu0 0
    %1823 = vmatprep.subr.bf16.mxu0 0
    %1824 = vmatpush1.bf16.msra.mxu0 %v1804
    %1825 = vmatprep.subr.bf16.mxu0 0
    %1826 = vmatpush1.bf16.msra.mxu0 %v1803
    %1827 = vmatprep.subr.bf16.mxu0 0
    %1828 = vmatpush1.bf16.msra.mxu0 %v1802
    %1829 = vmatprep.subr.bf16.mxu0 0
    %1830 = vmatpush1.bf16.msra.mxu0 %v1801
    %1831 = vmatprep.subr.bf16.mxu0 0
    %1832 = vmatpush2.bf16.msra.mxu0 0
    %1833 = vmatprep.subr.bf16.mxu0 0
    %1834 = vmatpush2.bf16.msra.mxu0 0
    %1835 = vmatprep.subr.bf16.mxu0 0
    %1836 = vmatpush2.bf16.msra.mxu0 0
    %1837 = vmatprep.subr.bf16.mxu0 0
    %1838 = vmatpush2.bf16.msra.mxu0 0
    %1839 = vmatprep.subr.bf16.mxu0 0
    %1840 = vmatpush2.bf16.msra.mxu0 0
    %1841 = vmatprep.subr.bf16.mxu0 0
    %1842 = vmatpush2.bf16.msra.mxu0 0
    %1843 = vmatprep.subr.bf16.mxu0 0
    %1844 = vmatpush2.bf16.msra.mxu0 0
    %1845 = vmatprep.subr.bf16.mxu0 0
    %1846 = vmatpush2.bf16.msra.mxu0 0
    %1847 = vmatprep.mubr.bf16.mxu0 0
    %1848 = vmatmul.mubr.bf16.gmra.mxu0 %v1810
    %v1849 = vpop.f32.mrf.mxu0
    %v1850 = vadd.f32 0.0, %v1849
    %v1851 = vpop.f32.mrf.mxu0
    %v1852 = vpop.f32.mrf.mxu0
    %v1853 = vadd.f32 0.0, %v1852
    %v1854 = vpop.f32.mrf.mxu0
    %1855 = vmatprep.mubr.bf16.mxu0 0
    %1856 = vmatmul.mubr.bf16.gmra.mxu0 %v1813
    %v1857 = vpop.f32.mrf.mxu0
    %v1858 = vadd.f32 0.0, %v1857
    %v1859 = vpop.f32.mrf.mxu0
    %v1860 = vpop.f32.mrf.mxu0
    %v1861 = vpop.f32.mrf.mxu0
    %1862 = vdwg.mxu0
    %v1863 = vadd.f32 %v1768, %v1850
    %v1864 = vadd.f32 %v1769, %v1853
    %v1865 = vadd.f32 %v1770, %v1858
    %v1866 = vld [vmem:[#allocation2 + $0x118] sm:$0xff]
    %v1867 = vld [vmem:[#allocation2 + $0x120] sm:$0xff]
    %v1868 = vld [vmem:[#allocation2 + $0x128] sm:$0xf]
    %v1869 = vpack.c.bf16 %v1867, %v1866
    %v1870 = vpack.c.bf16 %v1868, %v1868
    %s1871 = scalar_lea.vmem %s2, 448
    %v1872 = vld [vmem:[%s1871] sm:$0xf]
    %v1873 = vld [vmem:[%s1871 + $0x4] sm:$0xf]
    %v1874 = vld [vmem:[%s1871 + $0x8] sm:$0xf]
    %v1875 = vld [vmem:[%s1871 + $0xc] sm:$0xf]
    %v1876 = vld [vmem:[%s1871 + $0x10] sm:$0xf]
    %v1877 = vld [vmem:[%s1871 + $0x14] sm:$0xf]
    %v1878 = vld [vmem:[%s1871 + $0x18] sm:$0xf]
    %v1879 = vld [vmem:[%s1871 + $0x1c] sm:$0xf]
    %v1888 = vunpack.c.l.b16 %v1872
    %v1889 = vunpack.c.l.b16 %v1873
    %v1890 = vunpack.c.l.b16 %v1874
    %v1891 = vunpack.c.l.b16 %v1875
    %v1892 = vunpack.c.l.b16 %v1876
    %v1893 = vunpack.c.l.b16 %v1877
    %v1894 = vunpack.c.l.b16 %v1878
    %v1895 = vunpack.c.l.b16 %v1879
    %v1896 = vpack.c.b16 %v1889, %v1888
    %v1897 = vpack.c.b16 %v1891, %v1890
    %v1898 = vpack.c.b16 %v1893, %v1892
    %v1899 = vpack.c.b16 %v1895, %v1894
    %v1905 = vsel %vm77, %v1869, 0
    %v1908 = vsel %vm77, %v1870, 0
    %1910 = vmatprep.subr.bf16.mxu0 0
    %1911 = vmatpush1.bf16.msra.mxu0 0
    %1912 = vmatprep.subr.bf16.mxu0 0
    %1913 = vmatpush1.bf16.msra.mxu0 0
    %1914 = vmatprep.subr.bf16.mxu0 0
    %1915 = vmatpush1.bf16.msra.mxu0 0
    %1916 = vmatprep.subr.bf16.mxu0 0
    %1917 = vmatpush1.bf16.msra.mxu0 0
    %1918 = vmatprep.subr.bf16.mxu0 0
    %1919 = vmatpush1.bf16.msra.mxu0 %v1899
    %1920 = vmatprep.subr.bf16.mxu0 0
    %1921 = vmatpush1.bf16.msra.mxu0 %v1898
    %1922 = vmatprep.subr.bf16.mxu0 0
    %1923 = vmatpush1.bf16.msra.mxu0 %v1897
    %1924 = vmatprep.subr.bf16.mxu0 0
    %1925 = vmatpush1.bf16.msra.mxu0 %v1896
    %1926 = vmatprep.subr.bf16.mxu0 0
    %1927 = vmatpush2.bf16.msra.mxu0 0
    %1928 = vmatprep.subr.bf16.mxu0 0
    %1929 = vmatpush2.bf16.msra.mxu0 0
    %1930 = vmatprep.subr.bf16.mxu0 0
    %1931 = vmatpush2.bf16.msra.mxu0 0
    %1932 = vmatprep.subr.bf16.mxu0 0
    %1933 = vmatpush2.bf16.msra.mxu0 0
    %1934 = vmatprep.subr.bf16.mxu0 0
    %1935 = vmatpush2.bf16.msra.mxu0 0
    %1936 = vmatprep.subr.bf16.mxu0 0
    %1937 = vmatpush2.bf16.msra.mxu0 0
    %1938 = vmatprep.subr.bf16.mxu0 0
    %1939 = vmatpush2.bf16.msra.mxu0 0
    %1940 = vmatprep.subr.bf16.mxu0 0
    %1941 = vmatpush2.bf16.msra.mxu0 0
    %1942 = vmatprep.mubr.bf16.mxu0 0
    %1943 = vmatmul.mubr.bf16.gmra.mxu0 %v1905
    %v1944 = vpop.f32.mrf.mxu0
    %v1945 = vadd.f32 0.0, %v1944
    %v1946 = vpop.f32.mrf.mxu0
    %v1947 = vpop.f32.mrf.mxu0
    %v1948 = vadd.f32 0.0, %v1947
    %v1949 = vpop.f32.mrf.mxu0
    %1950 = vmatprep.mubr.bf16.mxu0 0
    %1951 = vmatmul.mubr.bf16.gmra.mxu0 %v1908
    %v1952 = vpop.f32.mrf.mxu0
    %v1953 = vadd.f32 0.0, %v1952
    %v1954 = vpop.f32.mrf.mxu0
    %v1955 = vpop.f32.mrf.mxu0
    %v1956 = vpop.f32.mrf.mxu0
    %1957 = vdwg.mxu0
    %v1958 = vadd.f32 %v1863, %v1945
    %v1959 = vadd.f32 %v1864, %v1948
    %v1960 = vadd.f32 %v1865, %v1953
    %v1961 = vld [vmem:[#allocation2 + $0x12c] sm:$0xff]
    %v1962 = vld [vmem:[#allocation2 + $0x134] sm:$0xff]
    %v1963 = vld [vmem:[#allocation2 + $0x13c] sm:$0xf]
    %v1964 = vpack.c.bf16 %v1962, %v1961
    %v1965 = vpack.c.bf16 %v1963, %v1963
    %s1966 = scalar_lea.vmem %s2, 480
    %v1967 = vld [vmem:[%s1966] sm:$0xf]
    %v1968 = vld [vmem:[%s1966 + $0x4] sm:$0xf]
    %v1969 = vld [vmem:[%s1966 + $0x8] sm:$0xf]
    %v1970 = vld [vmem:[%s1966 + $0xc] sm:$0xf]
    %v1971 = vld [vmem:[%s1966 + $0x10] sm:$0xf]
    %v1972 = vld [vmem:[%s1966 + $0x14] sm:$0xf]
    %v1973 = vld [vmem:[%s1966 + $0x18] sm:$0xf]
    %v1974 = vld [vmem:[%s1966 + $0x1c] sm:$0xf]
    %v1983 = vunpack.c.l.b16 %v1967
    %v1984 = vunpack.c.l.b16 %v1968
    %v1985 = vunpack.c.l.b16 %v1969
    %v1986 = vunpack.c.l.b16 %v1970
    %v1987 = vunpack.c.l.b16 %v1971
    %v1988 = vunpack.c.l.b16 %v1972
    %v1989 = vunpack.c.l.b16 %v1973
    %v1990 = vunpack.c.l.b16 %v1974
    %v1991 = vpack.c.b16 %v1984, %v1983
    %v1992 = vpack.c.b16 %v1986, %v1985
    %v1993 = vpack.c.b16 %v1988, %v1987
    %v1994 = vpack.c.b16 %v1990, %v1989
    %v2000 = vsel %vm77, %v1964, 0
    %v2003 = vsel %vm77, %v1965, 0
    %2005 = vmatprep.subr.bf16.mxu0 0
    %2006 = vmatpush1.bf16.msra.mxu0 0
    %2007 = vmatprep.subr.bf16.mxu0 0
    %2008 = vmatpush1.bf16.msra.mxu0 0
    %2009 = vmatprep.subr.bf16.mxu0 0
    %2010 = vmatpush1.bf16.msra.mxu0 0
    %2011 = vmatprep.subr.bf16.mxu0 0
    %2012 = vmatpush1.bf16.msra.mxu0 0
    %2013 = vmatprep.subr.bf16.mxu0 0
    %2014 = vmatpush1.bf16.msra.mxu0 %v1994
    %2015 = vmatprep.subr.bf16.mxu0 0
    %2016 = vmatpush1.bf16.msra.mxu0 %v1993
    %2017 = vmatprep.subr.bf16.mxu0 0
    %2018 = vmatpush1.bf16.msra.mxu0 %v1992
    %2019 = vmatprep.subr.bf16.mxu0 0
    %2020 = vmatpush1.bf16.msra.mxu0 %v1991
    %2021 = vmatprep.subr.bf16.mxu0 0
    %2022 = vmatpush2.bf16.msra.mxu0 0
    %2023 = vmatprep.subr.bf16.mxu0 0
    %2024 = vmatpush2.bf16.msra.mxu0 0
    %2025 = vmatprep.subr.bf16.mxu0 0
    %2026 = vmatpush2.bf16.msra.mxu0 0
    %2027 = vmatprep.subr.bf16.mxu0 0
    %2028 = vmatpush2.bf16.msra.mxu0 0
    %2029 = vmatprep.subr.bf16.mxu0 0
    %2030 = vmatpush2.bf16.msra.mxu0 0
    %2031 = vmatprep.subr.bf16.mxu0 0
    %2032 = vmatpush2.bf16.msra.mxu0 0
    %2033 = vmatprep.subr.bf16.mxu0 0
    %2034 = vmatpush2.bf16.msra.mxu0 0
    %2035 = vmatprep.subr.bf16.mxu0 0
    %2036 = vmatpush2.bf16.msra.mxu0 0
    %2037 = vmatprep.mubr.bf16.mxu0 0
    %2038 = vmatmul.mubr.bf16.gmra.mxu0 %v2000
    %v2039 = vpop.f32.mrf.mxu0
    %v2040 = vadd.f32 0.0, %v2039
    %v2041 = vpop.f32.mrf.mxu0
    %v2042 = vpop.f32.mrf.mxu0
    %v2043 = vadd.f32 0.0, %v2042
    %v2044 = vpop.f32.mrf.mxu0
    %2045 = vmatprep.mubr.bf16.mxu0 0
    %2046 = vmatmul.mubr.bf16.gmra.mxu0 %v2003
    %v2047 = vpop.f32.mrf.mxu0
    %v2048 = vadd.f32 0.0, %v2047
    %v2049 = vpop.f32.mrf.mxu0
    %v2050 = vpop.f32.mrf.mxu0
    %v2051 = vpop.f32.mrf.mxu0
    %2052 = vdwg.mxu0
    %v2053 = vadd.f32 %v1958, %v2040
    %v2054 = vadd.f32 %v1959, %v2043
    %v2055 = vadd.f32 %v1960, %v2048
    %v2056 = vld [vmem:[%s5 + $0x8] ss:$0 sm:$0xff]
    %v2057 = vadd.f32 %v2053, %v2056
    %v2058 = vadd.f32 %v2054, %v2056
    %v2059 = vadd.f32 %v2055, %v2056
    %v2060 = vmax.f32 %v2057, 0.0
    %v2061 = vmax.f32 %v2058, 0.0
    %v2062 = vmax.f32 %v2059, 0.0
    %v2064 = vrot.slane %v2060, 2
    %v2066 = vrot.slane %v2060, 4
    %v2068 = vrot.slane %v2060, 6
    %v2071 = vrot.slane %v2061, 2
    %v2073 = vrot.slane %v2061, 4
    %v2075 = vrot.slane %v2061, 6
    %v2078 = vrot.slane %v2062, 2
    %s2080 = scalar_lea.vmem %s5, 1
    %v2081 = vld [vmem:[%s2080] ss:$8 sm:$0x3]
    %v2082 = vpack.c.bf16 %v2060, %v2060
    %v2083 = vpack.c.bf16 %v2064, %v2064
    %v2084 = vpack.c.bf16 %v2066, %v2066
    %v2085 = vpack.c.bf16 %v2068, %v2068
    %v2086 = vpack.c.bf16 %v2061, %v2061
    %v2087 = vpack.c.bf16 %v2071, %v2071
    %v2088 = vpack.c.bf16 %v2073, %v2073
    %v2089 = vpack.c.bf16 %v2075, %v2075
    %v2090 = vpack.c.bf16 %v2062, %v2062
    %v2091 = vpack.c.bf16 %v2078, %v2078
    %v2092 = vld [vmem:[%s3] sm:$0xff]
    %v2093 = vld [vmem:[%s3 + $0x8] sm:$0xff]
    %v2094 = vld [vmem:[%s3 + $0x10] sm:$0xff]
    %v2095 = vld [vmem:[%s3 + $0x18] sm:$0xff]
    %v2096 = vld [vmem:[%s3 + $0x20] sm:$0xff]
    %v2097 = vld [vmem:[%s3 + $0x28] sm:$0xff]
    %v2098 = vld [vmem:[%s3 + $0x30] sm:$0xff]
    %v2099 = vld [vmem:[%s3 + $0x38] sm:$0xff]
    %v2100 = vld [vmem:[%s3 + $0x40] sm:$0xff]
    %v2101 = vld [vmem:[%s3 + $0x48] sm:$0xff]
    %v2102 = vld [vmem:[%s3 + $0x50] sm:$0xff]
    %v2103 = vld [vmem:[%s3 + $0x58] sm:$0xff]
    %v2104 = vld [vmem:[%s3 + $0x60] sm:$0xff]
    %v2105 = vld [vmem:[%s3 + $0x68] sm:$0xff]
    %v2106 = vld [vmem:[%s3 + $0x70] sm:$0xff]
    %v2107 = vld [vmem:[%s3 + $0x78] sm:$0xff]
    %v2108 = vld [vmem:[%s3 + $0x80] sm:$0xff]
    %v2109 = vld [vmem:[%s3 + $0x88] sm:$0xff]
    %v2110 = vld [vmem:[%s3 + $0x90] sm:$0xff]
    %v2111 = vld [vmem:[%s3 + $0x98] sm:$0xff]
    %v2112 = vld [vmem:[%s3 + $0xa0] sm:$0xff]
    %v2113 = vld [vmem:[%s3 + $0xa8] sm:$0xff]
    %v2114 = vld [vmem:[%s3 + $0xb0] sm:$0xff]
    %v2115 = vld [vmem:[%s3 + $0xb8] sm:$0xff]
    %v2116 = vld [vmem:[%s3 + $0xc0] sm:$0xff]
    %v2117 = vld [vmem:[%s3 + $0xc8] sm:$0xff]
    %v2118 = vld [vmem:[%s3 + $0xd0] sm:$0xff]
    %v2119 = vld [vmem:[%s3 + $0xd8] sm:$0xff]
    %v2120 = vld [vmem:[%s3 + $0xe0] sm:$0xff]
    %v2121 = vld [vmem:[%s3 + $0xe8] sm:$0xff]
    %v2122 = vld [vmem:[%s3 + $0xf0] sm:$0xff]
    %v2123 = vld [vmem:[%s3 + $0xf8] sm:$0xff]
    %v2124 = vld [vmem:[%s3 + $0x100] sm:$0xff]
    %v2125 = vld [vmem:[%s3 + $0x108] sm:$0xff]
    %v2126 = vld [vmem:[%s3 + $0x110] sm:$0xff]
    %v2127 = vld [vmem:[%s3 + $0x118] sm:$0xff]
    %v2128 = vld [vmem:[%s3 + $0x120] sm:$0xff]
    %v2129 = vld [vmem:[%s3 + $0x128] sm:$0xff]
    %v2130 = vld [vmem:[%s3 + $0x130] sm:$0xff]
    %v2131 = vld [vmem:[%s3 + $0x138] sm:$0xff]
    %v2132 = vld [vmem:[%s3 + $0x140] sm:$0xff]
    %v2133 = vld [vmem:[%s3 + $0x148] sm:$0xff]
    %v2134 = vld [vmem:[%s3 + $0x150] sm:$0xff]
    %v2135 = vld [vmem:[%s3 + $0x158] sm:$0xff]
    %v2136 = vld [vmem:[%s3 + $0x160] sm:$0xff]
    %v2137 = vld [vmem:[%s3 + $0x168] sm:$0xff]
    %v2138 = vld [vmem:[%s3 + $0x170] sm:$0xff]
    %v2139 = vld [vmem:[%s3 + $0x178] sm:$0xff]
    %v2140 = vld [vmem:[%s3 + $0x180] sm:$0xff]
    %v2141 = vld [vmem:[%s3 + $0x188] sm:$0xff]
    %v2142 = vld [vmem:[%s3 + $0x190] sm:$0xff]
    %v2143 = vld [vmem:[%s3 + $0x198] sm:$0xff]
    %v2144 = vld [vmem:[%s3 + $0x1a0] sm:$0xff]
    %v2145 = vld [vmem:[%s3 + $0x1a8] sm:$0xff]
    %v2146 = vld [vmem:[%s3 + $0x1b0] sm:$0xff]
    %v2147 = vld [vmem:[%s3 + $0x1b8] sm:$0xff]
    %v2148 = vld [vmem:[%s3 + $0x1c0] sm:$0xff]
    %v2149 = vld [vmem:[%s3 + $0x1c8] sm:$0xff]
    %v2150 = vld [vmem:[%s3 + $0x1d0] sm:$0xff]
    %v2151 = vld [vmem:[%s3 + $0x1d8] sm:$0xff]
    %v2152 = vld [vmem:[%s3 + $0x1e0] sm:$0xff]
    %v2153 = vld [vmem:[%s3 + $0x1e8] sm:$0xff]
    %v2154 = vld [vmem:[%s3 + $0x1f0] sm:$0xff]
    %v2155 = vld [vmem:[%s3 + $0x1f8] sm:$0xff]
    %v2156 = vld [vmem:[%s3 + $0x200] sm:$0xff]
    %v2157 = vld [vmem:[%s3 + $0x208] sm:$0xff]
    %v2158 = vld [vmem:[%s3 + $0x210] sm:$0xff]
    %v2159 = vld [vmem:[%s3 + $0x218] sm:$0xff]
    %v2160 = vld [vmem:[%s3 + $0x220] sm:$0xff]
    %v2161 = vld [vmem:[%s3 + $0x228] sm:$0xff]
    %v2162 = vld [vmem:[%s3 + $0x230] sm:$0xff]
    %v2163 = vld [vmem:[%s3 + $0x238] sm:$0xff]
    %v2164 = vld [vmem:[%s3 + $0x240] sm:$0xff]
    %v2165 = vld [vmem:[%s3 + $0x248] sm:$0xff]
    %v2166 = vld [vmem:[%s3 + $0x250] sm:$0xff]
    %v2167 = vld [vmem:[%s3 + $0x258] sm:$0xff]
    %v2168 = vld [vmem:[%s3 + $0x260] sm:$0xff]
    %v2169 = vld [vmem:[%s3 + $0x268] sm:$0xff]
    %v2170 = vld [vmem:[%s3 + $0x270] sm:$0xff]
    %v2171 = vld [vmem:[%s3 + $0x278] sm:$0xff]
    %v2172 = vld [vmem:[%s3 + $0x280] sm:$0xff]
    %v2173 = vld [vmem:[%s3 + $0x288] sm:$0xff]
    %v2174 = vld [vmem:[%s3 + $0x290] sm:$0xff]
    %v2175 = vld [vmem:[%s3 + $0x298] sm:$0xff]
    %v2176 = vld [vmem:[%s3 + $0x2a0] sm:$0xff]
    %v2177 = vld [vmem:[%s3 + $0x2a8] sm:$0xff]
    %v2178 = vld [vmem:[%s3 + $0x2b0] sm:$0xff]
    %v2179 = vld [vmem:[%s3 + $0x2b8] sm:$0xff]
    %v2180 = vld [vmem:[%s3 + $0x2c0] sm:$0xff]
    %v2181 = vld [vmem:[%s3 + $0x2c8] sm:$0xff]
    %v2182 = vld [vmem:[%s3 + $0x2d0] sm:$0xff]
    %v2183 = vld [vmem:[%s3 + $0x2d8] sm:$0xff]
    %v2184 = vld [vmem:[%s3 + $0x2e0] sm:$0xff]
    %v2185 = vld [vmem:[%s3 + $0x2e8] sm:$0xff]
    %v2186 = vld [vmem:[%s3 + $0x2f0] sm:$0xff]
    %v2187 = vld [vmem:[%s3 + $0x2f8] sm:$0xff]
    %v2188 = vld [vmem:[%s3 + $0x300] sm:$0xff]
    %v2189 = vld [vmem:[%s3 + $0x308] sm:$0xff]
    %v2190 = vld [vmem:[%s3 + $0x310] sm:$0xff]
    %v2191 = vld [vmem:[%s3 + $0x318] sm:$0xff]
    %v2192 = vld [vmem:[%s3 + $0x320] sm:$0xff]
    %v2193 = vld [vmem:[%s3 + $0x328] sm:$0xff]
    %v2194 = vld [vmem:[%s3 + $0x330] sm:$0xff]
    %v2195 = vld [vmem:[%s3 + $0x338] sm:$0xff]
    %v2196 = vld [vmem:[%s3 + $0x340] sm:$0xff]
    %v2197 = vld [vmem:[%s3 + $0x348] sm:$0xff]
    %v2198 = vld [vmem:[%s3 + $0x350] sm:$0xff]
    %v2199 = vld [vmem:[%s3 + $0x358] sm:$0xff]
    %v2200 = vld [vmem:[%s3 + $0x360] sm:$0xff]
    %v2201 = vld [vmem:[%s3 + $0x368] sm:$0xff]
    %v2202 = vld [vmem:[%s3 + $0x370] sm:$0xff]
    %v2203 = vld [vmem:[%s3 + $0x378] sm:$0xff]
    %v2204 = vld [vmem:[%s3 + $0x380] sm:$0xff]
    %v2205 = vld [vmem:[%s3 + $0x388] sm:$0xff]
    %v2206 = vld [vmem:[%s3 + $0x390] sm:$0xff]
    %v2207 = vld [vmem:[%s3 + $0x398] sm:$0xff]
    %v2208 = vld [vmem:[%s3 + $0x3a0] sm:$0xff]
    %v2209 = vld [vmem:[%s3 + $0x3a8] sm:$0xff]
    %v2210 = vld [vmem:[%s3 + $0x3b0] sm:$0xff]
    %v2211 = vld [vmem:[%s3 + $0x3b8] sm:$0xff]
    %v2212 = vld [vmem:[%s3 + $0x3c0] sm:$0xff]
    %v2213 = vld [vmem:[%s3 + $0x3c8] sm:$0xff]
    %v2214 = vld [vmem:[%s3 + $0x3d0] sm:$0xff]
    %v2215 = vld [vmem:[%s3 + $0x3d8] sm:$0xff]
    %v2216 = vld [vmem:[%s3 + $0x3e0] sm:$0xff]
    %v2217 = vld [vmem:[%s3 + $0x3e8] sm:$0xff]
    %v2218 = vld [vmem:[%s3 + $0x3f0] sm:$0xff]
    %v2219 = vld [vmem:[%s3 + $0x3f8] sm:$0xff]
    %v2220 = vld [vmem:[%s3 + $0x400] sm:$0xff]
    %v2221 = vld [vmem:[%s3 + $0x408] sm:$0xff]
    %v2222 = vld [vmem:[%s3 + $0x410] sm:$0xff]
    %v2223 = vld [vmem:[%s3 + $0x418] sm:$0xff]
    %v2224 = vld [vmem:[%s3 + $0x420] sm:$0xff]
    %v2225 = vld [vmem:[%s3 + $0x428] sm:$0xff]
    %v2226 = vld [vmem:[%s3 + $0x430] sm:$0xff]
    %v2227 = vld [vmem:[%s3 + $0x438] sm:$0xff]
    %v2228 = vld [vmem:[%s3 + $0x440] sm:$0xff]
    %v2229 = vld [vmem:[%s3 + $0x448] sm:$0xff]
    %v2230 = vld [vmem:[%s3 + $0x450] sm:$0xff]
    %v2231 = vld [vmem:[%s3 + $0x458] sm:$0xff]
    %v2232 = vld [vmem:[%s3 + $0x460] sm:$0xff]
    %v2233 = vld [vmem:[%s3 + $0x468] sm:$0xff]
    %v2234 = vld [vmem:[%s3 + $0x470] sm:$0xff]
    %v2235 = vld [vmem:[%s3 + $0x478] sm:$0xff]
    %v2236 = vld [vmem:[%s3 + $0x480] sm:$0xff]
    %v2237 = vld [vmem:[%s3 + $0x488] sm:$0xff]
    %v2238 = vld [vmem:[%s3 + $0x490] sm:$0xff]
    %v2239 = vld [vmem:[%s3 + $0x498] sm:$0xff]
    %v2240 = vld [vmem:[%s3 + $0x4a0] sm:$0xff]
    %v2241 = vld [vmem:[%s3 + $0x4a8] sm:$0xff]
    %v2242 = vld [vmem:[%s3 + $0x4b0] sm:$0xff]
    %v2243 = vld [vmem:[%s3 + $0x4b8] sm:$0xff]
    %v2244 = vld [vmem:[%s3 + $0x4c0] sm:$0xff]
    %v2245 = vld [vmem:[%s3 + $0x4c8] sm:$0xff]
    %v2246 = vld [vmem:[%s3 + $0x4d0] sm:$0xff]
    %v2247 = vld [vmem:[%s3 + $0x4d8] sm:$0xff]
    %v2248 = vld [vmem:[%s3 + $0x4e0] sm:$0xff]
    %v2249 = vld [vmem:[%s3 + $0x4e8] sm:$0xff]
    %v2250 = vld [vmem:[%s3 + $0x4f0] sm:$0xff]
    %v2251 = vld [vmem:[%s3 + $0x4f8] sm:$0xff]
    %v2253 = vlaneseq
    %v2254 = vshrl.u32 %v2253, 7
    %v2255 = vsub.s32 0, %v2254
    %v2256 = vrot.slane %v2081, %v2255
    %v2257 = vlaneseq
    %v2258 = vshrl.u32 %v2257, 7
    %v2259 = vsub.s32 1, %v2258
    %v2260 = vrot.slane %v2081, %v2259
    %v2423 = vunpack.c.l.b16 %v2092
    %v2424 = vunpack.c.h.b16 %v2092
    %v2425 = vunpack.c.l.b16 %v2093
    %v2426 = vunpack.c.h.b16 %v2093
    %v2427 = vunpack.c.l.b16 %v2094
    %v2428 = vunpack.c.h.b16 %v2094
    %v2429 = vunpack.c.l.b16 %v2095
    %v2430 = vunpack.c.h.b16 %v2095
    %v2431 = vunpack.c.l.b16 %v2096
    %v2432 = vunpack.c.h.b16 %v2096
    %v2433 = vunpack.c.l.b16 %v2097
    %v2434 = vunpack.c.h.b16 %v2097
    %v2435 = vunpack.c.l.b16 %v2098
    %v2436 = vunpack.c.h.b16 %v2098
    %v2437 = vunpack.c.l.b16 %v2099
    %v2438 = vunpack.c.h.b16 %v2099
    %v2439 = vunpack.c.l.b16 %v2100
    %v2440 = vunpack.c.h.b16 %v2100
    %v2441 = vunpack.c.l.b16 %v2101
    %v2442 = vunpack.c.h.b16 %v2101
    %v2443 = vunpack.c.l.b16 %v2102
    %v2444 = vunpack.c.h.b16 %v2102
    %v2445 = vunpack.c.l.b16 %v2103
    %v2446 = vunpack.c.h.b16 %v2103
    %v2447 = vunpack.c.l.b16 %v2104
    %v2448 = vunpack.c.h.b16 %v2104
    %v2449 = vunpack.c.l.b16 %v2105
    %v2450 = vunpack.c.h.b16 %v2105
    %v2451 = vunpack.c.l.b16 %v2106
    %v2452 = vunpack.c.h.b16 %v2106
    %v2453 = vunpack.c.l.b16 %v2107
    %v2454 = vunpack.c.h.b16 %v2107
    %v2455 = vunpack.c.l.b16 %v2108
    %v2456 = vunpack.c.h.b16 %v2108
    %v2457 = vunpack.c.l.b16 %v2109
    %v2458 = vunpack.c.h.b16 %v2109
    %v2459 = vunpack.c.l.b16 %v2110
    %v2460 = vunpack.c.h.b16 %v2110
    %v2461 = vunpack.c.l.b16 %v2111
    %v2462 = vunpack.c.h.b16 %v2111
    %v2463 = vunpack.c.l.b16 %v2112
    %v2464 = vunpack.c.h.b16 %v2112
    %v2465 = vunpack.c.l.b16 %v2113
    %v2466 = vunpack.c.h.b16 %v2113
    %v2467 = vunpack.c.l.b16 %v2114
    %v2468 = vunpack.c.h.b16 %v2114
    %v2469 = vunpack.c.l.b16 %v2115
    %v2470 = vunpack.c.h.b16 %v2115
    %v2471 = vunpack.c.l.b16 %v2116
    %v2472 = vunpack.c.h.b16 %v2116
    %v2473 = vunpack.c.l.b16 %v2117
    %v2474 = vunpack.c.h.b16 %v2117
    %v2475 = vunpack.c.l.b16 %v2118
    %v2476 = vunpack.c.h.b16 %v2118
    %v2477 = vunpack.c.l.b16 %v2119
    %v2478 = vunpack.c.h.b16 %v2119
    %v2479 = vunpack.c.l.b16 %v2120
    %v2480 = vunpack.c.h.b16 %v2120
    %v2481 = vunpack.c.l.b16 %v2121
    %v2482 = vunpack.c.h.b16 %v2121
    %v2483 = vunpack.c.l.b16 %v2122
    %v2484 = vunpack.c.h.b16 %v2122
    %v2485 = vunpack.c.l.b16 %v2123
    %v2486 = vunpack.c.h.b16 %v2123
    %v2487 = vunpack.c.l.b16 %v2124
    %v2488 = vunpack.c.h.b16 %v2124
    %v2489 = vunpack.c.l.b16 %v2125
    %v2490 = vunpack.c.h.b16 %v2125
    %v2491 = vunpack.c.l.b16 %v2126
    %v2492 = vunpack.c.h.b16 %v2126
    %v2493 = vunpack.c.l.b16 %v2127
    %v2494 = vunpack.c.h.b16 %v2127
    %v2495 = vunpack.c.l.b16 %v2128
    %v2496 = vunpack.c.h.b16 %v2128
    %v2497 = vunpack.c.l.b16 %v2129
    %v2498 = vunpack.c.h.b16 %v2129
    %v2499 = vunpack.c.l.b16 %v2130
    %v2500 = vunpack.c.h.b16 %v2130
    %v2501 = vunpack.c.l.b16 %v2131
    %v2502 = vunpack.c.h.b16 %v2131
    %v2503 = vunpack.c.l.b16 %v2132
    %v2504 = vunpack.c.h.b16 %v2132
    %v2505 = vunpack.c.l.b16 %v2133
    %v2506 = vunpack.c.h.b16 %v2133
    %v2507 = vunpack.c.l.b16 %v2134
    %v2508 = vunpack.c.h.b16 %v2134
    %v2509 = vunpack.c.l.b16 %v2135
    %v2510 = vunpack.c.h.b16 %v2135
    %v2511 = vunpack.c.l.b16 %v2136
    %v2512 = vunpack.c.h.b16 %v2136
    %v2513 = vunpack.c.l.b16 %v2137
    %v2514 = vunpack.c.h.b16 %v2137
    %v2515 = vunpack.c.l.b16 %v2138
    %v2516 = vunpack.c.h.b16 %v2138
    %v2517 = vunpack.c.l.b16 %v2139
    %v2518 = vunpack.c.h.b16 %v2139
    %v2519 = vunpack.c.l.b16 %v2140
    %v2520 = vunpack.c.h.b16 %v2140
    %v2521 = vunpack.c.l.b16 %v2141
    %v2522 = vunpack.c.h.b16 %v2141
    %v2523 = vunpack.c.l.b16 %v2142
    %v2524 = vunpack.c.h.b16 %v2142
    %v2525 = vunpack.c.l.b16 %v2143
    %v2526 = vunpack.c.h.b16 %v2143
    %v2527 = vunpack.c.l.b16 %v2144
    %v2528 = vunpack.c.h.b16 %v2144
    %v2529 = vunpack.c.l.b16 %v2145
    %v2530 = vunpack.c.h.b16 %v2145
    %v2531 = vunpack.c.l.b16 %v2146
    %v2532 = vunpack.c.h.b16 %v2146
    %v2533 = vunpack.c.l.b16 %v2147
    %v2534 = vunpack.c.h.b16 %v2147
    %v2535 = vunpack.c.l.b16 %v2148
    %v2536 = vunpack.c.h.b16 %v2148
    %v2537 = vunpack.c.l.b16 %v2149
    %v2538 = vunpack.c.h.b16 %v2149
    %v2539 = vunpack.c.l.b16 %v2150
    %v2540 = vunpack.c.h.b16 %v2150
    %v2541 = vunpack.c.l.b16 %v2151
    %v2542 = vunpack.c.h.b16 %v2151
    %v2543 = vunpack.c.l.b16 %v2152
    %v2544 = vunpack.c.h.b16 %v2152
    %v2545 = vunpack.c.l.b16 %v2153
    %v2546 = vunpack.c.h.b16 %v2153
    %v2547 = vunpack.c.l.b16 %v2154
    %v2548 = vunpack.c.h.b16 %v2154
    %v2549 = vunpack.c.l.b16 %v2155
    %v2550 = vunpack.c.h.b16 %v2155
    %v2551 = vunpack.c.l.b16 %v2156
    %v2552 = vunpack.c.h.b16 %v2156
    %v2553 = vunpack.c.l.b16 %v2157
    %v2554 = vunpack.c.h.b16 %v2157
    %v2555 = vunpack.c.l.b16 %v2158
    %v2556 = vunpack.c.h.b16 %v2158
    %v2557 = vunpack.c.l.b16 %v2159
    %v2558 = vunpack.c.h.b16 %v2159
    %v2559 = vunpack.c.l.b16 %v2160
    %v2560 = vunpack.c.h.b16 %v2160
    %v2561 = vunpack.c.l.b16 %v2161
    %v2562 = vunpack.c.h.b16 %v2161
    %v2563 = vunpack.c.l.b16 %v2162
    %v2564 = vunpack.c.h.b16 %v2162
    %v2565 = vunpack.c.l.b16 %v2163
    %v2566 = vunpack.c.h.b16 %v2163
    %v2567 = vunpack.c.l.b16 %v2164
    %v2568 = vunpack.c.h.b16 %v2164
    %v2569 = vunpack.c.l.b16 %v2165
    %v2570 = vunpack.c.h.b16 %v2165
    %v2571 = vunpack.c.l.b16 %v2166
    %v2572 = vunpack.c.h.b16 %v2166
    %v2573 = vunpack.c.l.b16 %v2167
    %v2574 = vunpack.c.h.b16 %v2167
    %v2575 = vunpack.c.l.b16 %v2168
    %v2576 = vunpack.c.h.b16 %v2168
    %v2577 = vunpack.c.l.b16 %v2169
    %v2578 = vunpack.c.h.b16 %v2169
    %v2579 = vunpack.c.l.b16 %v2170
    %v2580 = vunpack.c.h.b16 %v2170
    %v2581 = vunpack.c.l.b16 %v2171
    %v2582 = vunpack.c.h.b16 %v2171
    %v2583 = vunpack.c.l.b16 %v2172
    %v2584 = vunpack.c.h.b16 %v2172
    %v2585 = vunpack.c.l.b16 %v2173
    %v2586 = vunpack.c.h.b16 %v2173
    %v2587 = vunpack.c.l.b16 %v2174
    %v2588 = vunpack.c.h.b16 %v2174
    %v2589 = vunpack.c.l.b16 %v2175
    %v2590 = vunpack.c.h.b16 %v2175
    %v2591 = vunpack.c.l.b16 %v2176
    %v2592 = vunpack.c.h.b16 %v2176
    %v2593 = vunpack.c.l.b16 %v2177
    %v2594 = vunpack.c.h.b16 %v2177
    %v2595 = vunpack.c.l.b16 %v2178
    %v2596 = vunpack.c.h.b16 %v2178
    %v2597 = vunpack.c.l.b16 %v2179
    %v2598 = vunpack.c.h.b16 %v2179
    %v2599 = vunpack.c.l.b16 %v2180
    %v2600 = vunpack.c.h.b16 %v2180
    %v2601 = vunpack.c.l.b16 %v2181
    %v2602 = vunpack.c.h.b16 %v2181
    %v2603 = vunpack.c.l.b16 %v2182
    %v2604 = vunpack.c.h.b16 %v2182
    %v2605 = vunpack.c.l.b16 %v2183
    %v2606 = vunpack.c.h.b16 %v2183
    %v2607 = vunpack.c.l.b16 %v2184
    %v2608 = vunpack.c.h.b16 %v2184
    %v2609 = vunpack.c.l.b16 %v2185
    %v2610 = vunpack.c.h.b16 %v2185
    %v2611 = vunpack.c.l.b16 %v2186
    %v2612 = vunpack.c.h.b16 %v2186
    %v2613 = vunpack.c.l.b16 %v2187
    %v2614 = vunpack.c.h.b16 %v2187
    %v2615 = vunpack.c.l.b16 %v2188
    %v2616 = vunpack.c.h.b16 %v2188
    %v2617 = vunpack.c.l.b16 %v2189
    %v2618 = vunpack.c.h.b16 %v2189
    %v2619 = vunpack.c.l.b16 %v2190
    %v2620 = vunpack.c.h.b16 %v2190
    %v2621 = vunpack.c.l.b16 %v2191
    %v2622 = vunpack.c.h.b16 %v2191
    %v2623 = vunpack.c.l.b16 %v2192
    %v2624 = vunpack.c.h.b16 %v2192
    %v2625 = vunpack.c.l.b16 %v2193
    %v2626 = vunpack.c.h.b16 %v2193
    %v2627 = vunpack.c.l.b16 %v2194
    %v2628 = vunpack.c.h.b16 %v2194
    %v2629 = vunpack.c.l.b16 %v2195
    %v2630 = vunpack.c.h.b16 %v2195
    %v2631 = vunpack.c.l.b16 %v2196
    %v2632 = vunpack.c.h.b16 %v2196
    %v2633 = vunpack.c.l.b16 %v2197
    %v2634 = vunpack.c.h.b16 %v2197
    %v2635 = vunpack.c.l.b16 %v2198
    %v2636 = vunpack.c.h.b16 %v2198
    %v2637 = vunpack.c.l.b16 %v2199
    %v2638 = vunpack.c.h.b16 %v2199
    %v2639 = vunpack.c.l.b16 %v2200
    %v2640 = vunpack.c.h.b16 %v2200
    %v2641 = vunpack.c.l.b16 %v2201
    %v2642 = vunpack.c.h.b16 %v2201
    %v2643 = vunpack.c.l.b16 %v2202
    %v2644 = vunpack.c.h.b16 %v2202
    %v2645 = vunpack.c.l.b16 %v2203
    %v2646 = vunpack.c.h.b16 %v2203
    %v2647 = vunpack.c.l.b16 %v2204
    %v2648 = vunpack.c.h.b16 %v2204
    %v2649 = vunpack.c.l.b16 %v2205
    %v2650 = vunpack.c.h.b16 %v2205
    %v2651 = vunpack.c.l.b16 %v2206
    %v2652 = vunpack.c.h.b16 %v2206
    %v2653 = vunpack.c.l.b16 %v2207
    %v2654 = vunpack.c.h.b16 %v2207
    %v2655 = vunpack.c.l.b16 %v2208
    %v2656 = vunpack.c.h.b16 %v2208
    %v2657 = vunpack.c.l.b16 %v2209
    %v2658 = vunpack.c.h.b16 %v2209
    %v2659 = vunpack.c.l.b16 %v2210
    %v2660 = vunpack.c.h.b16 %v2210
    %v2661 = vunpack.c.l.b16 %v2211
    %v2662 = vunpack.c.h.b16 %v2211
    %v2663 = vunpack.c.l.b16 %v2212
    %v2664 = vunpack.c.h.b16 %v2212
    %v2665 = vunpack.c.l.b16 %v2213
    %v2666 = vunpack.c.h.b16 %v2213
    %v2667 = vunpack.c.l.b16 %v2214
    %v2668 = vunpack.c.h.b16 %v2214
    %v2669 = vunpack.c.l.b16 %v2215
    %v2670 = vunpack.c.h.b16 %v2215
    %v2671 = vunpack.c.l.b16 %v2216
    %v2672 = vunpack.c.h.b16 %v2216
    %v2673 = vunpack.c.l.b16 %v2217
    %v2674 = vunpack.c.h.b16 %v2217
    %v2675 = vunpack.c.l.b16 %v2218
    %v2676 = vunpack.c.h.b16 %v2218
    %v2677 = vunpack.c.l.b16 %v2219
    %v2678 = vunpack.c.h.b16 %v2219
    %v2679 = vunpack.c.l.b16 %v2220
    %v2680 = vunpack.c.h.b16 %v2220
    %v2681 = vunpack.c.l.b16 %v2221
    %v2682 = vunpack.c.h.b16 %v2221
    %v2683 = vunpack.c.l.b16 %v2222
    %v2684 = vunpack.c.h.b16 %v2222
    %v2685 = vunpack.c.l.b16 %v2223
    %v2686 = vunpack.c.h.b16 %v2223
    %v2687 = vunpack.c.l.b16 %v2224
    %v2688 = vunpack.c.h.b16 %v2224
    %v2689 = vunpack.c.l.b16 %v2225
    %v2690 = vunpack.c.h.b16 %v2225
    %v2691 = vunpack.c.l.b16 %v2226
    %v2692 = vunpack.c.h.b16 %v2226
    %v2693 = vunpack.c.l.b16 %v2227
    %v2694 = vunpack.c.h.b16 %v2227
    %v2695 = vunpack.c.l.b16 %v2228
    %v2696 = vunpack.c.h.b16 %v2228
    %v2697 = vunpack.c.l.b16 %v2229
    %v2698 = vunpack.c.h.b16 %v2229
    %v2699 = vunpack.c.l.b16 %v2230
    %v2700 = vunpack.c.h.b16 %v2230
    %v2701 = vunpack.c.l.b16 %v2231
    %v2702 = vunpack.c.h.b16 %v2231
    %v2703 = vunpack.c.l.b16 %v2232
    %v2704 = vunpack.c.h.b16 %v2232
    %v2705 = vunpack.c.l.b16 %v2233
    %v2706 = vunpack.c.h.b16 %v2233
    %v2707 = vunpack.c.l.b16 %v2234
    %v2708 = vunpack.c.h.b16 %v2234
    %v2709 = vunpack.c.l.b16 %v2235
    %v2710 = vunpack.c.h.b16 %v2235
    %v2711 = vunpack.c.l.b16 %v2236
    %v2712 = vunpack.c.h.b16 %v2236
    %v2713 = vunpack.c.l.b16 %v2237
    %v2714 = vunpack.c.h.b16 %v2237
    %v2715 = vunpack.c.l.b16 %v2238
    %v2716 = vunpack.c.h.b16 %v2238
    %v2717 = vunpack.c.l.b16 %v2239
    %v2718 = vunpack.c.h.b16 %v2239
    %v2719 = vunpack.c.l.b16 %v2240
    %v2720 = vunpack.c.h.b16 %v2240
    %v2721 = vunpack.c.l.b16 %v2241
    %v2722 = vunpack.c.h.b16 %v2241
    %v2723 = vunpack.c.l.b16 %v2242
    %v2724 = vunpack.c.h.b16 %v2242
    %v2725 = vunpack.c.l.b16 %v2243
    %v2726 = vunpack.c.h.b16 %v2243
    %v2727 = vunpack.c.l.b16 %v2244
    %v2728 = vunpack.c.h.b16 %v2244
    %v2729 = vunpack.c.l.b16 %v2245
    %v2730 = vunpack.c.h.b16 %v2245
    %v2731 = vunpack.c.l.b16 %v2246
    %v2732 = vunpack.c.h.b16 %v2246
    %v2733 = vunpack.c.l.b16 %v2247
    %v2734 = vunpack.c.h.b16 %v2247
    %v2735 = vunpack.c.l.b16 %v2248
    %v2736 = vunpack.c.h.b16 %v2248
    %v2737 = vunpack.c.l.b16 %v2249
    %v2738 = vunpack.c.h.b16 %v2249
    %v2739 = vunpack.c.l.b16 %v2250
    %v2740 = vunpack.c.h.b16 %v2250
    %v2741 = vunpack.c.l.b16 %v2251
    %v2742 = vunpack.c.h.b16 %v2251
    %v2743 = vpack.c.b16 %v2425, %v2423
    %v2744 = vpack.c.b16 %v2426, %v2424
    %v2745 = vpack.c.b16 %v2429, %v2427
    %v2746 = vpack.c.b16 %v2430, %v2428
    %v2747 = vpack.c.b16 %v2433, %v2431
    %v2748 = vpack.c.b16 %v2434, %v2432
    %v2749 = vpack.c.b16 %v2437, %v2435
    %v2750 = vpack.c.b16 %v2438, %v2436
    %v2751 = vpack.c.b16 %v2441, %v2439
    %v2752 = vpack.c.b16 %v2442, %v2440
    %v2753 = vpack.c.b16 %v2445, %v2443
    %v2754 = vpack.c.b16 %v2446, %v2444
    %v2755 = vpack.c.b16 %v2449, %v2447
    %v2756 = vpack.c.b16 %v2450, %v2448
    %v2757 = vpack.c.b16 %v2453, %v2451
    %v2758 = vpack.c.b16 %v2454, %v2452
    %v2759 = vpack.c.b16 %v2457, %v2455
    %v2760 = vpack.c.b16 %v2458, %v2456
    %v2761 = vpack.c.b16 %v2461, %v2459
    %v2762 = vpack.c.b16 %v2462, %v2460
    %v2763 = vpack.c.b16 %v2465, %v2463
    %v2764 = vpack.c.b16 %v2466, %v2464
    %v2765 = vpack.c.b16 %v2469, %v2467
    %v2766 = vpack.c.b16 %v2470, %v2468
    %v2767 = vpack.c.b16 %v2473, %v2471
    %v2768 = vpack.c.b16 %v2474, %v2472
    %v2769 = vpack.c.b16 %v2477, %v2475
    %v2770 = vpack.c.b16 %v2478, %v2476
    %v2771 = vpack.c.b16 %v2481, %v2479
    %v2772 = vpack.c.b16 %v2482, %v2480
    %v2773 = vpack.c.b16 %v2485, %v2483
    %v2774 = vpack.c.b16 %v2486, %v2484
    %v2775 = vpack.c.b16 %v2489, %v2487
    %v2776 = vpack.c.b16 %v2490, %v2488
    %v2777 = vpack.c.b16 %v2493, %v2491
    %v2778 = vpack.c.b16 %v2494, %v2492
    %v2779 = vpack.c.b16 %v2497, %v2495
    %v2780 = vpack.c.b16 %v2498, %v2496
    %v2781 = vpack.c.b16 %v2501, %v2499
    %v2782 = vpack.c.b16 %v2502, %v2500
    %v2783 = vpack.c.b16 %v2505, %v2503
    %v2784 = vpack.c.b16 %v2506, %v2504
    %v2785 = vpack.c.b16 %v2509, %v2507
    %v2786 = vpack.c.b16 %v2510, %v2508
    %v2787 = vpack.c.b16 %v2513, %v2511
    %v2788 = vpack.c.b16 %v2514, %v2512
    %v2789 = vpack.c.b16 %v2517, %v2515
    %v2790 = vpack.c.b16 %v2518, %v2516
    %v2791 = vpack.c.b16 %v2521, %v2519
    %v2792 = vpack.c.b16 %v2522, %v2520
    %v2793 = vpack.c.b16 %v2525, %v2523
    %v2794 = vpack.c.b16 %v2526, %v2524
    %v2795 = vpack.c.b16 %v2529, %v2527
    %v2796 = vpack.c.b16 %v2530, %v2528
    %v2797 = vpack.c.b16 %v2533, %v2531
    %v2798 = vpack.c.b16 %v2534, %v2532
    %v2799 = vpack.c.b16 %v2537, %v2535
    %v2800 = vpack.c.b16 %v2538, %v2536
    %v2801 = vpack.c.b16 %v2541, %v2539
    %v2802 = vpack.c.b16 %v2542, %v2540
    %v2803 = vpack.c.b16 %v2545, %v2543
    %v2804 = vpack.c.b16 %v2546, %v2544
    %v2805 = vpack.c.b16 %v2549, %v2547
    %v2806 = vpack.c.b16 %v2550, %v2548
    %v2807 = vpack.c.b16 %v2553, %v2551
    %v2808 = vpack.c.b16 %v2554, %v2552
    %v2809 = vpack.c.b16 %v2557, %v2555
    %v2810 = vpack.c.b16 %v2558, %v2556
    %v2811 = vpack.c.b16 %v2561, %v2559
    %v2812 = vpack.c.b16 %v2562, %v2560
    %v2813 = vpack.c.b16 %v2565, %v2563
    %v2814 = vpack.c.b16 %v2566, %v2564
    %v2815 = vpack.c.b16 %v2569, %v2567
    %v2816 = vpack.c.b16 %v2570, %v2568
    %v2817 = vpack.c.b16 %v2573, %v2571
    %v2818 = vpack.c.b16 %v2574, %v2572
    %v2819 = vpack.c.b16 %v2577, %v2575
    %v2820 = vpack.c.b16 %v2578, %v2576
    %v2821 = vpack.c.b16 %v2581, %v2579
    %v2822 = vpack.c.b16 %v2582, %v2580
    %v2823 = vpack.c.b16 %v2585, %v2583
    %v2824 = vpack.c.b16 %v2586, %v2584
    %v2825 = vpack.c.b16 %v2589, %v2587
    %v2826 = vpack.c.b16 %v2590, %v2588
    %v2827 = vpack.c.b16 %v2593, %v2591
    %v2828 = vpack.c.b16 %v2594, %v2592
    %v2829 = vpack.c.b16 %v2597, %v2595
    %v2830 = vpack.c.b16 %v2598, %v2596
    %v2831 = vpack.c.b16 %v2601, %v2599
    %v2832 = vpack.c.b16 %v2602, %v2600
    %v2833 = vpack.c.b16 %v2605, %v2603
    %v2834 = vpack.c.b16 %v2606, %v2604
    %v2835 = vpack.c.b16 %v2609, %v2607
    %v2836 = vpack.c.b16 %v2610, %v2608
    %v2837 = vpack.c.b16 %v2613, %v2611
    %v2838 = vpack.c.b16 %v2614, %v2612
    %v2839 = vpack.c.b16 %v2617, %v2615
    %v2840 = vpack.c.b16 %v2618, %v2616
    %v2841 = vpack.c.b16 %v2621, %v2619
    %v2842 = vpack.c.b16 %v2622, %v2620
    %v2843 = vpack.c.b16 %v2625, %v2623
    %v2844 = vpack.c.b16 %v2626, %v2624
    %v2845 = vpack.c.b16 %v2629, %v2627
    %v2846 = vpack.c.b16 %v2630, %v2628
    %v2847 = vpack.c.b16 %v2633, %v2631
    %v2848 = vpack.c.b16 %v2634, %v2632
    %v2849 = vpack.c.b16 %v2637, %v2635
    %v2850 = vpack.c.b16 %v2638, %v2636
    %v2851 = vpack.c.b16 %v2641, %v2639
    %v2852 = vpack.c.b16 %v2642, %v2640
    %v2853 = vpack.c.b16 %v2645, %v2643
    %v2854 = vpack.c.b16 %v2646, %v2644
    %v2855 = vpack.c.b16 %v2649, %v2647
    %v2856 = vpack.c.b16 %v2650, %v2648
    %v2857 = vpack.c.b16 %v2653, %v2651
    %v2858 = vpack.c.b16 %v2654, %v2652
    %v2859 = vpack.c.b16 %v2657, %v2655
    %v2860 = vpack.c.b16 %v2658, %v2656
    %v2861 = vpack.c.b16 %v2661, %v2659
    %v2862 = vpack.c.b16 %v2662, %v2660
    %v2863 = vpack.c.b16 %v2665, %v2663
    %v2864 = vpack.c.b16 %v2666, %v2664
    %v2865 = vpack.c.b16 %v2669, %v2667
    %v2866 = vpack.c.b16 %v2670, %v2668
    %v2867 = vpack.c.b16 %v2673, %v2671
    %v2868 = vpack.c.b16 %v2674, %v2672
    %v2869 = vpack.c.b16 %v2677, %v2675
    %v2870 = vpack.c.b16 %v2678, %v2676
    %v2871 = vpack.c.b16 %v2681, %v2679
    %v2872 = vpack.c.b16 %v2682, %v2680
    %v2873 = vpack.c.b16 %v2685, %v2683
    %v2874 = vpack.c.b16 %v2686, %v2684
    %v2875 = vpack.c.b16 %v2689, %v2687
    %v2876 = vpack.c.b16 %v2690, %v2688
    %v2877 = vpack.c.b16 %v2693, %v2691
    %v2878 = vpack.c.b16 %v2694, %v2692
    %v2879 = vpack.c.b16 %v2697, %v2695
    %v2880 = vpack.c.b16 %v2698, %v2696
    %v2881 = vpack.c.b16 %v2701, %v2699
    %v2882 = vpack.c.b16 %v2702, %v2700
    %v2883 = vpack.c.b16 %v2705, %v2703
    %v2884 = vpack.c.b16 %v2706, %v2704
    %v2885 = vpack.c.b16 %v2709, %v2707
    %v2886 = vpack.c.b16 %v2710, %v2708
    %v2887 = vpack.c.b16 %v2713, %v2711
    %v2888 = vpack.c.b16 %v2714, %v2712
    %v2889 = vpack.c.b16 %v2717, %v2715
    %v2890 = vpack.c.b16 %v2718, %v2716
    %v2891 = vpack.c.b16 %v2721, %v2719
    %v2892 = vpack.c.b16 %v2722, %v2720
    %v2893 = vpack.c.b16 %v2725, %v2723
    %v2894 = vpack.c.b16 %v2726, %v2724
    %v2895 = vpack.c.b16 %v2729, %v2727
    %v2896 = vpack.c.b16 %v2730, %v2728
    %v2897 = vpack.c.b16 %v2733, %v2731
    %v2898 = vpack.c.b16 %v2734, %v2732
    %v2899 = vpack.c.b16 %v2737, %v2735
    %v2900 = vpack.c.b16 %v2738, %v2736
    %v2901 = vpack.c.b16 %v2741, %v2739
    %v2902 = vpack.c.b16 %v2742, %v2740
    %3063 = vmatprep.subr.bf16.mxu0 %v2758
    %3064 = vmatpush1.bf16.msra.mxu0 %v2757
    %3065 = vmatprep.subr.bf16.mxu0 %v2756
    %3066 = vmatpush1.bf16.msra.mxu0 %v2755
    %3067 = vmatprep.subr.bf16.mxu0 %v2754
    %3068 = vmatpush1.bf16.msra.mxu0 %v2753
    %3069 = vmatprep.subr.bf16.mxu0 %v2752
    %3070 = vmatpush1.bf16.msra.mxu0 %v2751
    %3071 = vmatprep.subr.bf16.mxu0 %v2750
    %3072 = vmatpush1.bf16.msra.mxu0 %v2749
    %3073 = vmatprep.subr.bf16.mxu0 %v2748
    %3074 = vmatpush1.bf16.msra.mxu0 %v2747
    %3075 = vmatprep.subr.bf16.mxu0 %v2746
    %3076 = vmatpush1.bf16.msra.mxu0 %v2745
    %3077 = vmatprep.subr.bf16.mxu0 %v2744
    %3078 = vmatpush1.bf16.msra.mxu0 %v2743
    %3079 = vmatprep.subr.bf16.mxu0 %v2774
    %3080 = vmatpush2.bf16.msra.mxu0 %v2773
    %3081 = vmatprep.subr.bf16.mxu0 %v2772
    %3082 = vmatpush2.bf16.msra.mxu0 %v2771
    %3083 = vmatprep.subr.bf16.mxu0 %v2770
    %3084 = vmatpush2.bf16.msra.mxu0 %v2769
    %3085 = vmatprep.subr.bf16.mxu0 %v2768
    %3086 = vmatpush2.bf16.msra.mxu0 %v2767
    %3087 = vmatprep.subr.bf16.mxu0 %v2766
    %3088 = vmatpush2.bf16.msra.mxu0 %v2765
    %3089 = vmatprep.subr.bf16.mxu0 %v2764
    %3090 = vmatpush2.bf16.msra.mxu0 %v2763
    %3091 = vmatprep.subr.bf16.mxu0 %v2762
    %3092 = vmatpush2.bf16.msra.mxu0 %v2761
    %3093 = vmatprep.subr.bf16.mxu0 %v2760
    %3094 = vmatpush2.bf16.msra.mxu0 %v2759
    %3095 = vmatprep.mubr.bf16.mxu0 %v2083
    %3096 = vmatmul.mubr.bf16.gmra.mxu0 %v2082
    %v3097 = vpop.f32.mrf.mxu0
    %v3098 = vadd.f32 %v2256, %v3097
    %v3099 = vpop.f32.mrf.mxu0
    %v3100 = vadd.f32 %v2260, %v3099
    %v3101 = vpop.f32.mrf.mxu0
    %v3102 = vpop.f32.mrf.mxu0
    %3103 = vdwg.mxu0
    %3104 = vmatprep.subr.bf16.mxu0 %v2790
    %3105 = vmatpush1.bf16.msra.mxu0 %v2789
    %3106 = vmatprep.subr.bf16.mxu0 %v2788
    %3107 = vmatpush1.bf16.msra.mxu0 %v2787
    %3108 = vmatprep.subr.bf16.mxu0 %v2786
    %3109 = vmatpush1.bf16.msra.mxu0 %v2785
    %3110 = vmatprep.subr.bf16.mxu0 %v2784
    %3111 = vmatpush1.bf16.msra.mxu0 %v2783
    %3112 = vmatprep.subr.bf16.mxu0 %v2782
    %3113 = vmatpush1.bf16.msra.mxu0 %v2781
    %3114 = vmatprep.subr.bf16.mxu0 %v2780
    %3115 = vmatpush1.bf16.msra.mxu0 %v2779
    %3116 = vmatprep.subr.bf16.mxu0 %v2778
    %3117 = vmatpush1.bf16.msra.mxu0 %v2777
    %3118 = vmatprep.subr.bf16.mxu0 %v2776
    %3119 = vmatpush1.bf16.msra.mxu0 %v2775
    %3120 = vmatprep.subr.bf16.mxu0 %v2806
    %3121 = vmatpush2.bf16.msra.mxu0 %v2805
    %3122 = vmatprep.subr.bf16.mxu0 %v2804
    %3123 = vmatpush2.bf16.msra.mxu0 %v2803
    %3124 = vmatprep.subr.bf16.mxu0 %v2802
    %3125 = vmatpush2.bf16.msra.mxu0 %v2801
    %3126 = vmatprep.subr.bf16.mxu0 %v2800
    %3127 = vmatpush2.bf16.msra.mxu0 %v2799
    %3128 = vmatprep.subr.bf16.mxu0 %v2798
    %3129 = vmatpush2.bf16.msra.mxu0 %v2797
    %3130 = vmatprep.subr.bf16.mxu0 %v2796
    %3131 = vmatpush2.bf16.msra.mxu0 %v2795
    %3132 = vmatprep.subr.bf16.mxu0 %v2794
    %3133 = vmatpush2.bf16.msra.mxu0 %v2793
    %3134 = vmatprep.subr.bf16.mxu0 %v2792
    %3135 = vmatpush2.bf16.msra.mxu0 %v2791
    %3136 = vmatprep.mubr.bf16.mxu0 %v2085
    %3137 = vmatmul.mubr.bf16.gmra.mxu0 %v2084
    %v3138 = vpop.f32.mrf.mxu0
    %v3139 = vadd.f32 %v3098, %v3138
    %v3140 = vpop.f32.mrf.mxu0
    %v3141 = vadd.f32 %v3100, %v3140
    %v3142 = vpop.f32.mrf.mxu0
    %v3143 = vpop.f32.mrf.mxu0
    %3144 = vdwg.mxu0
    %3145 = vmatprep.subr.bf16.mxu0 %v2822
    %3146 = vmatpush1.bf16.msra.mxu0 %v2821
    %3147 = vmatprep.subr.bf16.mxu0 %v2820
    %3148 = vmatpush1.bf16.msra.mxu0 %v2819
    %3149 = vmatprep.subr.bf16.mxu0 %v2818
    %3150 = vmatpush1.bf16.msra.mxu0 %v2817
    %3151 = vmatprep.subr.bf16.mxu0 %v2816
    %3152 = vmatpush1.bf16.msra.mxu0 %v2815
    %3153 = vmatprep.subr.bf16.mxu0 %v2814
    %3154 = vmatpush1.bf16.msra.mxu0 %v2813
    %3155 = vmatprep.subr.bf16.mxu0 %v2812
    %3156 = vmatpush1.bf16.msra.mxu0 %v2811
    %3157 = vmatprep.subr.bf16.mxu0 %v2810
    %3158 = vmatpush1.bf16.msra.mxu0 %v2809
    %3159 = vmatprep.subr.bf16.mxu0 %v2808
    %3160 = vmatpush1.bf16.msra.mxu0 %v2807
    %3161 = vmatprep.subr.bf16.mxu0 %v2838
    %3162 = vmatpush2.bf16.msra.mxu0 %v2837
    %3163 = vmatprep.subr.bf16.mxu0 %v2836
    %3164 = vmatpush2.bf16.msra.mxu0 %v2835
    %3165 = vmatprep.subr.bf16.mxu0 %v2834
    %3166 = vmatpush2.bf16.msra.mxu0 %v2833
    %3167 = vmatprep.subr.bf16.mxu0 %v2832
    %3168 = vmatpush2.bf16.msra.mxu0 %v2831
    %3169 = vmatprep.subr.bf16.mxu0 %v2830
    %3170 = vmatpush2.bf16.msra.mxu0 %v2829
    %3171 = vmatprep.subr.bf16.mxu0 %v2828
    %3172 = vmatpush2.bf16.msra.mxu0 %v2827
    %3173 = vmatprep.subr.bf16.mxu0 %v2826
    %3174 = vmatpush2.bf16.msra.mxu0 %v2825
    %3175 = vmatprep.subr.bf16.mxu0 %v2824
    %3176 = vmatpush2.bf16.msra.mxu0 %v2823
    %3177 = vmatprep.mubr.bf16.mxu0 %v2087
    %3178 = vmatmul.mubr.bf16.gmra.mxu0 %v2086
    %v3179 = vpop.f32.mrf.mxu0
    %v3180 = vadd.f32 %v3139, %v3179
    %v3181 = vpop.f32.mrf.mxu0
    %v3182 = vadd.f32 %v3141, %v3181
    %v3183 = vpop.f32.mrf.mxu0
    %v3184 = vpop.f32.mrf.mxu0
    %3185 = vdwg.mxu0
    %3186 = vmatprep.subr.bf16.mxu0 %v2854
    %3187 = vmatpush1.bf16.msra.mxu0 %v2853
    %3188 = vmatprep.subr.bf16.mxu0 %v2852
    %3189 = vmatpush1.bf16.msra.mxu0 %v2851
    %3190 = vmatprep.subr.bf16.mxu0 %v2850
    %3191 = vmatpush1.bf16.msra.mxu0 %v2849
    %3192 = vmatprep.subr.bf16.mxu0 %v2848
    %3193 = vmatpush1.bf16.msra.mxu0 %v2847
    %3194 = vmatprep.subr.bf16.mxu0 %v2846
    %3195 = vmatpush1.bf16.msra.mxu0 %v2845
    %3196 = vmatprep.subr.bf16.mxu0 %v2844
    %3197 = vmatpush1.bf16.msra.mxu0 %v2843
    %3198 = vmatprep.subr.bf16.mxu0 %v2842
    %3199 = vmatpush1.bf16.msra.mxu0 %v2841
    %3200 = vmatprep.subr.bf16.mxu0 %v2840
    %3201 = vmatpush1.bf16.msra.mxu0 %v2839
    %3202 = vmatprep.subr.bf16.mxu0 %v2870
    %3203 = vmatpush2.bf16.msra.mxu0 %v2869
    %3204 = vmatprep.subr.bf16.mxu0 %v2868
    %3205 = vmatpush2.bf16.msra.mxu0 %v2867
    %3206 = vmatprep.subr.bf16.mxu0 %v2866
    %3207 = vmatpush2.bf16.msra.mxu0 %v2865
    %3208 = vmatprep.subr.bf16.mxu0 %v2864
    %3209 = vmatpush2.bf16.msra.mxu0 %v2863
    %3210 = vmatprep.subr.bf16.mxu0 %v2862
    %3211 = vmatpush2.bf16.msra.mxu0 %v2861
    %3212 = vmatprep.subr.bf16.mxu0 %v2860
    %3213 = vmatpush2.bf16.msra.mxu0 %v2859
    %3214 = vmatprep.subr.bf16.mxu0 %v2858
    %3215 = vmatpush2.bf16.msra.mxu0 %v2857
    %3216 = vmatprep.subr.bf16.mxu0 %v2856
    %3217 = vmatpush2.bf16.msra.mxu0 %v2855
    %3218 = vmatprep.mubr.bf16.mxu0 %v2089
    %3219 = vmatmul.mubr.bf16.gmra.mxu0 %v2088
    %v3220 = vpop.f32.mrf.mxu0
    %v3221 = vadd.f32 %v3180, %v3220
    %v3222 = vpop.f32.mrf.mxu0
    %v3223 = vadd.f32 %v3182, %v3222
    %v3224 = vpop.f32.mrf.mxu0
    %v3225 = vpop.f32.mrf.mxu0
    %3226 = vdwg.mxu0
    %3227 = vmatprep.subr.bf16.mxu0 %v2886
    %3228 = vmatpush1.bf16.msra.mxu0 %v2885
    %3229 = vmatprep.subr.bf16.mxu0 %v2884
    %3230 = vmatpush1.bf16.msra.mxu0 %v2883
    %3231 = vmatprep.subr.bf16.mxu0 %v2882
    %3232 = vmatpush1.bf16.msra.mxu0 %v2881
    %3233 = vmatprep.subr.bf16.mxu0 %v2880
    %3234 = vmatpush1.bf16.msra.mxu0 %v2879
    %3235 = vmatprep.subr.bf16.mxu0 %v2878
    %3236 = vmatpush1.bf16.msra.mxu0 %v2877
    %3237 = vmatprep.subr.bf16.mxu0 %v2876
    %3238 = vmatpush1.bf16.msra.mxu0 %v2875
    %3239 = vmatprep.subr.bf16.mxu0 %v2874
    %3240 = vmatpush1.bf16.msra.mxu0 %v2873
    %3241 = vmatprep.subr.bf16.mxu0 %v2872
    %3242 = vmatpush1.bf16.msra.mxu0 %v2871
    %3243 = vmatprep.subr.bf16.mxu0 %v2902
    %3244 = vmatpush2.bf16.msra.mxu0 %v2901
    %3245 = vmatprep.subr.bf16.mxu0 %v2900
    %3246 = vmatpush2.bf16.msra.mxu0 %v2899
    %3247 = vmatprep.subr.bf16.mxu0 %v2898
    %3248 = vmatpush2.bf16.msra.mxu0 %v2897
    %3249 = vmatprep.subr.bf16.mxu0 %v2896
    %3250 = vmatpush2.bf16.msra.mxu0 %v2895
    %3251 = vmatprep.subr.bf16.mxu0 %v2894
    %3252 = vmatpush2.bf16.msra.mxu0 %v2893
    %3253 = vmatprep.subr.bf16.mxu0 %v2892
    %3254 = vmatpush2.bf16.msra.mxu0 %v2891
    %3255 = vmatprep.subr.bf16.mxu0 %v2890
    %3256 = vmatpush2.bf16.msra.mxu0 %v2889
    %3257 = vmatprep.subr.bf16.mxu0 %v2888
    %3258 = vmatpush2.bf16.msra.mxu0 %v2887
    %3259 = vmatprep.mubr.bf16.mxu0 %v2091
    %3260 = vmatmul.mubr.bf16.gmra.mxu0 %v2090
    %v3261 = vpop.f32.mrf.mxu0
    %v3262 = vadd.f32 %v3221, %v3261
    %v3263 = vpop.f32.mrf.mxu0
    %v3264 = vadd.f32 %v3223, %v3263
    %v3265 = vpop.f32.mrf.mxu0
    %v3266 = vpop.f32.mrf.mxu0
    %3267 = vdwg.mxu0
    %v3268 = vmax.f32 %v3262, 0.0
    %v3269 = vmax.f32 %v3264, 0.0
    %v3270 = vld [vmem:[%s5 + $0x2] ss:$0 sm:$0xff]
    %v3271 = vpack.c.bf16 %v3268, %v3268
    %v3272 = vpack.c.bf16 %v3269, %v3269
    %v3273 = vld [vmem:[%s4] sm:$0xf]
    %v3274 = vld [vmem:[%s4 + $0x4] sm:$0xf]
    %v3275 = vld [vmem:[%s4 + $0x8] sm:$0xf]
    %v3276 = vld [vmem:[%s4 + $0xc] sm:$0xf]
    %v3277 = vld [vmem:[%s4 + $0x10] sm:$0xf]
    %v3278 = vld [vmem:[%s4 + $0x14] sm:$0xf]
    %v3279 = vld [vmem:[%s4 + $0x18] sm:$0xf]
    %v3280 = vld [vmem:[%s4 + $0x1c] sm:$0xf]
    %v3281 = vld [vmem:[%s4 + $0x20] sm:$0xf]
    %v3282 = vld [vmem:[%s4 + $0x24] sm:$0xf]
    %v3283 = vld [vmem:[%s4 + $0x28] sm:$0xf]
    %v3284 = vld [vmem:[%s4 + $0x2c] sm:$0xf]
    %v3285 = vld [vmem:[%s4 + $0x30] sm:$0xf]
    %v3286 = vld [vmem:[%s4 + $0x34] sm:$0xf]
    %v3287 = vld [vmem:[%s4 + $0x38] sm:$0xf]
    %v3288 = vld [vmem:[%s4 + $0x3c] sm:$0xf]
    %v3289 = vld [vmem:[%s4 + $0x40] sm:$0xf]
    %v3290 = vld [vmem:[%s4 + $0x44] sm:$0xf]
    %v3291 = vld [vmem:[%s4 + $0x48] sm:$0xf]
    %v3292 = vld [vmem:[%s4 + $0x4c] sm:$0xf]
    %v3293 = vld [vmem:[%s4 + $0x50] sm:$0xf]
    %v3294 = vld [vmem:[%s4 + $0x54] sm:$0xf]
    %v3295 = vld [vmem:[%s4 + $0x58] sm:$0xf]
    %v3296 = vld [vmem:[%s4 + $0x5c] sm:$0xf]
    %v3297 = vld [vmem:[%s4 + $0x60] sm:$0xf]
    %v3298 = vld [vmem:[%s4 + $0x64] sm:$0xf]
    %v3299 = vld [vmem:[%s4 + $0x68] sm:$0xf]
    %v3300 = vld [vmem:[%s4 + $0x6c] sm:$0xf]
    %v3301 = vld [vmem:[%s4 + $0x70] sm:$0xf]
    %v3302 = vld [vmem:[%s4 + $0x74] sm:$0xf]
    %v3303 = vld [vmem:[%s4 + $0x78] sm:$0xf]
    %v3304 = vld [vmem:[%s4 + $0x7c] sm:$0xf]
    %v3337 = vunpack.c.l.b16 %v3273
    %v3338 = vunpack.c.l.b16 %v3274
    %v3339 = vunpack.c.l.b16 %v3275
    %v3340 = vunpack.c.l.b16 %v3276
    %v3341 = vunpack.c.l.b16 %v3277
    %v3342 = vunpack.c.l.b16 %v3278
    %v3343 = vunpack.c.l.b16 %v3279
    %v3344 = vunpack.c.l.b16 %v3280
    %v3345 = vunpack.c.l.b16 %v3281
    %v3346 = vunpack.c.l.b16 %v3282
    %v3347 = vunpack.c.l.b16 %v3283
    %v3348 = vunpack.c.l.b16 %v3284
    %v3349 = vunpack.c.l.b16 %v3285
    %v3350 = vunpack.c.l.b16 %v3286
    %v3351 = vunpack.c.l.b16 %v3287
    %v3352 = vunpack.c.l.b16 %v3288
    %v3353 = vunpack.c.l.b16 %v3289
    %v3354 = vunpack.c.l.b16 %v3290
    %v3355 = vunpack.c.l.b16 %v3291
    %v3356 = vunpack.c.l.b16 %v3292
    %v3357 = vunpack.c.l.b16 %v3293
    %v3358 = vunpack.c.l.b16 %v3294
    %v3359 = vunpack.c.l.b16 %v3295
    %v3360 = vunpack.c.l.b16 %v3296
    %v3361 = vunpack.c.l.b16 %v3297
    %v3362 = vunpack.c.l.b16 %v3298
    %v3363 = vunpack.c.l.b16 %v3299
    %v3364 = vunpack.c.l.b16 %v3300
    %v3365 = vunpack.c.l.b16 %v3301
    %v3366 = vunpack.c.l.b16 %v3302
    %v3367 = vunpack.c.l.b16 %v3303
    %v3368 = vunpack.c.l.b16 %v3304
    %v3369 = vpack.c.b16 %v3338, %v3337
    %v3370 = vpack.c.b16 %v3340, %v3339
    %v3371 = vpack.c.b16 %v3342, %v3341
    %v3372 = vpack.c.b16 %v3344, %v3343
    %v3373 = vpack.c.b16 %v3346, %v3345
    %v3374 = vpack.c.b16 %v3348, %v3347
    %v3375 = vpack.c.b16 %v3350, %v3349
    %v3376 = vpack.c.b16 %v3352, %v3351
    %v3377 = vpack.c.b16 %v3354, %v3353
    %v3378 = vpack.c.b16 %v3356, %v3355
    %v3379 = vpack.c.b16 %v3358, %v3357
    %v3380 = vpack.c.b16 %v3360, %v3359
    %v3381 = vpack.c.b16 %v3362, %v3361
    %v3382 = vpack.c.b16 %v3364, %v3363
    %v3383 = vpack.c.b16 %v3366, %v3365
    %v3384 = vpack.c.b16 %v3368, %v3367
    %3401 = vmatprep.subr.bf16.mxu0 0
    %3402 = vmatpush1.bf16.msra.mxu0 %v3376
    %3403 = vmatprep.subr.bf16.mxu0 0
    %3404 = vmatpush1.bf16.msra.mxu0 %v3375
    %3405 = vmatprep.subr.bf16.mxu0 0
    %3406 = vmatpush1.bf16.msra.mxu0 %v3374
    %3407 = vmatprep.subr.bf16.mxu0 0
    %3408 = vmatpush1.bf16.msra.mxu0 %v3373
    %3409 = vmatprep.subr.bf16.mxu0 0
    %3410 = vmatpush1.bf16.msra.mxu0 %v3372
    %3411 = vmatprep.subr.bf16.mxu0 0
    %3412 = vmatpush1.bf16.msra.mxu0 %v3371
    %3413 = vmatprep.subr.bf16.mxu0 0
    %3414 = vmatpush1.bf16.msra.mxu0 %v3370
    %3415 = vmatprep.subr.bf16.mxu0 0
    %3416 = vmatpush1.bf16.msra.mxu0 %v3369
    %3417 = vmatprep.subr.bf16.mxu0 0
    %3418 = vmatpush2.bf16.msra.mxu0 %v3384
    %3419 = vmatprep.subr.bf16.mxu0 0
    %3420 = vmatpush2.bf16.msra.mxu0 %v3383
    %3421 = vmatprep.subr.bf16.mxu0 0
    %3422 = vmatpush2.bf16.msra.mxu0 %v3382
    %3423 = vmatprep.subr.bf16.mxu0 0
    %3424 = vmatpush2.bf16.msra.mxu0 %v3381
    %3425 = vmatprep.subr.bf16.mxu0 0
    %3426 = vmatpush2.bf16.msra.mxu0 %v3380
    %3427 = vmatprep.subr.bf16.mxu0 0
    %3428 = vmatpush2.bf16.msra.mxu0 %v3379
    %3429 = vmatprep.subr.bf16.mxu0 0
    %3430 = vmatpush2.bf16.msra.mxu0 %v3378
    %3431 = vmatprep.subr.bf16.mxu0 0
    %3432 = vmatpush2.bf16.msra.mxu0 %v3377
    %3433 = vmatprep.mubr.bf16.mxu0 %v3272
    %3434 = vmatmul.mubr.bf16.gmra.mxu0 %v3271
    %v3435 = vpop.f32.mrf.mxu0
    %v3436 = vadd.f32 %v3270, %v3435
    %v3437 = vpop.f32.mrf.mxu0
    %v3438 = vpop.f32.mrf.mxu0
    %v3439 = vpop.f32.mrf.mxu0
    %3440 = vdwg.mxu0
    %v3441 = vmul.f32 %v3436, 1.442695
    %v3442 = vpow.pop %v3441
    %v3443 = vld [vmem:[%s5] sm:$0x18]
    %v3445 = vrot.slane %v3443, 3
    %3446 = vrot.lane.b32.xlu0 %v3445, 32
    %v3447 = vpop.permute.xlu0 %3446
    %v3449 = vmul.f32 %v3442, %v3447
    %3451 = vrot.lane.b32.xlu0 %v3449, 96
    %v3452 = vpop.permute.xlu0 %3451
    %v3454 = vadd.f32 %v3436, %v3452
    %vm3455 = vcmask 254976
    %3456 = vst.msk [vmem:[#allocation3] sm:$0x3] %vm3455, %v3454
    %3458 = vrot.lane.b32.xlu0 %v3436, 32
    %v3459 = vpop.permute.xlu0 %3458
    %vm3461 = vcmask 517376
    %3462 = vst.msk [vmem:[#allocation3] sm:$0x3] %vm3461, %v3459
    %vm3463 = vcmask 779776
    %3464 = vst.msk [vmem:[#allocation3] sm:$0x3] %vm3463, %v3459
    %3466 = vrot.lane.b32.xlu0 %v3442, 64
    %v3467 = vpop.permute.xlu0 %3466
    %vm3469 = vcmask 1042176
    %3470 = vst.msk [vmem:[#allocation3] sm:$0x3] %vm3469, %v3467
    %v3471 = vmul.f32 %v3442, %v3442
    %v3472 = vmul.f32 %v3436, %v3436
    %3474 = vrot.lane.b32.xlu0 %v3472, 32
    %v3475 = vpop.permute.xlu0 %3474
    %v3477 = vadd.f32 %v3471, %v3475
    %v3478 = vsub.f32 %v3477, %v3436
    %v3479 = vsub.f32 %v3478, 0.5
    %3481 = vrot.lane.b32.xlu0 %v3479, 96
    %v3482 = vpop.permute.xlu0 %3481
    %v3484 = vsel %vm3455, %v3482, 0.0
    %3485 = vadd.xlane.f32.xlu0 %v3484
    %v3486 = vpop.xlane.xlu0 %3485
    %v3487 = vrot.slane %v3486, 4
    %v3488 = vadd.f32 %v3486, %v3487
    %v3489 = vrot.slane %v3488, 2
    %v3490 = vadd.f32 %v3488, %v3489
    %v3491 = vrot.slane %v3490, 1
    %v3492 = vadd.f32 %v3490, %v3491
    %s3493 = vtos %v3492
    %s3494 = scalar_lea.smem [#allocation6], 0
    %3495 = sst [smem:[%s3494]] %s3493
    // Predicated region
    $region26: #{encoder_forward.1} parent=1 // pred_check
      _
    $region27: #{encoder_forward.1} parent=1 // pred_check_branch
      %3497 = sbr.rel (0) target = $region29
    $region28: #{encoder_forward.1} parent=1 // pred_region
      %s3499 = ssub.s32 32, 32
      %3500 = vsyncadd [#allocation4], %s3499
      %s3502 = sshll.u32 [#allocation3], 4
      %s3503 = int_to_ptr.vmem [resolvable:$true] %s3502
      %3505 = dma.vmem_to_hbm [thread:$0]  %s3503, 32, %s6, [#allocation4]
    $region29: #{encoder_forward.1} parent=1 // pred_fallthru
      _
    // Predicated region
    $region30: #{encoder_forward.1} parent=1 // pred_check
      _
    $region31: #{encoder_forward.1} parent=1 // pred_check_branch
      %3507 = sbr.rel (0) target = $region33
    $region32: #{encoder_forward.1} parent=1 // pred_region
      %s3509 = ssub.s32 16, 16
      %3510 = vsyncadd [#allocation5], %s3509
      %3513 = dma.smem_to_hbm [#allocation6], 16, %s7, [#allocation5]
    $region33: #{encoder_forward.1} parent=1 // pred_fallthru
      _
    // Predicated region
    $region34: #{encoder_forward.1} parent=1 // pred_check
      _
    $region35: #{encoder_forward.1} parent=1 // pred_check_branch
      %3515 = sbr.rel (0) target = $region37
    $region36: #{encoder_forward.1} parent=1 // pred_region
      %3516 = dma.done [#allocation4], 32
    $region37: #{encoder_forward.1} parent=1 // pred_fallthru
      _
    // Predicated region
    $region38: #{encoder_forward.1} parent=1 // pred_check
      _
    $region39: #{encoder_forward.1} parent=1 // pred_check_branch
      %3518 = sbr.rel (0) target = $region41
    $region40: #{encoder_forward.1} parent=1 // pred_region
      %3519 = dma.done [#allocation5], 16
    $region41: #{encoder_forward.1} parent=1 // pred_fallthru
      _
    %3520 = sfence
    %3521 = vsyncpa [#allocation4], 1
    %3522 = vsyncpa [#allocation5], 1

</llo_original>
